<compile_context>
chip_gen: v6e
topology: v6e:2x2x1
jax: 0.10.0
libtpu: 0.0.40
codegen_flags: <defaults>
</compile_context>

<pallas_src>
import jax
import jax.numpy as jnp
from jax.experimental import pallas as pl
from jax.experimental.pallas import tpu as pltpu

K_IN = 784       # input features (1*28*28)
H = 1024         # hidden width
N_OUT = 10       # true output classes
N_PAD = 128      # 10 padded to a full lane width (unmasked stores)
MAX_TB = 512     # max batch rows per grid step


def mlp_kernel(x_ref, w1_ref, b1_ref, w2_ref, b2_ref, w3_ref, b3_ref, o_ref):
    # x arrives in its native f32; cast to bf16 on the VPU (free, mem-bound kernel)
    # so all three matmuls hit the bf16 MXU fast path with f32 accumulation.
    x = x_ref[...].astype(jnp.bfloat16)
    # Layer 1: fc1 + ReLU
    h1 = jnp.dot(x, w1_ref[...], preferred_element_type=jnp.float32)
    h1 = jnp.maximum(h1 + b1_ref[...], 0.0).astype(jnp.bfloat16)
    # Layer 2: fc2 + ReLU
    h2 = jnp.dot(h1, w2_ref[...], preferred_element_type=jnp.float32)
    h2 = jnp.maximum(h2 + b2_ref[...], 0.0).astype(jnp.bfloat16)
    # Layer 3: fc3 (output lanes padded to 128 -> unmasked vst)
    out = jnp.dot(h2, w3_ref[...], preferred_element_type=jnp.float32)
    o_ref[...] = (out + b3_ref[...]).astype(o_ref.dtype)


def _round_up(x, m):
    return (x + m - 1) // m * m


def _choose_tile(B, max_tb=MAX_TB):
    """Balanced batch tile: multiple of 16 (bf16 packing), <= max_tb rows, and
    >= 2 grid steps once B >= 256 so v7x megacore can use both TensorCores."""
    n_tiles = pl.cdiv(B, max_tb)
    if B >= 256:
        n_tiles = max(n_tiles, 2)
    tb = _round_up(pl.cdiv(B, n_tiles), 16)
    return max(16, min(tb, max_tb))


def prepare_params(params):
    """One-time layout prep (call at init/weight-load time, NOT per forward):
    bf16 weight casts and lane-padding of the output layer 10 -> 128."""
    w3 = jnp.zeros((H, N_PAD), jnp.bfloat16).at[:, :N_OUT].set(
        params["w3"].astype(jnp.bfloat16))
    b3 = jnp.zeros((1, N_PAD), jnp.float32).at[:, :N_OUT].set(
        params["b3"].reshape(1, -1).astype(jnp.float32))
    return {
        "w1": params["w1"].astype(jnp.bfloat16),               # (784, 1024)
        "b1": params["b1"].reshape(1, H).astype(jnp.float32),
        "w2": params["w2"].astype(jnp.bfloat16),               # (1024, 1024)
        "b2": params["b2"].reshape(1, H).astype(jnp.float32),
        "w3": w3,                                              # (1024, 128)
        "b3": b3,                                              # (1, 128)
    }


def baseline_model_forward(x_nchw, prepared):
    """Forward of BaselineModel: x.view(B,-1) -> fc1+relu -> fc2+relu -> fc3.
    `prepared` must come from prepare_params()."""
    B = x_nchw.shape[0]
    x_flat = x_nchw.reshape(B, -1)                 # x.view(x.size(0), -1); stays f32
    assert x_flat.shape[1] == K_IN

    TB = _choose_tile(B)
    B_pad = _round_up(B, TB)
    if B_pad != B:                                  # only the small batch slack, if any
        x_flat = jnp.pad(x_flat, ((0, B_pad - B), (0, 0)))
    grid = (B_pad // TB,)

    w1, b1 = prepared["w1"], prepared["b1"]
    w2, b2 = prepared["w2"], prepared["b2"]
    w3, b3 = prepared["w3"], prepared["b3"]

    flops = 2 * B_pad * (K_IN * H + H * H + H * N_PAD)
    bytes_accessed = (
        x_flat.size * x_flat.dtype.itemsize                    # f32 input
        + (w1.size + w2.size + w3.size) * 2                    # bf16 weights
        + (b1.size + b2.size + b3.size) * 4                    # f32 biases
        + B_pad * N_PAD * 4)                                   # f32 output

    out = pl.pallas_call(
        mlp_kernel,
        out_shape=jax.ShapeDtypeStruct((B_pad, N_PAD), jnp.float32),
        grid=grid,
        in_specs=[
            pl.BlockSpec((TB, K_IN), lambda i: (i, 0)),    # x tile (f32)
            pl.BlockSpec((K_IN, H), lambda i: (0, 0)),     # w1 (VMEM-resident)
            pl.BlockSpec((1, H), lambda i: (0, 0)),        # b1
            pl.BlockSpec((H, H), lambda i: (0, 0)),        # w2 (VMEM-resident)
            pl.BlockSpec((1, H), lambda i: (0, 0)),        # b2
            pl.BlockSpec((H, N_PAD), lambda i: (0, 0)),    # w3 (VMEM-resident)
            pl.BlockSpec((1, N_PAD), lambda i: (0, 0)),    # b3
        ],
        out_specs=pl.BlockSpec((TB, N_PAD), lambda i: (i, 0)),
        compiler_params=pltpu.CompilerParams(
            dimension_semantics=(pltpu.PARALLEL,),
            vmem_limit_bytes=32 << 20,
        ),
        cost_estimate=pl.CostEstimate(
            flops=flops, bytes_accessed=bytes_accessed, transcendentals=0),
    )(x_flat, w1, b1, w2, b2, w3, b3)

    return out[:B, :N_OUT]


def init_params(key):
    """Deterministic Xavier-uniform-like init; weights stored (in, out) so the
    kernel computes x @ W + b (equivalent to nn.Linear's x @ W.T + b)."""
    def xavier(k, fan_in, fan_out):
        limit = (6.0 / (fan_in + fan_out)) ** 0.5
        return jax.random.uniform(
            k, (fan_in, fan_out), jnp.float32, minval=-limit, maxval=limit)

    k1, k2, k3 = jax.random.split(key, 3)
    return {
        "w1": xavier(k1, K_IN, H),
        "b1": jnp.zeros((1, H), jnp.float32),
        "w2": xavier(k2, H, H),
        "b2": jnp.zeros((1, H), jnp.float32),
        "w3": xavier(k3, H, N_OUT),
        "b3": jnp.zeros((1, N_OUT), jnp.float32),
    }


if __name__ == "__main__":
    key = jax.random.PRNGKey(0)
    k_params, k_x = jax.random.split(key)
    params = init_params(k_params)
    prepared = prepare_params(params)          # one-time layout prep (hoisted)

    # Small MNIST-like batch: (B, C, H, W) = (8, 1, 28, 28) -> flatten to 784.
    x = jax.random.normal(k_x, (8, 1, 28, 28), jnp.float32)

    out = baseline_model_forward(x, prepared)
    out = jax.block_until_ready(out)
    assert out.shape == (8, N_OUT)

    # Pure-JAX reference of the same math (operands rounded to bf16 like the
    # kernel, accumulation / bias / ReLU in f32).
    def bf(v):
        return v.astype(jnp.bfloat16).astype(jnp.float32)

    x_flat = x.reshape(x.shape[0], -1)
    h1 = jnp.maximum(bf(x_flat) @ bf(params["w1"]) + params["b1"], 0.0)
    h2 = jnp.maximum(bf(h1) @ bf(params["w2"]) + params["b2"], 0.0)
    ref = bf(h2) @ bf(params["w3"]) + params["b3"]

    assert jnp.allclose(out, ref, atol=2e-2, rtol=2e-2), (
        float(jnp.max(jnp.abs(out - ref))))

    print("KERNEL_OK")
</pallas_src>

<mosaic_0001>
module attributes {stable_mosaic.version = 11 : i64} {
  func.func @mlp_kernel(%arg0: i32, %arg1: memref<16x784xf32, #tpu.memory_space<vmem>>, %arg2: memref<784x1024xbf16, #tpu.memory_space<vmem>>, %arg3: memref<1x1024xf32, #tpu.memory_space<vmem>>, %arg4: memref<1024x1024xbf16, #tpu.memory_space<vmem>>, %arg5: memref<1x1024xf32, #tpu.memory_space<vmem>>, %arg6: memref<1024x128xbf16, #tpu.memory_space<vmem>>, %arg7: memref<1x128xf32, #tpu.memory_space<vmem>>, %arg8: memref<16x128xf32, #tpu.memory_space<vmem>>) attributes {dimension_semantics = [#tpu.dimension_semantics<parallel>], iteration_bounds = array<i64: 1>, scalar_prefetch = 0 : i64, scratch_operands = 0 : i64, tpu.core_type = #tpu.core_type<tc>, window_params = [{transform_indices = @transform_0, window_bounds = array<i64: 16, 784>}, {pipeline_mode = #tpu.pipeline_mode<synchronous>, transform_indices = @transform_1, window_bounds = array<i64: 784, 1024>}, {pipeline_mode = #tpu.pipeline_mode<synchronous>, transform_indices = @transform_2, window_bounds = array<i64: 1, 1024>}, {pipeline_mode = #tpu.pipeline_mode<synchronous>, transform_indices = @transform_3, window_bounds = array<i64: 1024, 1024>}, {pipeline_mode = #tpu.pipeline_mode<synchronous>, transform_indices = @transform_4, window_bounds = array<i64: 1, 1024>}, {pipeline_mode = #tpu.pipeline_mode<synchronous>, transform_indices = @transform_5, window_bounds = array<i64: 1024, 128>}, {pipeline_mode = #tpu.pipeline_mode<synchronous>, transform_indices = @transform_6, window_bounds = array<i64: 1, 128>}, {transform_indices = @transform_7, window_bounds = array<i64: 16, 128>}]} {
    %c0 = arith.constant 0 : index
    %c0_0 = arith.constant 0 : index
    %0 = vector.load %arg1[%c0, %c0_0] : memref<16x784xf32, #tpu.memory_space<vmem>>, vector<16x784xf32>
    %1 = arith.truncf %0 : vector<16x784xf32> to vector<16x784xbf16>
    %c0_1 = arith.constant 0 : index
    %c0_2 = arith.constant 0 : index
    %2 = vector.load %arg2[%c0_1, %c0_2] : memref<784x1024xbf16, #tpu.memory_space<vmem>>, vector<784x1024xbf16>
    %cst = arith.constant dense<0.000000e+00> : vector<16x1024xf32>
    %3 = tpu.matmul %1, %2, %cst {dimension_numbers = #tpu.dot_dimension_numbers<[1], [0], [0], [1], [0, 0, 1, 1], [], []>} : vector<16x784xbf16>, vector<784x1024xbf16>, vector<16x1024xf32> -> vector<16x1024xf32>
    %c0_3 = arith.constant 0 : index
    %c0_4 = arith.constant 0 : index
    %4 = vector.load %arg3[%c0_3, %c0_4] : memref<1x1024xf32, #tpu.memory_space<vmem>>, vector<1x1024xf32>
    %5 = vector.broadcast %4 : vector<1x1024xf32> to vector<16x1024xf32>
    %6 = arith.addf %3, %5 : vector<16x1024xf32>
    %cst_5 = arith.constant 0.000000e+00 : f32
    %7 = vector.broadcast %cst_5 : f32 to vector<16x1024xf32>
    %8 = arith.maximumf %6, %7 : vector<16x1024xf32>
    %9 = arith.truncf %8 : vector<16x1024xf32> to vector<16x1024xbf16>
    %c0_6 = arith.constant 0 : index
    %c0_7 = arith.constant 0 : index
    %10 = vector.load %arg4[%c0_6, %c0_7] : memref<1024x1024xbf16, #tpu.memory_space<vmem>>, vector<1024x1024xbf16>
    %cst_8 = arith.constant dense<0.000000e+00> : vector<16x1024xf32>
    %11 = tpu.matmul %9, %10, %cst_8 {dimension_numbers = #tpu.dot_dimension_numbers<[1], [0], [0], [1], [0, 0, 1, 1], [], []>} : vector<16x1024xbf16>, vector<1024x1024xbf16>, vector<16x1024xf32> -> vector<16x1024xf32>
    %c0_9 = arith.constant 0 : index
    %c0_10 = arith.constant 0 : index
    %12 = vector.load %arg5[%c0_9, %c0_10] : memref<1x1024xf32, #tpu.memory_space<vmem>>, vector<1x1024xf32>
    %13 = vector.broadcast %12 : vector<1x1024xf32> to vector<16x1024xf32>
    %14 = arith.addf %11, %13 : vector<16x1024xf32>
    %cst_11 = arith.constant 0.000000e+00 : f32
    %15 = vector.broadcast %cst_11 : f32 to vector<16x1024xf32>
    %16 = arith.maximumf %14, %15 : vector<16x1024xf32>
    %17 = arith.truncf %16 : vector<16x1024xf32> to vector<16x1024xbf16>
    %c0_12 = arith.constant 0 : index
    %c0_13 = arith.constant 0 : index
    %18 = vector.load %arg6[%c0_12, %c0_13] : memref<1024x128xbf16, #tpu.memory_space<vmem>>, vector<1024x128xbf16>
    %cst_14 = arith.constant dense<0.000000e+00> : vector<16x128xf32>
    %19 = tpu.matmul %17, %18, %cst_14 {dimension_numbers = #tpu.dot_dimension_numbers<[1], [0], [0], [1], [0, 0, 1, 1], [], []>} : vector<16x1024xbf16>, vector<1024x128xbf16>, vector<16x128xf32> -> vector<16x128xf32>
    %c0_15 = arith.constant 0 : index
    %c0_16 = arith.constant 0 : index
    %20 = vector.load %arg7[%c0_15, %c0_16] : memref<1x128xf32, #tpu.memory_space<vmem>>, vector<1x128xf32>
    %21 = vector.broadcast %20 : vector<1x128xf32> to vector<16x128xf32>
    %22 = arith.addf %19, %21 : vector<16x128xf32>
    %c0_17 = arith.constant 0 : index
    %c0_18 = arith.constant 0 : index
    %23 = vector.load %arg8[%c0_17, %c0_18] : memref<16x128xf32, #tpu.memory_space<vmem>>, vector<16x128xf32>
    tpu.vector_store %arg8[%c0_17, %c0_18], %22 {strides = array<i32>} : memref<16x128xf32, #tpu.memory_space<vmem>>, vector<16x128xf32>,
    return
  }
  func.func @transform_0(%arg0: i32) -> (i32, i32) {
    %c0_i32 = arith.constant 0 : i32
    %c0_i32_0 = arith.constant 0 : i32
    return %arg0, %c0_i32 : i32, i32
  }
  func.func @transform_1(%arg0: i32) -> (i32, i32) {
    %c0_i32 = arith.constant 0 : i32
    %c0_i32_0 = arith.constant 0 : i32
    %c0_i32_1 = arith.constant 0 : i32
    return %c0_i32, %c0_i32_0 : i32, i32
  }
  func.func @transform_2(%arg0: i32) -> (i32, i32) {
    %c0_i32 = arith.constant 0 : i32
    %c0_i32_0 = arith.constant 0 : i32
    %c0_i32_1 = arith.constant 0 : i32
    return %c0_i32, %c0_i32_0 : i32, i32
  }
  func.func @transform_3(%arg0: i32) -> (i32, i32) {
    %c0_i32 = arith.constant 0 : i32
    %c0_i32_0 = arith.constant 0 : i32
    %c0_i32_1 = arith.constant 0 : i32
    return %c0_i32, %c0_i32_0 : i32, i32
  }
  func.func @transform_4(%arg0: i32) -> (i32, i32) {
    %c0_i32 = arith.constant 0 : i32
    %c0_i32_0 = arith.constant 0 : i32
    %c0_i32_1 = arith.constant 0 : i32
    return %c0_i32, %c0_i32_0 : i32, i32
  }
  func.func @transform_5(%arg0: i32) -> (i32, i32) {
    %c0_i32 = arith.constant 0 : i32
    %c0_i32_0 = arith.constant 0 : i32
    %c0_i32_1 = arith.constant 0 : i32
    return %c0_i32, %c0_i32_0 : i32, i32
  }
  func.func @transform_6(%arg0: i32) -> (i32, i32) {
    %c0_i32 = arith.constant 0 : i32
    %c0_i32_0 = arith.constant 0 : i32
    %c0_i32_1 = arith.constant 0 : i32
    return %c0_i32, %c0_i32_0 : i32, i32
  }
  func.func @transform_7(%arg0: i32) -> (i32, i32) {
    %c0_i32 = arith.constant 0 : i32
    %c0_i32_0 = arith.constant 0 : i32
    return %arg0, %c0_i32 : i32, i32
  }
}

</mosaic_0001>

<llo_original>
// kernel: tpu_custom_call.1
$region0: #{tpu_custom_call.1}
  #allocation0 [shape = 'u32[]', space=smem, size = 0x4, offset = 0x4, fixed_abs, tag = 'smem constant byte address 0x4 - core index']
  #allocation1 [shape = 'u32[144,128]{1,0:T(1,128)}', space=vmem, size = 0x12000, scoped, tag = 'internal scratch']
  %s0 = inlined_call_operand.hbm [shape: f32[16,784], index: 0, kind: input, shape index: {}]
  %s1 = inlined_call_operand.hbm [shape: bf16[784,1024], index: 1, kind: input, shape index: {}]
  %s2 = inlined_call_operand.hbm [shape: f32[1,1024], index: 2, kind: input, shape index: {}]
  %s3 = inlined_call_operand.hbm [shape: bf16[1024,1024], index: 3, kind: input, shape index: {}]
  %s4 = inlined_call_operand.hbm [shape: f32[1,1024], index: 4, kind: input, shape index: {}]
  %s5 = inlined_call_operand.hbm [shape: bf16[1024,128], index: 5, kind: input, shape index: {}]
  %s6 = inlined_call_operand.hbm [shape: f32[1,128], index: 6, kind: input, shape index: {}]
  %s7 = inlined_call_operand.hbm [shape: f32[16,128], index: 7, kind: output, shape index: {}]
  %s8 = sld [smem:[#allocation0]]
  $region66: #{tpu_custom_call.1} parent=0
    _
  %s10 = ssub.s32 1, %s8
  %s11 = scalar_select 0, %s10, %s8
  $region1: #{tpu_custom_call.1} parent=0
    #allocation2 [shape = 'u8[57344]{0}', space=vmem, size = 0xe000, scoped, tag = 'input window, operand 0, single buffered']
    #allocation3 [shape = 's32[1]{0}', space=sflag, size = 0x4, scoped, tag = 'scoped memory for tpu_custom_call.1']
    #allocation4 [shape = 's32[1]{0}', space=sflag, size = 0x4, scoped, tag = 'scoped memory for tpu_custom_call.1']
    #allocation5 [shape = 'u8[1605632]{0}', space=vmem, size = 0x188000, scoped, tag = 'input window, operand 1, single buffered']
    #allocation6 [shape = 's32[1]{0}', space=sflag, size = 0x4, scoped, tag = 'scoped memory for tpu_custom_call.1']
    #allocation7 [shape = 'u8[4096]{0}', space=vmem, size = 0x1000, scoped, tag = 'input window, operand 2, single buffered']
    #allocation8 [shape = 'u8[2097152]{0}', space=vmem, size = 0x200000, scoped, tag = 'input window, operand 3, single buffered']
    #allocation9 [shape = 's32[1]{0}', space=sflag, size = 0x4, scoped, tag = 'scoped memory for tpu_custom_call.1']
    #allocation10 [shape = 'u8[4096]{0}', space=vmem, size = 0x1000, scoped, tag = 'input window, operand 4, single buffered']
    #allocation11 [shape = 'u8[262144]{0}', space=vmem, size = 0x40000, scoped, tag = 'input window, operand 5, single buffered']
    #allocation12 [shape = 's32[1]{0}', space=sflag, size = 0x4, scoped, tag = 'scoped memory for tpu_custom_call.1']
    #allocation13 [shape = 'u8[512]{0}', space=vmem, size = 0x400, scoped, tag = 'input window, operand 6, single buffered']
    #allocation14 [shape = 'u8[8192]{0}', space=vmem, size = 0x2000, scoped, tag = 'output window, operand 0, single buffered']
    %12 = vsyncpa [#allocation3], 0
    %13 = vsyncpa [#allocation6], 0
    %14 = vsyncpa [#allocation9], 0
    %15 = vsyncpa [#allocation12], 0
    %16 = vsyncpa [#allocation4], 0
    // Predicated region
    $region2: #{tpu_custom_call.1} parent=1 // pred_check
      _
    $region3: #{tpu_custom_call.1} parent=1 // pred_check_branch
      %18 = sbr.rel (0) target = $region5
    $region4: #{tpu_custom_call.1} parent=1 // pred_region
      %s20 = ssub.s32 1792, 1792
      %21 = vsyncadd [#allocation3], %s20
      %s22 = sshll.u32 [#allocation2], 4
      %s23 = int_to_ptr.vmem [resolvable:$true] %s22
      %28 = dma.hbm_to_vmem [thread:$0]  %s0, 1792, %s23, [#allocation3], 896, 896, 56
    $region5: #{tpu_custom_call.1} parent=1 // pred_fallthru
      _
    // Predicated region
    $region6: #{tpu_custom_call.1} parent=1 // pred_check
      _
    $region7: #{tpu_custom_call.1} parent=1 // pred_check_branch
      %30 = sbr.rel (0) target = $region9
    $region8: #{tpu_custom_call.1} parent=1 // pred_region
      %s32 = ssub.s32 50176, 50176
      %33 = vsyncadd [#allocation6], %s32
      %s34 = sshll.u32 [#allocation5], 4
      %s35 = int_to_ptr.vmem [resolvable:$true] %s34
      %40 = dma.hbm_to_vmem [thread:$0]  %s1, 50176, %s35, [#allocation6], 512, 512, 32
    $region9: #{tpu_custom_call.1} parent=1 // pred_fallthru
      _
    // Predicated region
    $region10: #{tpu_custom_call.1} parent=1 // pred_check
      _
    $region11: #{tpu_custom_call.1} parent=1 // pred_check_branch
      %42 = sbr.rel (0) target = $region13
    $region12: #{tpu_custom_call.1} parent=1 // pred_region
      %s44 = ssub.s32 128, 128
      %45 = vsyncadd [#allocation6], %s44
      %s47 = sshll.u32 [#allocation7], 4
      %s48 = int_to_ptr.vmem [resolvable:$true] %s47
      %50 = dma.hbm_to_vmem [thread:$0]  %s2, 128, %s48, [#allocation6]
    $region13: #{tpu_custom_call.1} parent=1 // pred_fallthru
      _
    // Predicated region
    $region14: #{tpu_custom_call.1} parent=1 // pred_check
      _
    $region15: #{tpu_custom_call.1} parent=1 // pred_check_branch
      %52 = sbr.rel (0) target = $region17
    $region16: #{tpu_custom_call.1} parent=1 // pred_region
      %s54 = ssub.s32 65536, 65536
      %55 = vsyncadd [#allocation9], %s54
      %s56 = sshll.u32 [#allocation8], 4
      %s57 = int_to_ptr.vmem [resolvable:$true] %s56
      %62 = dma.hbm_to_vmem [thread:$0]  %s3, 65536, %s57, [#allocation9], 512, 512, 32
    $region17: #{tpu_custom_call.1} parent=1 // pred_fallthru
      _
    // Predicated region
    $region18: #{tpu_custom_call.1} parent=1 // pred_check
      _
    $region19: #{tpu_custom_call.1} parent=1 // pred_check_branch
      %64 = sbr.rel (0) target = $region21
    $region20: #{tpu_custom_call.1} parent=1 // pred_region
      %s66 = ssub.s32 128, 128
      %67 = vsyncadd [#allocation9], %s66
      %s69 = sshll.u32 [#allocation10], 4
      %s70 = int_to_ptr.vmem [resolvable:$true] %s69
      %72 = dma.hbm_to_vmem [thread:$0]  %s4, 128, %s70, [#allocation9]
    $region21: #{tpu_custom_call.1} parent=1 // pred_fallthru
      _
    // Predicated region
    $region22: #{tpu_custom_call.1} parent=1 // pred_check
      _
    $region23: #{tpu_custom_call.1} parent=1 // pred_check_branch
      %74 = sbr.rel (0) target = $region25
    $region24: #{tpu_custom_call.1} parent=1 // pred_region
      %s76 = ssub.s32 8192, 8192
      %77 = vsyncadd [#allocation12], %s76
      %s78 = sshll.u32 [#allocation11], 4
      %s79 = int_to_ptr.vmem [resolvable:$true] %s78
      %84 = dma.hbm_to_vmem [thread:$0]  %s5, 8192, %s79, [#allocation12], 64, 64, 4
    $region25: #{tpu_custom_call.1} parent=1 // pred_fallthru
      _
    // Predicated region
    $region26: #{tpu_custom_call.1} parent=1 // pred_check
      _
    $region27: #{tpu_custom_call.1} parent=1 // pred_check_branch
      %86 = sbr.rel (0) target = $region29
    $region28: #{tpu_custom_call.1} parent=1 // pred_region
      %s88 = ssub.s32 16, 16
      %89 = vsyncadd [#allocation12], %s88
      %s91 = sshll.u32 [#allocation13], 4
      %s92 = int_to_ptr.vmem [resolvable:$true] %s91
      %94 = dma.hbm_to_vmem [thread:$0]  %s6, 16, %s92, [#allocation12]
    $region29: #{tpu_custom_call.1} parent=1 // pred_fallthru
      _
    // Predicated region
    $region30: #{tpu_custom_call.1} parent=1 // pred_check
      _
    $region31: #{tpu_custom_call.1} parent=1 // pred_check_branch
      %96 = sbr.rel (0) target = $region33
    $region32: #{tpu_custom_call.1} parent=1 // pred_region
      %97 = dma.done [#allocation3], 1792
    $region33: #{tpu_custom_call.1} parent=1 // pred_fallthru
      _
    // Predicated region
    $region34: #{tpu_custom_call.1} parent=1 // pred_check
      _
    $region35: #{tpu_custom_call.1} parent=1 // pred_check_branch
      %99 = sbr.rel (0) target = $region37
    $region36: #{tpu_custom_call.1} parent=1 // pred_region
      %100 = dma.done [#allocation6], 50176
    $region37: #{tpu_custom_call.1} parent=1 // pred_fallthru
      _
    // Predicated region
    $region38: #{tpu_custom_call.1} parent=1 // pred_check
      _
    $region39: #{tpu_custom_call.1} parent=1 // pred_check_branch
      %102 = sbr.rel (0) target = $region41
    $region40: #{tpu_custom_call.1} parent=1 // pred_region
      %103 = dma.done [#allocation6], 128
    $region41: #{tpu_custom_call.1} parent=1 // pred_fallthru
      _
    // Predicated region
    $region42: #{tpu_custom_call.1} parent=1 // pred_check
      _
    $region43: #{tpu_custom_call.1} parent=1 // pred_check_branch
      %105 = sbr.rel (0) target = $region45
    $region44: #{tpu_custom_call.1} parent=1 // pred_region
      %106 = dma.done [#allocation9], 65536
    $region45: #{tpu_custom_call.1} parent=1 // pred_fallthru
      _
    // Predicated region
    $region46: #{tpu_custom_call.1} parent=1 // pred_check
      _
    $region47: #{tpu_custom_call.1} parent=1 // pred_check_branch
      %108 = sbr.rel (0) target = $region49
    $region48: #{tpu_custom_call.1} parent=1 // pred_region
      %109 = dma.done [#allocation9], 128
    $region49: #{tpu_custom_call.1} parent=1 // pred_fallthru
      _
    // Predicated region
    $region50: #{tpu_custom_call.1} parent=1 // pred_check
      _
    $region51: #{tpu_custom_call.1} parent=1 // pred_check_branch
      %111 = sbr.rel (0) target = $region53
    $region52: #{tpu_custom_call.1} parent=1 // pred_region
      %112 = dma.done [#allocation12], 8192
    $region53: #{tpu_custom_call.1} parent=1 // pred_fallthru
      _
    // Predicated region
    $region54: #{tpu_custom_call.1} parent=1 // pred_check
      _
    $region55: #{tpu_custom_call.1} parent=1 // pred_check_branch
      %114 = sbr.rel (0) target = $region57
    $region56: #{tpu_custom_call.1} parent=1 // pred_region
      %115 = dma.done [#allocation12], 16
    $region57: #{tpu_custom_call.1} parent=1 // pred_fallthru
      _
    %v117 = vld [vmem:[#allocation2] sm:$0xff]
    %v118 = vld [vmem:[#allocation2 + $0x8] sm:$0xff]
    %v119 = vld [vmem:[#allocation2 + $0x10] sm:$0xff]
    %v120 = vld [vmem:[#allocation2 + $0x18] sm:$0xff]
    %v121 = vld [vmem:[#allocation2 + $0x20] sm:$0xff]
    %v122 = vld [vmem:[#allocation2 + $0x28] sm:$0xff]
    %v123 = vld [vmem:[#allocation2 + $0x30] sm:$0xff]
    %v124 = vld [vmem:[#allocation2 + $0x38] sm:$0xff]
    %v125 = vld [vmem:[#allocation2 + $0x40] sm:$0xff]
    %v126 = vld [vmem:[#allocation2 + $0x48] sm:$0xff]
    %v127 = vld [vmem:[#allocation2 + $0x50] sm:$0xff]
    %v128 = vld [vmem:[#allocation2 + $0x58] sm:$0xff]
    %v129 = vld [vmem:[#allocation2 + $0x60] sm:$0xff]
    %v130 = vld [vmem:[#allocation2 + $0x68] sm:$0xff]
    %v131 = vpack.c.bf16 %v124, %v117
    %v132 = vpack.c.bf16 %v125, %v118
    %v133 = vpack.c.bf16 %v126, %v119
    %v134 = vpack.c.bf16 %v127, %v120
    %v135 = vpack.c.bf16 %v128, %v121
    %v136 = vpack.c.bf16 %v129, %v122
    %v137 = vpack.c.bf16 %v130, %v123
    %v138 = vld [vmem:[#allocation5] sm:$0xff]
    %v139 = vld [vmem:[#allocation5 + $0x8] sm:$0xff]
    %v140 = vld [vmem:[#allocation5 + $0x10] sm:$0xff]
    %v141 = vld [vmem:[#allocation5 + $0x18] sm:$0xff]
    %v142 = vld [vmem:[#allocation5 + $0x20] sm:$0xff]
    %v143 = vld [vmem:[#allocation5 + $0x28] sm:$0xff]
    %v144 = vld [vmem:[#allocation5 + $0x30] sm:$0xff]
    %v145 = vld [vmem:[#allocation5 + $0x38] sm:$0xff]
    %v146 = vld [vmem:[#allocation5 + $0x40] sm:$0xff]
    %v147 = vld [vmem:[#allocation5 + $0x48] sm:$0xff]
    %v148 = vld [vmem:[#allocation5 + $0x50] sm:$0xff]
    %v149 = vld [vmem:[#allocation5 + $0x58] sm:$0xff]
    %v150 = vld [vmem:[#allocation5 + $0x60] sm:$0xff]
    %v151 = vld [vmem:[#allocation5 + $0x68] sm:$0xff]
    %v152 = vld [vmem:[#allocation5 + $0x70] sm:$0xff]
    %v153 = vld [vmem:[#allocation5 + $0x78] sm:$0xff]
    %v154 = vld [vmem:[#allocation5 + $0x80] sm:$0xff]
    %v155 = vld [vmem:[#allocation5 + $0x88] sm:$0xff]
    %v156 = vld [vmem:[#allocation5 + $0x90] sm:$0xff]
    %v157 = vld [vmem:[#allocation5 + $0x98] sm:$0xff]
    %v158 = vld [vmem:[#allocation5 + $0xa0] sm:$0xff]
    %v159 = vld [vmem:[#allocation5 + $0xa8] sm:$0xff]
    %v160 = vld [vmem:[#allocation5 + $0xb0] sm:$0xff]
    %v161 = vld [vmem:[#allocation5 + $0xb8] sm:$0xff]
    %v162 = vld [vmem:[#allocation5 + $0xc0] sm:$0xff]
    %v163 = vld [vmem:[#allocation5 + $0xc8] sm:$0xff]
    %v164 = vld [vmem:[#allocation5 + $0xd0] sm:$0xff]
    %v165 = vld [vmem:[#allocation5 + $0xd8] sm:$0xff]
    %v166 = vld [vmem:[#allocation5 + $0xe0] sm:$0xff]
    %v167 = vld [vmem:[#allocation5 + $0xe8] sm:$0xff]
    %v168 = vld [vmem:[#allocation5 + $0xf0] sm:$0xff]
    %v169 = vld [vmem:[#allocation5 + $0xf8] sm:$0xff]
    %v170 = vld [vmem:[#allocation5 + $0x100] sm:$0xff]
    %v171 = vld [vmem:[#allocation5 + $0x108] sm:$0xff]
    %v172 = vld [vmem:[#allocation5 + $0x110] sm:$0xff]
    %v173 = vld [vmem:[#allocation5 + $0x118] sm:$0xff]
    %v174 = vld [vmem:[#allocation5 + $0x120] sm:$0xff]
    %v175 = vld [vmem:[#allocation5 + $0x128] sm:$0xff]
    %v176 = vld [vmem:[#allocation5 + $0x130] sm:$0xff]
    %v177 = vld [vmem:[#allocation5 + $0x138] sm:$0xff]
    %v178 = vld [vmem:[#allocation5 + $0x140] sm:$0xff]
    %v179 = vld [vmem:[#allocation5 + $0x148] sm:$0xff]
    %v180 = vld [vmem:[#allocation5 + $0x150] sm:$0xff]
    %v181 = vld [vmem:[#allocation5 + $0x158] sm:$0xff]
    %v182 = vld [vmem:[#allocation5 + $0x160] sm:$0xff]
    %v183 = vld [vmem:[#allocation5 + $0x168] sm:$0xff]
    %v184 = vld [vmem:[#allocation5 + $0x170] sm:$0xff]
    %v185 = vld [vmem:[#allocation5 + $0x178] sm:$0xff]
    %v186 = vld [vmem:[#allocation5 + $0x180] sm:$0xff]
    %v187 = vld [vmem:[#allocation5 + $0x188] sm:$0xff]
    %v188 = vld [vmem:[#allocation5 + $0x190] sm:$0xff]
    %v189 = vld [vmem:[#allocation5 + $0x198] sm:$0xff]
    %v190 = vld [vmem:[#allocation5 + $0x1a0] sm:$0xff]
    %v191 = vld [vmem:[#allocation5 + $0x1a8] sm:$0xff]
    %v192 = vld [vmem:[#allocation5 + $0x1b0] sm:$0xff]
    %v193 = vld [vmem:[#allocation5 + $0x1b8] sm:$0xff]
    %v194 = vld [vmem:[#allocation5 + $0x1c0] sm:$0xff]
    %v195 = vld [vmem:[#allocation5 + $0x1c8] sm:$0xff]
    %v196 = vld [vmem:[#allocation5 + $0x1d0] sm:$0xff]
    %v197 = vld [vmem:[#allocation5 + $0x1d8] sm:$0xff]
    %v198 = vld [vmem:[#allocation5 + $0x1e0] sm:$0xff]
    %v199 = vld [vmem:[#allocation5 + $0x1e8] sm:$0xff]
    %v200 = vld [vmem:[#allocation5 + $0x1f0] sm:$0xff]
    %v201 = vld [vmem:[#allocation5 + $0x1f8] sm:$0xff]
    %v202 = vld [vmem:[#allocation5 + $0x200] sm:$0xff]
    %v203 = vld [vmem:[#allocation5 + $0x208] sm:$0xff]
    %v204 = vld [vmem:[#allocation5 + $0x210] sm:$0xff]
    %v205 = vld [vmem:[#allocation5 + $0x218] sm:$0xff]
    %v206 = vld [vmem:[#allocation5 + $0x220] sm:$0xff]
    %v207 = vld [vmem:[#allocation5 + $0x228] sm:$0xff]
    %v208 = vld [vmem:[#allocation5 + $0x230] sm:$0xff]
    %v209 = vld [vmem:[#allocation5 + $0x238] sm:$0xff]
    %v210 = vld [vmem:[#allocation5 + $0x240] sm:$0xff]
    %v211 = vld [vmem:[#allocation5 + $0x248] sm:$0xff]
    %v212 = vld [vmem:[#allocation5 + $0x250] sm:$0xff]
    %v213 = vld [vmem:[#allocation5 + $0x258] sm:$0xff]
    %v214 = vld [vmem:[#allocation5 + $0x260] sm:$0xff]
    %v215 = vld [vmem:[#allocation5 + $0x268] sm:$0xff]
    %v216 = vld [vmem:[#allocation5 + $0x270] sm:$0xff]
    %v217 = vld [vmem:[#allocation5 + $0x278] sm:$0xff]
    %v218 = vld [vmem:[#allocation5 + $0x280] sm:$0xff]
    %v219 = vld [vmem:[#allocation5 + $0x288] sm:$0xff]
    %v220 = vld [vmem:[#allocation5 + $0x290] sm:$0xff]
    %v221 = vld [vmem:[#allocation5 + $0x298] sm:$0xff]
    %v222 = vld [vmem:[#allocation5 + $0x2a0] sm:$0xff]
    %v223 = vld [vmem:[#allocation5 + $0x2a8] sm:$0xff]
    %v224 = vld [vmem:[#allocation5 + $0x2b0] sm:$0xff]
    %v225 = vld [vmem:[#allocation5 + $0x2b8] sm:$0xff]
    %v226 = vld [vmem:[#allocation5 + $0x2c0] sm:$0xff]
    %v227 = vld [vmem:[#allocation5 + $0x2c8] sm:$0xff]
    %v228 = vld [vmem:[#allocation5 + $0x2d0] sm:$0xff]
    %v229 = vld [vmem:[#allocation5 + $0x2d8] sm:$0xff]
    %v230 = vld [vmem:[#allocation5 + $0x2e0] sm:$0xff]
    %v231 = vld [vmem:[#allocation5 + $0x2e8] sm:$0xff]
    %v232 = vld [vmem:[#allocation5 + $0x2f0] sm:$0xff]
    %v233 = vld [vmem:[#allocation5 + $0x2f8] sm:$0xff]
    %v234 = vld [vmem:[#allocation5 + $0x300] sm:$0xff]
    %v235 = vld [vmem:[#allocation5 + $0x308] sm:$0xff]
    %v236 = vld [vmem:[#allocation5 + $0x310] sm:$0xff]
    %v237 = vld [vmem:[#allocation5 + $0x318] sm:$0xff]
    %v238 = vld [vmem:[#allocation5 + $0x320] sm:$0xff]
    %v239 = vld [vmem:[#allocation5 + $0x328] sm:$0xff]
    %v240 = vld [vmem:[#allocation5 + $0x330] sm:$0xff]
    %v241 = vld [vmem:[#allocation5 + $0x338] sm:$0xff]
    %v242 = vld [vmem:[#allocation5 + $0x340] sm:$0xff]
    %v243 = vld [vmem:[#allocation5 + $0x348] sm:$0xff]
    %v244 = vld [vmem:[#allocation5 + $0x350] sm:$0xff]
    %v245 = vld [vmem:[#allocation5 + $0x358] sm:$0xff]
    %v246 = vld [vmem:[#allocation5 + $0x360] sm:$0xff]
    %v247 = vld [vmem:[#allocation5 + $0x368] sm:$0xff]
    %v248 = vld [vmem:[#allocation5 + $0x370] sm:$0xff]
    %v249 = vld [vmem:[#allocation5 + $0x378] sm:$0xff]
    %v250 = vld [vmem:[#allocation5 + $0x380] sm:$0xff]
    %v251 = vld [vmem:[#allocation5 + $0x388] sm:$0xff]
    %v252 = vld [vmem:[#allocation5 + $0x390] sm:$0xff]
    %v253 = vld [vmem:[#allocation5 + $0x398] sm:$0xff]
    %v254 = vld [vmem:[#allocation5 + $0x3a0] sm:$0xff]
    %v255 = vld [vmem:[#allocation5 + $0x3a8] sm:$0xff]
    %v256 = vld [vmem:[#allocation5 + $0x3b0] sm:$0xff]
    %v257 = vld [vmem:[#allocation5 + $0x3b8] sm:$0xff]
    %v258 = vld [vmem:[#allocation5 + $0x3c0] sm:$0xff]
    %v259 = vld [vmem:[#allocation5 + $0x3c8] sm:$0xff]
    %v260 = vld [vmem:[#allocation5 + $0x3d0] sm:$0xff]
    %v261 = vld [vmem:[#allocation5 + $0x3d8] sm:$0xff]
    %v262 = vld [vmem:[#allocation5 + $0x3e0] sm:$0xff]
    %v263 = vld [vmem:[#allocation5 + $0x3e8] sm:$0xff]
    %v264 = vld [vmem:[#allocation5 + $0x3f0] sm:$0xff]
    %v265 = vld [vmem:[#allocation5 + $0x3f8] sm:$0xff]
    %v266 = vld [vmem:[#allocation5 + $0x400] sm:$0xff]
    %v267 = vld [vmem:[#allocation5 + $0x408] sm:$0xff]
    %v268 = vld [vmem:[#allocation5 + $0x410] sm:$0xff]
    %v269 = vld [vmem:[#allocation5 + $0x418] sm:$0xff]
    %v270 = vld [vmem:[#allocation5 + $0x420] sm:$0xff]
    %v271 = vld [vmem:[#allocation5 + $0x428] sm:$0xff]
    %v272 = vld [vmem:[#allocation5 + $0x430] sm:$0xff]
    %v273 = vld [vmem:[#allocation5 + $0x438] sm:$0xff]
    %v274 = vld [vmem:[#allocation5 + $0x440] sm:$0xff]
    %v275 = vld [vmem:[#allocation5 + $0x448] sm:$0xff]
    %v276 = vld [vmem:[#allocation5 + $0x450] sm:$0xff]
    %v277 = vld [vmem:[#allocation5 + $0x458] sm:$0xff]
    %v278 = vld [vmem:[#allocation5 + $0x460] sm:$0xff]
    %v279 = vld [vmem:[#allocation5 + $0x468] sm:$0xff]
    %v280 = vld [vmem:[#allocation5 + $0x470] sm:$0xff]
    %v281 = vld [vmem:[#allocation5 + $0x478] sm:$0xff]
    %v282 = vld [vmem:[#allocation5 + $0x480] sm:$0xff]
    %v283 = vld [vmem:[#allocation5 + $0x488] sm:$0xff]
    %v284 = vld [vmem:[#allocation5 + $0x490] sm:$0xff]
    %v285 = vld [vmem:[#allocation5 + $0x498] sm:$0xff]
    %v286 = vld [vmem:[#allocation5 + $0x4a0] sm:$0xff]
    %v287 = vld [vmem:[#allocation5 + $0x4a8] sm:$0xff]
    %v288 = vld [vmem:[#allocation5 + $0x4b0] sm:$0xff]
    %v289 = vld [vmem:[#allocation5 + $0x4b8] sm:$0xff]
    %v290 = vld [vmem:[#allocation5 + $0x4c0] sm:$0xff]
    %v291 = vld [vmem:[#allocation5 + $0x4c8] sm:$0xff]
    %v292 = vld [vmem:[#allocation5 + $0x4d0] sm:$0xff]
    %v293 = vld [vmem:[#allocation5 + $0x4d8] sm:$0xff]
    %v294 = vld [vmem:[#allocation5 + $0x4e0] sm:$0xff]
    %v295 = vld [vmem:[#allocation5 + $0x4e8] sm:$0xff]
    %v296 = vld [vmem:[#allocation5 + $0x4f0] sm:$0xff]
    %v297 = vld [vmem:[#allocation5 + $0x4f8] sm:$0xff]
    %v298 = vld [vmem:[#allocation5 + $0x500] sm:$0xff]
    %v299 = vld [vmem:[#allocation5 + $0x508] sm:$0xff]
    %v300 = vld [vmem:[#allocation5 + $0x510] sm:$0xff]
    %v301 = vld [vmem:[#allocation5 + $0x518] sm:$0xff]
    %v302 = vld [vmem:[#allocation5 + $0x520] sm:$0xff]
    %v303 = vld [vmem:[#allocation5 + $0x528] sm:$0xff]
    %v304 = vld [vmem:[#allocation5 + $0x530] sm:$0xff]
    %v305 = vld [vmem:[#allocation5 + $0x538] sm:$0xff]
    %v306 = vld [vmem:[#allocation5 + $0x540] sm:$0xff]
    %v307 = vld [vmem:[#allocation5 + $0x548] sm:$0xff]
    %v308 = vld [vmem:[#allocation5 + $0x550] sm:$0xff]
    %v309 = vld [vmem:[#allocation5 + $0x558] sm:$0xff]
    %v310 = vld [vmem:[#allocation5 + $0x560] sm:$0xff]
    %v311 = vld [vmem:[#allocation5 + $0x568] sm:$0xff]
    %v312 = vld [vmem:[#allocation5 + $0x570] sm:$0xff]
    %v313 = vld [vmem:[#allocation5 + $0x578] sm:$0xff]
    %v314 = vld [vmem:[#allocation5 + $0x580] sm:$0xff]
    %v315 = vld [vmem:[#allocation5 + $0x588] sm:$0xff]
    %v316 = vld [vmem:[#allocation5 + $0x590] sm:$0xff]
    %v317 = vld [vmem:[#allocation5 + $0x598] sm:$0xff]
    %v318 = vld [vmem:[#allocation5 + $0x5a0] sm:$0xff]
    %v319 = vld [vmem:[#allocation5 + $0x5a8] sm:$0xff]
    %v320 = vld [vmem:[#allocation5 + $0x5b0] sm:$0xff]
    %v321 = vld [vmem:[#allocation5 + $0x5b8] sm:$0xff]
    %v322 = vld [vmem:[#allocation5 + $0x5c0] sm:$0xff]
    %v323 = vld [vmem:[#allocation5 + $0x5c8] sm:$0xff]
    %v324 = vld [vmem:[#allocation5 + $0x5d0] sm:$0xff]
    %v325 = vld [vmem:[#allocation5 + $0x5d8] sm:$0xff]
    %v326 = vld [vmem:[#allocation5 + $0x5e0] sm:$0xff]
    %v327 = vld [vmem:[#allocation5 + $0x5e8] sm:$0xff]
    %v328 = vld [vmem:[#allocation5 + $0x5f0] sm:$0xff]
    %v329 = vld [vmem:[#allocation5 + $0x5f8] sm:$0xff]
    %v330 = vld [vmem:[#allocation5 + $0x600] sm:$0xff]
    %v331 = vld [vmem:[#allocation5 + $0x608] sm:$0xff]
    %v332 = vld [vmem:[#allocation5 + $0x610] sm:$0xff]
    %v333 = vld [vmem:[#allocation5 + $0x618] sm:$0xff]
    %v334 = vld [vmem:[#allocation5 + $0x620] sm:$0xff]
    %v335 = vld [vmem:[#allocation5 + $0x628] sm:$0xff]
    %v336 = vld [vmem:[#allocation5 + $0x630] sm:$0xff]
    %v337 = vld [vmem:[#allocation5 + $0x638] sm:$0xff]
    %v338 = vld [vmem:[#allocation5 + $0x640] sm:$0xff]
    %v339 = vld [vmem:[#allocation5 + $0x648] sm:$0xff]
    %v340 = vld [vmem:[#allocation5 + $0x650] sm:$0xff]
    %v341 = vld [vmem:[#allocation5 + $0x658] sm:$0xff]
    %v342 = vld [vmem:[#allocation5 + $0x660] sm:$0xff]
    %v343 = vld [vmem:[#allocation5 + $0x668] sm:$0xff]
    %v344 = vld [vmem:[#allocation5 + $0x670] sm:$0xff]
    %v345 = vld [vmem:[#allocation5 + $0x678] sm:$0xff]
    %v346 = vld [vmem:[#allocation5 + $0x680] sm:$0xff]
    %v347 = vld [vmem:[#allocation5 + $0x688] sm:$0xff]
    %v348 = vld [vmem:[#allocation5 + $0x690] sm:$0xff]
    %v349 = vld [vmem:[#allocation5 + $0x698] sm:$0xff]
    %v350 = vld [vmem:[#allocation5 + $0x6a0] sm:$0xff]
    %v351 = vld [vmem:[#allocation5 + $0x6a8] sm:$0xff]
    %v352 = vld [vmem:[#allocation5 + $0x6b0] sm:$0xff]
    %v353 = vld [vmem:[#allocation5 + $0x6b8] sm:$0xff]
    %v354 = vld [vmem:[#allocation5 + $0x6c0] sm:$0xff]
    %v355 = vld [vmem:[#allocation5 + $0x6c8] sm:$0xff]
    %v356 = vld [vmem:[#allocation5 + $0x6d0] sm:$0xff]
    %v357 = vld [vmem:[#allocation5 + $0x6d8] sm:$0xff]
    %v358 = vld [vmem:[#allocation5 + $0x6e0] sm:$0xff]
    %v359 = vld [vmem:[#allocation5 + $0x6e8] sm:$0xff]
    %v360 = vld [vmem:[#allocation5 + $0x6f0] sm:$0xff]
    %v361 = vld [vmem:[#allocation5 + $0x6f8] sm:$0xff]
    %v362 = vld [vmem:[#allocation5 + $0x700] sm:$0xff]
    %v363 = vld [vmem:[#allocation5 + $0x708] sm:$0xff]
    %v364 = vld [vmem:[#allocation5 + $0x710] sm:$0xff]
    %v365 = vld [vmem:[#allocation5 + $0x718] sm:$0xff]
    %v366 = vld [vmem:[#allocation5 + $0x720] sm:$0xff]
    %v367 = vld [vmem:[#allocation5 + $0x728] sm:$0xff]
    %v368 = vld [vmem:[#allocation5 + $0x730] sm:$0xff]
    %v369 = vld [vmem:[#allocation5 + $0x738] sm:$0xff]
    %v370 = vld [vmem:[#allocation5 + $0x740] sm:$0xff]
    %v371 = vld [vmem:[#allocation5 + $0x748] sm:$0xff]
    %v372 = vld [vmem:[#allocation5 + $0x750] sm:$0xff]
    %v373 = vld [vmem:[#allocation5 + $0x758] sm:$0xff]
    %v374 = vld [vmem:[#allocation5 + $0x760] sm:$0xff]
    %v375 = vld [vmem:[#allocation5 + $0x768] sm:$0xff]
    %v376 = vld [vmem:[#allocation5 + $0x770] sm:$0xff]
    %v377 = vld [vmem:[#allocation5 + $0x778] sm:$0xff]
    %v378 = vld [vmem:[#allocation5 + $0x780] sm:$0xff]
    %v379 = vld [vmem:[#allocation5 + $0x788] sm:$0xff]
    %v380 = vld [vmem:[#allocation5 + $0x790] sm:$0xff]
    %v381 = vld [vmem:[#allocation5 + $0x798] sm:$0xff]
    %v382 = vld [vmem:[#allocation5 + $0x7a0] sm:$0xff]
    %v383 = vld [vmem:[#allocation5 + $0x7a8] sm:$0xff]
    %v384 = vld [vmem:[#allocation5 + $0x7b0] sm:$0xff]
    %v385 = vld [vmem:[#allocation5 + $0x7b8] sm:$0xff]
    %v386 = vld [vmem:[#allocation5 + $0x7c0] sm:$0xff]
    %v387 = vld [vmem:[#allocation5 + $0x7c8] sm:$0xff]
    %v388 = vld [vmem:[#allocation5 + $0x7d0] sm:$0xff]
    %v389 = vld [vmem:[#allocation5 + $0x7d8] sm:$0xff]
    %v390 = vld [vmem:[#allocation5 + $0x7e0] sm:$0xff]
    %v391 = vld [vmem:[#allocation5 + $0x7e8] sm:$0xff]
    %v392 = vld [vmem:[#allocation5 + $0x7f0] sm:$0xff]
    %v393 = vld [vmem:[#allocation5 + $0x7f8] sm:$0xff]
    %v394 = vld [vmem:[#allocation5 + $0x800] sm:$0xff]
    %v395 = vld [vmem:[#allocation5 + $0x808] sm:$0xff]
    %v396 = vld [vmem:[#allocation5 + $0x810] sm:$0xff]
    %v397 = vld [vmem:[#allocation5 + $0x818] sm:$0xff]
    %v398 = vld [vmem:[#allocation5 + $0x820] sm:$0xff]
    %v399 = vld [vmem:[#allocation5 + $0x828] sm:$0xff]
    %v400 = vld [vmem:[#allocation5 + $0x830] sm:$0xff]
    %v401 = vld [vmem:[#allocation5 + $0x838] sm:$0xff]
    %v402 = vld [vmem:[#allocation5 + $0x840] sm:$0xff]
    %v403 = vld [vmem:[#allocation5 + $0x848] sm:$0xff]
    %v404 = vld [vmem:[#allocation5 + $0x850] sm:$0xff]
    %v405 = vld [vmem:[#allocation5 + $0x858] sm:$0xff]
    %v406 = vld [vmem:[#allocation5 + $0x860] sm:$0xff]
    %v407 = vld [vmem:[#allocation5 + $0x868] sm:$0xff]
    %v408 = vld [vmem:[#allocation5 + $0x870] sm:$0xff]
    %v409 = vld [vmem:[#allocation5 + $0x878] sm:$0xff]
    %v410 = vld [vmem:[#allocation5 + $0x880] sm:$0xff]
    %v411 = vld [vmem:[#allocation5 + $0x888] sm:$0xff]
    %v412 = vld [vmem:[#allocation5 + $0x890] sm:$0xff]
    %v413 = vld [vmem:[#allocation5 + $0x898] sm:$0xff]
    %v414 = vld [vmem:[#allocation5 + $0x8a0] sm:$0xff]
    %v415 = vld [vmem:[#allocation5 + $0x8a8] sm:$0xff]
    %v416 = vld [vmem:[#allocation5 + $0x8b0] sm:$0xff]
    %v417 = vld [vmem:[#allocation5 + $0x8b8] sm:$0xff]
    %v418 = vld [vmem:[#allocation5 + $0x8c0] sm:$0xff]
    %v419 = vld [vmem:[#allocation5 + $0x8c8] sm:$0xff]
    %v420 = vld [vmem:[#allocation5 + $0x8d0] sm:$0xff]
    %v421 = vld [vmem:[#allocation5 + $0x8d8] sm:$0xff]
    %v422 = vld [vmem:[#allocation5 + $0x8e0] sm:$0xff]
    %v423 = vld [vmem:[#allocation5 + $0x8e8] sm:$0xff]
    %v424 = vld [vmem:[#allocation5 + $0x8f0] sm:$0xff]
    %v425 = vld [vmem:[#allocation5 + $0x8f8] sm:$0xff]
    %v426 = vld [vmem:[#allocation5 + $0x900] sm:$0xff]
    %v427 = vld [vmem:[#allocation5 + $0x908] sm:$0xff]
    %v428 = vld [vmem:[#allocation5 + $0x910] sm:$0xff]
    %v429 = vld [vmem:[#allocation5 + $0x918] sm:$0xff]
    %v430 = vld [vmem:[#allocation5 + $0x920] sm:$0xff]
    %v431 = vld [vmem:[#allocation5 + $0x928] sm:$0xff]
    %v432 = vld [vmem:[#allocation5 + $0x930] sm:$0xff]
    %v433 = vld [vmem:[#allocation5 + $0x938] sm:$0xff]
    %v434 = vld [vmem:[#allocation5 + $0x940] sm:$0xff]
    %v435 = vld [vmem:[#allocation5 + $0x948] sm:$0xff]
    %v436 = vld [vmem:[#allocation5 + $0x950] sm:$0xff]
    %v437 = vld [vmem:[#allocation5 + $0x958] sm:$0xff]
    %v438 = vld [vmem:[#allocation5 + $0x960] sm:$0xff]
    %v439 = vld [vmem:[#allocation5 + $0x968] sm:$0xff]
    %v440 = vld [vmem:[#allocation5 + $0x970] sm:$0xff]
    %v441 = vld [vmem:[#allocation5 + $0x978] sm:$0xff]
    %v442 = vld [vmem:[#allocation5 + $0x980] sm:$0xff]
    %v443 = vld [vmem:[#allocation5 + $0x988] sm:$0xff]
    %v444 = vld [vmem:[#allocation5 + $0x990] sm:$0xff]
    %v445 = vld [vmem:[#allocation5 + $0x998] sm:$0xff]
    %v446 = vld [vmem:[#allocation5 + $0x9a0] sm:$0xff]
    %v447 = vld [vmem:[#allocation5 + $0x9a8] sm:$0xff]
    %v448 = vld [vmem:[#allocation5 + $0x9b0] sm:$0xff]
    %v449 = vld [vmem:[#allocation5 + $0x9b8] sm:$0xff]
    %v450 = vld [vmem:[#allocation5 + $0x9c0] sm:$0xff]
    %v451 = vld [vmem:[#allocation5 + $0x9c8] sm:$0xff]
    %v452 = vld [vmem:[#allocation5 + $0x9d0] sm:$0xff]
    %v453 = vld [vmem:[#allocation5 + $0x9d8] sm:$0xff]
    %v454 = vld [vmem:[#allocation5 + $0x9e0] sm:$0xff]
    %v455 = vld [vmem:[#allocation5 + $0x9e8] sm:$0xff]
    %v456 = vld [vmem:[#allocation5 + $0x9f0] sm:$0xff]
    %v457 = vld [vmem:[#allocation5 + $0x9f8] sm:$0xff]
    %v458 = vld [vmem:[#allocation5 + $0xa00] sm:$0xff]
    %v459 = vld [vmem:[#allocation5 + $0xa08] sm:$0xff]
    %v460 = vld [vmem:[#allocation5 + $0xa10] sm:$0xff]
    %v461 = vld [vmem:[#allocation5 + $0xa18] sm:$0xff]
    %v462 = vld [vmem:[#allocation5 + $0xa20] sm:$0xff]
    %v463 = vld [vmem:[#allocation5 + $0xa28] sm:$0xff]
    %v464 = vld [vmem:[#allocation5 + $0xa30] sm:$0xff]
    %v465 = vld [vmem:[#allocation5 + $0xa38] sm:$0xff]
    %v466 = vld [vmem:[#allocation5 + $0xa40] sm:$0xff]
    %v467 = vld [vmem:[#allocation5 + $0xa48] sm:$0xff]
    %v468 = vld [vmem:[#allocation5 + $0xa50] sm:$0xff]
    %v469 = vld [vmem:[#allocation5 + $0xa58] sm:$0xff]
    %v470 = vld [vmem:[#allocation5 + $0xa60] sm:$0xff]
    %v471 = vld [vmem:[#allocation5 + $0xa68] sm:$0xff]
    %v472 = vld [vmem:[#allocation5 + $0xa70] sm:$0xff]
    %v473 = vld [vmem:[#allocation5 + $0xa78] sm:$0xff]
    %v474 = vld [vmem:[#allocation5 + $0xa80] sm:$0xff]
    %v475 = vld [vmem:[#allocation5 + $0xa88] sm:$0xff]
    %v476 = vld [vmem:[#allocation5 + $0xa90] sm:$0xff]
    %v477 = vld [vmem:[#allocation5 + $0xa98] sm:$0xff]
    %v478 = vld [vmem:[#allocation5 + $0xaa0] sm:$0xff]
    %v479 = vld [vmem:[#allocation5 + $0xaa8] sm:$0xff]
    %v480 = vld [vmem:[#allocation5 + $0xab0] sm:$0xff]
    %v481 = vld [vmem:[#allocation5 + $0xab8] sm:$0xff]
    %v482 = vld [vmem:[#allocation5 + $0xac0] sm:$0xff]
    %v483 = vld [vmem:[#allocation5 + $0xac8] sm:$0xff]
    %v484 = vld [vmem:[#allocation5 + $0xad0] sm:$0xff]
    %v485 = vld [vmem:[#allocation5 + $0xad8] sm:$0xff]
    %v486 = vld [vmem:[#allocation5 + $0xae0] sm:$0xff]
    %v487 = vld [vmem:[#allocation5 + $0xae8] sm:$0xff]
    %v488 = vld [vmem:[#allocation5 + $0xaf0] sm:$0xff]
    %v489 = vld [vmem:[#allocation5 + $0xaf8] sm:$0xff]
    %v490 = vld [vmem:[#allocation5 + $0xb00] sm:$0xff]
    %v491 = vld [vmem:[#allocation5 + $0xb08] sm:$0xff]
    %v492 = vld [vmem:[#allocation5 + $0xb10] sm:$0xff]
    %v493 = vld [vmem:[#allocation5 + $0xb18] sm:$0xff]
    %v494 = vld [vmem:[#allocation5 + $0xb20] sm:$0xff]
    %v495 = vld [vmem:[#allocation5 + $0xb28] sm:$0xff]
    %v496 = vld [vmem:[#allocation5 + $0xb30] sm:$0xff]
    %v497 = vld [vmem:[#allocation5 + $0xb38] sm:$0xff]
    %v498 = vld [vmem:[#allocation5 + $0xb40] sm:$0xff]
    %v499 = vld [vmem:[#allocation5 + $0xb48] sm:$0xff]
    %v500 = vld [vmem:[#allocation5 + $0xb50] sm:$0xff]
    %v501 = vld [vmem:[#allocation5 + $0xb58] sm:$0xff]
    %v502 = vld [vmem:[#allocation5 + $0xb60] sm:$0xff]
    %v503 = vld [vmem:[#allocation5 + $0xb68] sm:$0xff]
    %v504 = vld [vmem:[#allocation5 + $0xb70] sm:$0xff]
    %v505 = vld [vmem:[#allocation5 + $0xb78] sm:$0xff]
    %v506 = vld [vmem:[#allocation5 + $0xb80] sm:$0xff]
    %v507 = vld [vmem:[#allocation5 + $0xb88] sm:$0xff]
    %v508 = vld [vmem:[#allocation5 + $0xb90] sm:$0xff]
    %v509 = vld [vmem:[#allocation5 + $0xb98] sm:$0xff]
    %v510 = vld [vmem:[#allocation5 + $0xba0] sm:$0xff]
    %v511 = vld [vmem:[#allocation5 + $0xba8] sm:$0xff]
    %v512 = vld [vmem:[#allocation5 + $0xbb0] sm:$0xff]
    %v513 = vld [vmem:[#allocation5 + $0xbb8] sm:$0xff]
    %v514 = vld [vmem:[#allocation5 + $0xbc0] sm:$0xff]
    %v515 = vld [vmem:[#allocation5 + $0xbc8] sm:$0xff]
    %v516 = vld [vmem:[#allocation5 + $0xbd0] sm:$0xff]
    %v517 = vld [vmem:[#allocation5 + $0xbd8] sm:$0xff]
    %v518 = vld [vmem:[#allocation5 + $0xbe0] sm:$0xff]
    %v519 = vld [vmem:[#allocation5 + $0xbe8] sm:$0xff]
    %v520 = vld [vmem:[#allocation5 + $0xbf0] sm:$0xff]
    %v521 = vld [vmem:[#allocation5 + $0xbf8] sm:$0xff]
    %v522 = vld [vmem:[#allocation5 + $0xc00] sm:$0xff]
    %v523 = vld [vmem:[#allocation5 + $0xc08] sm:$0xff]
    %v524 = vld [vmem:[#allocation5 + $0xc10] sm:$0xff]
    %v525 = vld [vmem:[#allocation5 + $0xc18] sm:$0xff]
    %v526 = vld [vmem:[#allocation5 + $0xc20] sm:$0xff]
    %v527 = vld [vmem:[#allocation5 + $0xc28] sm:$0xff]
    %v528 = vld [vmem:[#allocation5 + $0xc30] sm:$0xff]
    %v529 = vld [vmem:[#allocation5 + $0xc38] sm:$0xff]
    %v530 = vld [vmem:[#allocation7] sm:$0xff]
    %v532 = vlaneseq
    %v533 = vshrl.u32 %v532, 7
    %v534 = vsub.s32 0, %v533
    %v535 = vrot.slane %v530, %v534
    %v536 = vlaneseq
    %v537 = vshrl.u32 %v536, 7
    %v538 = vsub.s32 1, %v537
    %v539 = vrot.slane %v530, %v538
    %v540 = vlaneseq
    %v541 = vshrl.u32 %v540, 7
    %v542 = vsub.s32 2, %v541
    %v543 = vrot.slane %v530, %v542
    %v544 = vlaneseq
    %v545 = vshrl.u32 %v544, 7
    %v546 = vsub.s32 3, %v545
    %v547 = vrot.slane %v530, %v546
    %v548 = vlaneseq
    %v549 = vshrl.u32 %v548, 7
    %v550 = vsub.s32 4, %v549
    %v551 = vrot.slane %v530, %v550
    %v552 = vlaneseq
    %v553 = vshrl.u32 %v552, 7
    %v554 = vsub.s32 5, %v553
    %v555 = vrot.slane %v530, %v554
    %v556 = vlaneseq
    %v557 = vshrl.u32 %v556, 7
    %v558 = vsub.s32 6, %v557
    %v559 = vrot.slane %v530, %v558
    %v560 = vlaneseq
    %v561 = vshrl.u32 %v560, 7
    %v562 = vsub.s32 7, %v561
    %v563 = vrot.slane %v530, %v562
    %v964 = vunpack.c.l.b16 %v138
    %v965 = vunpack.c.h.b16 %v138
    %v966 = vunpack.c.l.b16 %v139
    %v967 = vunpack.c.h.b16 %v139
    %v968 = vunpack.c.l.b16 %v140
    %v969 = vunpack.c.h.b16 %v140
    %v970 = vunpack.c.l.b16 %v141
    %v971 = vunpack.c.h.b16 %v141
    %v972 = vunpack.c.l.b16 %v142
    %v973 = vunpack.c.h.b16 %v142
    %v974 = vunpack.c.l.b16 %v143
    %v975 = vunpack.c.h.b16 %v143
    %v976 = vunpack.c.l.b16 %v144
    %v977 = vunpack.c.h.b16 %v144
    %v978 = vunpack.c.l.b16 %v145
    %v979 = vunpack.c.h.b16 %v145
    %v980 = vunpack.c.l.b16 %v146
    %v981 = vunpack.c.h.b16 %v146
    %v982 = vunpack.c.l.b16 %v147
    %v983 = vunpack.c.h.b16 %v147
    %v984 = vunpack.c.l.b16 %v148
    %v985 = vunpack.c.h.b16 %v148
    %v986 = vunpack.c.l.b16 %v149
    %v987 = vunpack.c.h.b16 %v149
    %v988 = vunpack.c.l.b16 %v150
    %v989 = vunpack.c.h.b16 %v150
    %v990 = vunpack.c.l.b16 %v151
    %v991 = vunpack.c.h.b16 %v151
    %v992 = vunpack.c.l.b16 %v152
    %v993 = vunpack.c.h.b16 %v152
    %v994 = vunpack.c.l.b16 %v153
    %v995 = vunpack.c.h.b16 %v153
    %v996 = vunpack.c.l.b16 %v154
    %v997 = vunpack.c.h.b16 %v154
    %v998 = vunpack.c.l.b16 %v155
    %v999 = vunpack.c.h.b16 %v155
    %v1000 = vunpack.c.l.b16 %v156
    %v1001 = vunpack.c.h.b16 %v156
    %v1002 = vunpack.c.l.b16 %v157
    %v1003 = vunpack.c.h.b16 %v157
    %v1004 = vunpack.c.l.b16 %v158
    %v1005 = vunpack.c.h.b16 %v158
    %v1006 = vunpack.c.l.b16 %v159
    %v1007 = vunpack.c.h.b16 %v159
    %v1008 = vunpack.c.l.b16 %v160
    %v1009 = vunpack.c.h.b16 %v160
    %v1010 = vunpack.c.l.b16 %v161
    %v1011 = vunpack.c.h.b16 %v161
    %v1012 = vunpack.c.l.b16 %v162
    %v1013 = vunpack.c.h.b16 %v162
    %v1014 = vunpack.c.l.b16 %v163
    %v1015 = vunpack.c.h.b16 %v163
    %v1016 = vunpack.c.l.b16 %v164
    %v1017 = vunpack.c.h.b16 %v164
    %v1018 = vunpack.c.l.b16 %v165
    %v1019 = vunpack.c.h.b16 %v165
    %v1020 = vunpack.c.l.b16 %v166
    %v1021 = vunpack.c.h.b16 %v166
    %v1022 = vunpack.c.l.b16 %v167
    %v1023 = vunpack.c.h.b16 %v167
    %v1024 = vunpack.c.l.b16 %v168
    %v1025 = vunpack.c.h.b16 %v168
    %v1026 = vunpack.c.l.b16 %v169
    %v1027 = vunpack.c.h.b16 %v169
    %v1028 = vunpack.c.l.b16 %v170
    %v1029 = vunpack.c.h.b16 %v170
    %v1030 = vunpack.c.l.b16 %v171
    %v1031 = vunpack.c.h.b16 %v171
    %v1032 = vunpack.c.l.b16 %v172
    %v1033 = vunpack.c.h.b16 %v172
    %v1034 = vunpack.c.l.b16 %v173
    %v1035 = vunpack.c.h.b16 %v173
    %v1036 = vunpack.c.l.b16 %v174
    %v1037 = vunpack.c.h.b16 %v174
    %v1038 = vunpack.c.l.b16 %v175
    %v1039 = vunpack.c.h.b16 %v175
    %v1040 = vunpack.c.l.b16 %v176
    %v1041 = vunpack.c.h.b16 %v176
    %v1042 = vunpack.c.l.b16 %v177
    %v1043 = vunpack.c.h.b16 %v177
    %v1044 = vunpack.c.l.b16 %v178
    %v1045 = vunpack.c.h.b16 %v178
    %v1046 = vunpack.c.l.b16 %v179
    %v1047 = vunpack.c.h.b16 %v179
    %v1048 = vunpack.c.l.b16 %v180
    %v1049 = vunpack.c.h.b16 %v180
    %v1050 = vunpack.c.l.b16 %v181
    %v1051 = vunpack.c.h.b16 %v181
    %v1052 = vunpack.c.l.b16 %v182
    %v1053 = vunpack.c.h.b16 %v182
    %v1054 = vunpack.c.l.b16 %v183
    %v1055 = vunpack.c.h.b16 %v183
    %v1056 = vunpack.c.l.b16 %v184
    %v1057 = vunpack.c.h.b16 %v184
    %v1058 = vunpack.c.l.b16 %v185
    %v1059 = vunpack.c.h.b16 %v185
    %v1060 = vunpack.c.l.b16 %v186
    %v1061 = vunpack.c.h.b16 %v186
    %v1062 = vunpack.c.l.b16 %v187
    %v1063 = vunpack.c.h.b16 %v187
    %v1064 = vunpack.c.l.b16 %v188
    %v1065 = vunpack.c.h.b16 %v188
    %v1066 = vunpack.c.l.b16 %v189
    %v1067 = vunpack.c.h.b16 %v189
    %v1068 = vunpack.c.l.b16 %v190
    %v1069 = vunpack.c.h.b16 %v190
    %v1070 = vunpack.c.l.b16 %v191
    %v1071 = vunpack.c.h.b16 %v191
    %v1072 = vunpack.c.l.b16 %v192
    %v1073 = vunpack.c.h.b16 %v192
    %v1074 = vunpack.c.l.b16 %v193
    %v1075 = vunpack.c.h.b16 %v193
    %v1076 = vunpack.c.l.b16 %v194
    %v1077 = vunpack.c.h.b16 %v194
    %v1078 = vunpack.c.l.b16 %v195
    %v1079 = vunpack.c.h.b16 %v195
    %v1080 = vunpack.c.l.b16 %v196
    %v1081 = vunpack.c.h.b16 %v196
    %v1082 = vunpack.c.l.b16 %v197
    %v1083 = vunpack.c.h.b16 %v197
    %v1084 = vunpack.c.l.b16 %v198
    %v1085 = vunpack.c.h.b16 %v198
    %v1086 = vunpack.c.l.b16 %v199
    %v1087 = vunpack.c.h.b16 %v199
    %v1088 = vunpack.c.l.b16 %v200
    %v1089 = vunpack.c.h.b16 %v200
    %v1090 = vunpack.c.l.b16 %v201
    %v1091 = vunpack.c.h.b16 %v201
    %v1092 = vunpack.c.l.b16 %v202
    %v1093 = vunpack.c.h.b16 %v202
    %v1094 = vunpack.c.l.b16 %v203
    %v1095 = vunpack.c.h.b16 %v203
    %v1096 = vunpack.c.l.b16 %v204
    %v1097 = vunpack.c.h.b16 %v204
    %v1098 = vunpack.c.l.b16 %v205
    %v1099 = vunpack.c.h.b16 %v205
    %v1100 = vunpack.c.l.b16 %v206
    %v1101 = vunpack.c.h.b16 %v206
    %v1102 = vunpack.c.l.b16 %v207
    %v1103 = vunpack.c.h.b16 %v207
    %v1104 = vunpack.c.l.b16 %v208
    %v1105 = vunpack.c.h.b16 %v208
    %v1106 = vunpack.c.l.b16 %v209
    %v1107 = vunpack.c.h.b16 %v209
    %v1108 = vunpack.c.l.b16 %v210
    %v1109 = vunpack.c.h.b16 %v210
    %v1110 = vunpack.c.l.b16 %v211
    %v1111 = vunpack.c.h.b16 %v211
    %v1112 = vunpack.c.l.b16 %v212
    %v1113 = vunpack.c.h.b16 %v212
    %v1114 = vunpack.c.l.b16 %v213
    %v1115 = vunpack.c.h.b16 %v213
    %v1116 = vunpack.c.l.b16 %v214
    %v1117 = vunpack.c.h.b16 %v214
    %v1118 = vunpack.c.l.b16 %v215
    %v1119 = vunpack.c.h.b16 %v215
    %v1120 = vunpack.c.l.b16 %v216
    %v1121 = vunpack.c.h.b16 %v216
    %v1122 = vunpack.c.l.b16 %v217
    %v1123 = vunpack.c.h.b16 %v217
    %v1124 = vunpack.c.l.b16 %v218
    %v1125 = vunpack.c.h.b16 %v218
    %v1126 = vunpack.c.l.b16 %v219
    %v1127 = vunpack.c.h.b16 %v219
    %v1128 = vunpack.c.l.b16 %v220
    %v1129 = vunpack.c.h.b16 %v220
    %v1130 = vunpack.c.l.b16 %v221
    %v1131 = vunpack.c.h.b16 %v221
    %v1132 = vunpack.c.l.b16 %v222
    %v1133 = vunpack.c.h.b16 %v222
    %v1134 = vunpack.c.l.b16 %v223
    %v1135 = vunpack.c.h.b16 %v223
    %v1136 = vunpack.c.l.b16 %v224
    %v1137 = vunpack.c.h.b16 %v224
    %v1138 = vunpack.c.l.b16 %v225
    %v1139 = vunpack.c.h.b16 %v225
    %v1140 = vunpack.c.l.b16 %v226
    %v1141 = vunpack.c.h.b16 %v226
    %v1142 = vunpack.c.l.b16 %v227
    %v1143 = vunpack.c.h.b16 %v227
    %v1144 = vunpack.c.l.b16 %v228
    %v1145 = vunpack.c.h.b16 %v228
    %v1146 = vunpack.c.l.b16 %v229
    %v1147 = vunpack.c.h.b16 %v229
    %v1148 = vunpack.c.l.b16 %v230
    %v1149 = vunpack.c.h.b16 %v230
    %v1150 = vunpack.c.l.b16 %v231
    %v1151 = vunpack.c.h.b16 %v231
    %v1152 = vunpack.c.l.b16 %v232
    %v1153 = vunpack.c.h.b16 %v232
    %v1154 = vunpack.c.l.b16 %v233
    %v1155 = vunpack.c.h.b16 %v233
    %v1156 = vunpack.c.l.b16 %v234
    %v1157 = vunpack.c.h.b16 %v234
    %v1158 = vunpack.c.l.b16 %v235
    %v1159 = vunpack.c.h.b16 %v235
    %v1160 = vunpack.c.l.b16 %v236
    %v1161 = vunpack.c.h.b16 %v236
    %v1162 = vunpack.c.l.b16 %v237
    %v1163 = vunpack.c.h.b16 %v237
    %v1164 = vunpack.c.l.b16 %v238
    %v1165 = vunpack.c.h.b16 %v238
    %v1166 = vunpack.c.l.b16 %v239
    %v1167 = vunpack.c.h.b16 %v239
    %v1168 = vunpack.c.l.b16 %v240
    %v1169 = vunpack.c.h.b16 %v240
    %v1170 = vunpack.c.l.b16 %v241
    %v1171 = vunpack.c.h.b16 %v241
    %v1172 = vunpack.c.l.b16 %v242
    %v1173 = vunpack.c.h.b16 %v242
    %v1174 = vunpack.c.l.b16 %v243
    %v1175 = vunpack.c.h.b16 %v243
    %v1176 = vunpack.c.l.b16 %v244
    %v1177 = vunpack.c.h.b16 %v244
    %v1178 = vunpack.c.l.b16 %v245
    %v1179 = vunpack.c.h.b16 %v245
    %v1180 = vunpack.c.l.b16 %v246
    %v1181 = vunpack.c.h.b16 %v246
    %v1182 = vunpack.c.l.b16 %v247
    %v1183 = vunpack.c.h.b16 %v247
    %v1184 = vunpack.c.l.b16 %v248
    %v1185 = vunpack.c.h.b16 %v248
    %v1186 = vunpack.c.l.b16 %v249
    %v1187 = vunpack.c.h.b16 %v249
    %v1188 = vunpack.c.l.b16 %v250
    %v1189 = vunpack.c.h.b16 %v250
    %v1190 = vunpack.c.l.b16 %v251
    %v1191 = vunpack.c.h.b16 %v251
    %v1192 = vunpack.c.l.b16 %v252
    %v1193 = vunpack.c.h.b16 %v252
    %v1194 = vunpack.c.l.b16 %v253
    %v1195 = vunpack.c.h.b16 %v253
    %v1196 = vunpack.c.l.b16 %v254
    %v1197 = vunpack.c.h.b16 %v254
    %v1198 = vunpack.c.l.b16 %v255
    %v1199 = vunpack.c.h.b16 %v255
    %v1200 = vunpack.c.l.b16 %v256
    %v1201 = vunpack.c.h.b16 %v256
    %v1202 = vunpack.c.l.b16 %v257
    %v1203 = vunpack.c.h.b16 %v257
    %v1204 = vunpack.c.l.b16 %v258
    %v1205 = vunpack.c.h.b16 %v258
    %v1206 = vunpack.c.l.b16 %v259
    %v1207 = vunpack.c.h.b16 %v259
    %v1208 = vunpack.c.l.b16 %v260
    %v1209 = vunpack.c.h.b16 %v260
    %v1210 = vunpack.c.l.b16 %v261
    %v1211 = vunpack.c.h.b16 %v261
    %v1212 = vunpack.c.l.b16 %v262
    %v1213 = vunpack.c.h.b16 %v262
    %v1214 = vunpack.c.l.b16 %v263
    %v1215 = vunpack.c.h.b16 %v263
    %v1216 = vunpack.c.l.b16 %v264
    %v1217 = vunpack.c.h.b16 %v264
    %v1218 = vunpack.c.l.b16 %v265
    %v1219 = vunpack.c.h.b16 %v265
    %v1220 = vunpack.c.l.b16 %v266
    %v1221 = vunpack.c.h.b16 %v266
    %v1222 = vunpack.c.l.b16 %v267
    %v1223 = vunpack.c.h.b16 %v267
    %v1224 = vunpack.c.l.b16 %v268
    %v1225 = vunpack.c.h.b16 %v268
    %v1226 = vunpack.c.l.b16 %v269
    %v1227 = vunpack.c.h.b16 %v269
    %v1228 = vunpack.c.l.b16 %v270
    %v1229 = vunpack.c.h.b16 %v270
    %v1230 = vunpack.c.l.b16 %v271
    %v1231 = vunpack.c.h.b16 %v271
    %v1232 = vunpack.c.l.b16 %v272
    %v1233 = vunpack.c.h.b16 %v272
    %v1234 = vunpack.c.l.b16 %v273
    %v1235 = vunpack.c.h.b16 %v273
    %v1236 = vunpack.c.l.b16 %v274
    %v1237 = vunpack.c.h.b16 %v274
    %v1238 = vunpack.c.l.b16 %v275
    %v1239 = vunpack.c.h.b16 %v275
    %v1240 = vunpack.c.l.b16 %v276
    %v1241 = vunpack.c.h.b16 %v276
    %v1242 = vunpack.c.l.b16 %v277
    %v1243 = vunpack.c.h.b16 %v277
    %v1244 = vunpack.c.l.b16 %v278
    %v1245 = vunpack.c.h.b16 %v278
    %v1246 = vunpack.c.l.b16 %v279
    %v1247 = vunpack.c.h.b16 %v279
    %v1248 = vunpack.c.l.b16 %v280
    %v1249 = vunpack.c.h.b16 %v280
    %v1250 = vunpack.c.l.b16 %v281
    %v1251 = vunpack.c.h.b16 %v281
    %v1252 = vunpack.c.l.b16 %v282
    %v1253 = vunpack.c.h.b16 %v282
    %v1254 = vunpack.c.l.b16 %v283
    %v1255 = vunpack.c.h.b16 %v283
    %v1256 = vunpack.c.l.b16 %v284
    %v1257 = vunpack.c.h.b16 %v284
    %v1258 = vunpack.c.l.b16 %v285
    %v1259 = vunpack.c.h.b16 %v285
    %v1260 = vunpack.c.l.b16 %v286
    %v1261 = vunpack.c.h.b16 %v286
    %v1262 = vunpack.c.l.b16 %v287
    %v1263 = vunpack.c.h.b16 %v287
    %v1264 = vunpack.c.l.b16 %v288
    %v1265 = vunpack.c.h.b16 %v288
    %v1266 = vunpack.c.l.b16 %v289
    %v1267 = vunpack.c.h.b16 %v289
    %v1268 = vunpack.c.l.b16 %v290
    %v1269 = vunpack.c.h.b16 %v290
    %v1270 = vunpack.c.l.b16 %v291
    %v1271 = vunpack.c.h.b16 %v291
    %v1272 = vunpack.c.l.b16 %v292
    %v1273 = vunpack.c.h.b16 %v292
    %v1274 = vunpack.c.l.b16 %v293
    %v1275 = vunpack.c.h.b16 %v293
    %v1276 = vunpack.c.l.b16 %v294
    %v1277 = vunpack.c.h.b16 %v294
    %v1278 = vunpack.c.l.b16 %v295
    %v1279 = vunpack.c.h.b16 %v295
    %v1280 = vunpack.c.l.b16 %v296
    %v1281 = vunpack.c.h.b16 %v296
    %v1282 = vunpack.c.l.b16 %v297
    %v1283 = vunpack.c.h.b16 %v297
    %v1284 = vunpack.c.l.b16 %v298
    %v1285 = vunpack.c.h.b16 %v298
    %v1286 = vunpack.c.l.b16 %v299
    %v1287 = vunpack.c.h.b16 %v299
    %v1288 = vunpack.c.l.b16 %v300
    %v1289 = vunpack.c.h.b16 %v300
    %v1290 = vunpack.c.l.b16 %v301
    %v1291 = vunpack.c.h.b16 %v301
    %v1292 = vunpack.c.l.b16 %v302
    %v1293 = vunpack.c.h.b16 %v302
    %v1294 = vunpack.c.l.b16 %v303
    %v1295 = vunpack.c.h.b16 %v303
    %v1296 = vunpack.c.l.b16 %v304
    %v1297 = vunpack.c.h.b16 %v304
    %v1298 = vunpack.c.l.b16 %v305
    %v1299 = vunpack.c.h.b16 %v305
    %v1300 = vunpack.c.l.b16 %v306
    %v1301 = vunpack.c.h.b16 %v306
    %v1302 = vunpack.c.l.b16 %v307
    %v1303 = vunpack.c.h.b16 %v307
    %v1304 = vunpack.c.l.b16 %v308
    %v1305 = vunpack.c.h.b16 %v308
    %v1306 = vunpack.c.l.b16 %v309
    %v1307 = vunpack.c.h.b16 %v309
    %v1308 = vunpack.c.l.b16 %v310
    %v1309 = vunpack.c.h.b16 %v310
    %v1310 = vunpack.c.l.b16 %v311
    %v1311 = vunpack.c.h.b16 %v311
    %v1312 = vunpack.c.l.b16 %v312
    %v1313 = vunpack.c.h.b16 %v312
    %v1314 = vunpack.c.l.b16 %v313
    %v1315 = vunpack.c.h.b16 %v313
    %v1316 = vunpack.c.l.b16 %v314
    %v1317 = vunpack.c.h.b16 %v314
    %v1318 = vunpack.c.l.b16 %v315
    %v1319 = vunpack.c.h.b16 %v315
    %v1320 = vunpack.c.l.b16 %v316
    %v1321 = vunpack.c.h.b16 %v316
    %v1322 = vunpack.c.l.b16 %v317
    %v1323 = vunpack.c.h.b16 %v317
    %v1324 = vunpack.c.l.b16 %v318
    %v1325 = vunpack.c.h.b16 %v318
    %v1326 = vunpack.c.l.b16 %v319
    %v1327 = vunpack.c.h.b16 %v319
    %v1328 = vunpack.c.l.b16 %v320
    %v1329 = vunpack.c.h.b16 %v320
    %v1330 = vunpack.c.l.b16 %v321
    %v1331 = vunpack.c.h.b16 %v321
    %v1332 = vunpack.c.l.b16 %v322
    %v1333 = vunpack.c.h.b16 %v322
    %v1334 = vunpack.c.l.b16 %v323
    %v1335 = vunpack.c.h.b16 %v323
    %v1336 = vunpack.c.l.b16 %v324
    %v1337 = vunpack.c.h.b16 %v324
    %v1338 = vunpack.c.l.b16 %v325
    %v1339 = vunpack.c.h.b16 %v325
    %v1340 = vunpack.c.l.b16 %v326
    %v1341 = vunpack.c.h.b16 %v326
    %v1342 = vunpack.c.l.b16 %v327
    %v1343 = vunpack.c.h.b16 %v327
    %v1344 = vunpack.c.l.b16 %v328
    %v1345 = vunpack.c.h.b16 %v328
    %v1346 = vunpack.c.l.b16 %v329
    %v1347 = vunpack.c.h.b16 %v329
    %v1348 = vunpack.c.l.b16 %v330
    %v1349 = vunpack.c.h.b16 %v330
    %v1350 = vunpack.c.l.b16 %v331
    %v1351 = vunpack.c.h.b16 %v331
    %v1352 = vunpack.c.l.b16 %v332
    %v1353 = vunpack.c.h.b16 %v332
    %v1354 = vunpack.c.l.b16 %v333
    %v1355 = vunpack.c.h.b16 %v333
    %v1356 = vunpack.c.l.b16 %v334
    %v1357 = vunpack.c.h.b16 %v334
    %v1358 = vunpack.c.l.b16 %v335
    %v1359 = vunpack.c.h.b16 %v335
    %v1360 = vunpack.c.l.b16 %v336
    %v1361 = vunpack.c.h.b16 %v336
    %v1362 = vunpack.c.l.b16 %v337
    %v1363 = vunpack.c.h.b16 %v337
    %v1364 = vunpack.c.l.b16 %v338
    %v1365 = vunpack.c.h.b16 %v338
    %v1366 = vunpack.c.l.b16 %v339
    %v1367 = vunpack.c.h.b16 %v339
    %v1368 = vunpack.c.l.b16 %v340
    %v1369 = vunpack.c.h.b16 %v340
    %v1370 = vunpack.c.l.b16 %v341
    %v1371 = vunpack.c.h.b16 %v341
    %v1372 = vunpack.c.l.b16 %v342
    %v1373 = vunpack.c.h.b16 %v342
    %v1374 = vunpack.c.l.b16 %v343
    %v1375 = vunpack.c.h.b16 %v343
    %v1376 = vunpack.c.l.b16 %v344
    %v1377 = vunpack.c.h.b16 %v344
    %v1378 = vunpack.c.l.b16 %v345
    %v1379 = vunpack.c.h.b16 %v345
    %v1380 = vunpack.c.l.b16 %v346
    %v1381 = vunpack.c.h.b16 %v346
    %v1382 = vunpack.c.l.b16 %v347
    %v1383 = vunpack.c.h.b16 %v347
    %v1384 = vunpack.c.l.b16 %v348
    %v1385 = vunpack.c.h.b16 %v348
    %v1386 = vunpack.c.l.b16 %v349
    %v1387 = vunpack.c.h.b16 %v349
    %v1388 = vunpack.c.l.b16 %v350
    %v1389 = vunpack.c.h.b16 %v350
    %v1390 = vunpack.c.l.b16 %v351
    %v1391 = vunpack.c.h.b16 %v351
    %v1392 = vunpack.c.l.b16 %v352
    %v1393 = vunpack.c.h.b16 %v352
    %v1394 = vunpack.c.l.b16 %v353
    %v1395 = vunpack.c.h.b16 %v353
    %v1396 = vunpack.c.l.b16 %v354
    %v1397 = vunpack.c.h.b16 %v354
    %v1398 = vunpack.c.l.b16 %v355
    %v1399 = vunpack.c.h.b16 %v355
    %v1400 = vunpack.c.l.b16 %v356
    %v1401 = vunpack.c.h.b16 %v356
    %v1402 = vunpack.c.l.b16 %v357
    %v1403 = vunpack.c.h.b16 %v357
    %v1404 = vunpack.c.l.b16 %v358
    %v1405 = vunpack.c.h.b16 %v358
    %v1406 = vunpack.c.l.b16 %v359
    %v1407 = vunpack.c.h.b16 %v359
    %v1408 = vunpack.c.l.b16 %v360
    %v1409 = vunpack.c.h.b16 %v360
    %v1410 = vunpack.c.l.b16 %v361
    %v1411 = vunpack.c.h.b16 %v361
    %v1412 = vunpack.c.l.b16 %v362
    %v1413 = vunpack.c.h.b16 %v362
    %v1414 = vunpack.c.l.b16 %v363
    %v1415 = vunpack.c.h.b16 %v363
    %v1416 = vunpack.c.l.b16 %v364
    %v1417 = vunpack.c.h.b16 %v364
    %v1418 = vunpack.c.l.b16 %v365
    %v1419 = vunpack.c.h.b16 %v365
    %v1420 = vunpack.c.l.b16 %v366
    %v1421 = vunpack.c.h.b16 %v366
    %v1422 = vunpack.c.l.b16 %v367
    %v1423 = vunpack.c.h.b16 %v367
    %v1424 = vunpack.c.l.b16 %v368
    %v1425 = vunpack.c.h.b16 %v368
    %v1426 = vunpack.c.l.b16 %v369
    %v1427 = vunpack.c.h.b16 %v369
    %v1428 = vunpack.c.l.b16 %v370
    %v1429 = vunpack.c.h.b16 %v370
    %v1430 = vunpack.c.l.b16 %v371
    %v1431 = vunpack.c.h.b16 %v371
    %v1432 = vunpack.c.l.b16 %v372
    %v1433 = vunpack.c.h.b16 %v372
    %v1434 = vunpack.c.l.b16 %v373
    %v1435 = vunpack.c.h.b16 %v373
    %v1436 = vunpack.c.l.b16 %v374
    %v1437 = vunpack.c.h.b16 %v374
    %v1438 = vunpack.c.l.b16 %v375
    %v1439 = vunpack.c.h.b16 %v375
    %v1440 = vunpack.c.l.b16 %v376
    %v1441 = vunpack.c.h.b16 %v376
    %v1442 = vunpack.c.l.b16 %v377
    %v1443 = vunpack.c.h.b16 %v377
    %v1444 = vunpack.c.l.b16 %v378
    %v1445 = vunpack.c.h.b16 %v378
    %v1446 = vunpack.c.l.b16 %v379
    %v1447 = vunpack.c.h.b16 %v379
    %v1448 = vunpack.c.l.b16 %v380
    %v1449 = vunpack.c.h.b16 %v380
    %v1450 = vunpack.c.l.b16 %v381
    %v1451 = vunpack.c.h.b16 %v381
    %v1452 = vunpack.c.l.b16 %v382
    %v1453 = vunpack.c.h.b16 %v382
    %v1454 = vunpack.c.l.b16 %v383
    %v1455 = vunpack.c.h.b16 %v383
    %v1456 = vunpack.c.l.b16 %v384
    %v1457 = vunpack.c.h.b16 %v384
    %v1458 = vunpack.c.l.b16 %v385
    %v1459 = vunpack.c.h.b16 %v385
    %v1460 = vunpack.c.l.b16 %v386
    %v1461 = vunpack.c.h.b16 %v386
    %v1462 = vunpack.c.l.b16 %v387
    %v1463 = vunpack.c.h.b16 %v387
    %v1464 = vunpack.c.l.b16 %v388
    %v1465 = vunpack.c.h.b16 %v388
    %v1466 = vunpack.c.l.b16 %v389
    %v1467 = vunpack.c.h.b16 %v389
    %v1468 = vunpack.c.l.b16 %v390
    %v1469 = vunpack.c.h.b16 %v390
    %v1470 = vunpack.c.l.b16 %v391
    %v1471 = vunpack.c.h.b16 %v391
    %v1472 = vunpack.c.l.b16 %v392
    %v1473 = vunpack.c.h.b16 %v392
    %v1474 = vunpack.c.l.b16 %v393
    %v1475 = vunpack.c.h.b16 %v393
    %v1476 = vunpack.c.l.b16 %v394
    %v1477 = vunpack.c.h.b16 %v394
    %v1478 = vunpack.c.l.b16 %v395
    %v1479 = vunpack.c.h.b16 %v395
    %v1480 = vunpack.c.l.b16 %v396
    %v1481 = vunpack.c.h.b16 %v396
    %v1482 = vunpack.c.l.b16 %v397
    %v1483 = vunpack.c.h.b16 %v397
    %v1484 = vunpack.c.l.b16 %v398
    %v1485 = vunpack.c.h.b16 %v398
    %v1486 = vunpack.c.l.b16 %v399
    %v1487 = vunpack.c.h.b16 %v399
    %v1488 = vunpack.c.l.b16 %v400
    %v1489 = vunpack.c.h.b16 %v400
    %v1490 = vunpack.c.l.b16 %v401
    %v1491 = vunpack.c.h.b16 %v401
    %v1492 = vunpack.c.l.b16 %v402
    %v1493 = vunpack.c.h.b16 %v402
    %v1494 = vunpack.c.l.b16 %v403
    %v1495 = vunpack.c.h.b16 %v403
    %v1496 = vunpack.c.l.b16 %v404
    %v1497 = vunpack.c.h.b16 %v404
    %v1498 = vunpack.c.l.b16 %v405
    %v1499 = vunpack.c.h.b16 %v405
    %v1500 = vunpack.c.l.b16 %v406
    %v1501 = vunpack.c.h.b16 %v406
    %v1502 = vunpack.c.l.b16 %v407
    %v1503 = vunpack.c.h.b16 %v407
    %v1504 = vunpack.c.l.b16 %v408
    %v1505 = vunpack.c.h.b16 %v408
    %v1506 = vunpack.c.l.b16 %v409
    %v1507 = vunpack.c.h.b16 %v409
    %v1508 = vunpack.c.l.b16 %v410
    %v1509 = vunpack.c.h.b16 %v410
    %v1510 = vunpack.c.l.b16 %v411
    %v1511 = vunpack.c.h.b16 %v411
    %v1512 = vunpack.c.l.b16 %v412
    %v1513 = vunpack.c.h.b16 %v412
    %v1514 = vunpack.c.l.b16 %v413
    %v1515 = vunpack.c.h.b16 %v413
    %v1516 = vunpack.c.l.b16 %v414
    %v1517 = vunpack.c.h.b16 %v414
    %v1518 = vunpack.c.l.b16 %v415
    %v1519 = vunpack.c.h.b16 %v415
    %v1520 = vunpack.c.l.b16 %v416
    %v1521 = vunpack.c.h.b16 %v416
    %v1522 = vunpack.c.l.b16 %v417
    %v1523 = vunpack.c.h.b16 %v417
    %v1524 = vunpack.c.l.b16 %v418
    %v1525 = vunpack.c.h.b16 %v418
    %v1526 = vunpack.c.l.b16 %v419
    %v1527 = vunpack.c.h.b16 %v419
    %v1528 = vunpack.c.l.b16 %v420
    %v1529 = vunpack.c.h.b16 %v420
    %v1530 = vunpack.c.l.b16 %v421
    %v1531 = vunpack.c.h.b16 %v421
    %v1532 = vunpack.c.l.b16 %v422
    %v1533 = vunpack.c.h.b16 %v422
    %v1534 = vunpack.c.l.b16 %v423
    %v1535 = vunpack.c.h.b16 %v423
    %v1536 = vunpack.c.l.b16 %v424
    %v1537 = vunpack.c.h.b16 %v424
    %v1538 = vunpack.c.l.b16 %v425
    %v1539 = vunpack.c.h.b16 %v425
    %v1540 = vunpack.c.l.b16 %v426
    %v1541 = vunpack.c.h.b16 %v426
    %v1542 = vunpack.c.l.b16 %v427
    %v1543 = vunpack.c.h.b16 %v427
    %v1544 = vunpack.c.l.b16 %v428
    %v1545 = vunpack.c.h.b16 %v428
    %v1546 = vunpack.c.l.b16 %v429
    %v1547 = vunpack.c.h.b16 %v429
    %v1548 = vunpack.c.l.b16 %v430
    %v1549 = vunpack.c.h.b16 %v430
    %v1550 = vunpack.c.l.b16 %v431
    %v1551 = vunpack.c.h.b16 %v431
    %v1552 = vunpack.c.l.b16 %v432
    %v1553 = vunpack.c.h.b16 %v432
    %v1554 = vunpack.c.l.b16 %v433
    %v1555 = vunpack.c.h.b16 %v433
    %v1556 = vunpack.c.l.b16 %v434
    %v1557 = vunpack.c.h.b16 %v434
    %v1558 = vunpack.c.l.b16 %v435
    %v1559 = vunpack.c.h.b16 %v435
    %v1560 = vunpack.c.l.b16 %v436
    %v1561 = vunpack.c.h.b16 %v436
    %v1562 = vunpack.c.l.b16 %v437
    %v1563 = vunpack.c.h.b16 %v437
    %v1564 = vunpack.c.l.b16 %v438
    %v1565 = vunpack.c.h.b16 %v438
    %v1566 = vunpack.c.l.b16 %v439
    %v1567 = vunpack.c.h.b16 %v439
    %v1568 = vunpack.c.l.b16 %v440
    %v1569 = vunpack.c.h.b16 %v440
    %v1570 = vunpack.c.l.b16 %v441
    %v1571 = vunpack.c.h.b16 %v441
    %v1572 = vunpack.c.l.b16 %v442
    %v1573 = vunpack.c.h.b16 %v442
    %v1574 = vunpack.c.l.b16 %v443
    %v1575 = vunpack.c.h.b16 %v443
    %v1576 = vunpack.c.l.b16 %v444
    %v1577 = vunpack.c.h.b16 %v444
    %v1578 = vunpack.c.l.b16 %v445
    %v1579 = vunpack.c.h.b16 %v445
    %v1580 = vunpack.c.l.b16 %v446
    %v1581 = vunpack.c.h.b16 %v446
    %v1582 = vunpack.c.l.b16 %v447
    %v1583 = vunpack.c.h.b16 %v447
    %v1584 = vunpack.c.l.b16 %v448
    %v1585 = vunpack.c.h.b16 %v448
    %v1586 = vunpack.c.l.b16 %v449
    %v1587 = vunpack.c.h.b16 %v449
    %v1588 = vunpack.c.l.b16 %v450
    %v1589 = vunpack.c.h.b16 %v450
    %v1590 = vunpack.c.l.b16 %v451
    %v1591 = vunpack.c.h.b16 %v451
    %v1592 = vunpack.c.l.b16 %v452
    %v1593 = vunpack.c.h.b16 %v452
    %v1594 = vunpack.c.l.b16 %v453
    %v1595 = vunpack.c.h.b16 %v453
    %v1596 = vunpack.c.l.b16 %v454
    %v1597 = vunpack.c.h.b16 %v454
    %v1598 = vunpack.c.l.b16 %v455
    %v1599 = vunpack.c.h.b16 %v455
    %v1600 = vunpack.c.l.b16 %v456
    %v1601 = vunpack.c.h.b16 %v456
    %v1602 = vunpack.c.l.b16 %v457
    %v1603 = vunpack.c.h.b16 %v457
    %v1604 = vunpack.c.l.b16 %v458
    %v1605 = vunpack.c.h.b16 %v458
    %v1606 = vunpack.c.l.b16 %v459
    %v1607 = vunpack.c.h.b16 %v459
    %v1608 = vunpack.c.l.b16 %v460
    %v1609 = vunpack.c.h.b16 %v460
    %v1610 = vunpack.c.l.b16 %v461
    %v1611 = vunpack.c.h.b16 %v461
    %v1612 = vunpack.c.l.b16 %v462
    %v1613 = vunpack.c.h.b16 %v462
    %v1614 = vunpack.c.l.b16 %v463
    %v1615 = vunpack.c.h.b16 %v463
    %v1616 = vunpack.c.l.b16 %v464
    %v1617 = vunpack.c.h.b16 %v464
    %v1618 = vunpack.c.l.b16 %v465
    %v1619 = vunpack.c.h.b16 %v465
    %v1620 = vunpack.c.l.b16 %v466
    %v1621 = vunpack.c.h.b16 %v466
    %v1622 = vunpack.c.l.b16 %v467
    %v1623 = vunpack.c.h.b16 %v467
    %v1624 = vunpack.c.l.b16 %v468
    %v1625 = vunpack.c.h.b16 %v468
    %v1626 = vunpack.c.l.b16 %v469
    %v1627 = vunpack.c.h.b16 %v469
    %v1628 = vunpack.c.l.b16 %v470
    %v1629 = vunpack.c.h.b16 %v470
    %v1630 = vunpack.c.l.b16 %v471
    %v1631 = vunpack.c.h.b16 %v471
    %v1632 = vunpack.c.l.b16 %v472
    %v1633 = vunpack.c.h.b16 %v472
    %v1634 = vunpack.c.l.b16 %v473
    %v1635 = vunpack.c.h.b16 %v473
    %v1636 = vunpack.c.l.b16 %v474
    %v1637 = vunpack.c.h.b16 %v474
    %v1638 = vunpack.c.l.b16 %v475
    %v1639 = vunpack.c.h.b16 %v475
    %v1640 = vunpack.c.l.b16 %v476
    %v1641 = vunpack.c.h.b16 %v476
    %v1642 = vunpack.c.l.b16 %v477
    %v1643 = vunpack.c.h.b16 %v477
    %v1644 = vunpack.c.l.b16 %v478
    %v1645 = vunpack.c.h.b16 %v478
    %v1646 = vunpack.c.l.b16 %v479
    %v1647 = vunpack.c.h.b16 %v479
    %v1648 = vunpack.c.l.b16 %v480
    %v1649 = vunpack.c.h.b16 %v480
    %v1650 = vunpack.c.l.b16 %v481
    %v1651 = vunpack.c.h.b16 %v481
    %v1652 = vunpack.c.l.b16 %v482
    %v1653 = vunpack.c.h.b16 %v482
    %v1654 = vunpack.c.l.b16 %v483
    %v1655 = vunpack.c.h.b16 %v483
    %v1656 = vunpack.c.l.b16 %v484
    %v1657 = vunpack.c.h.b16 %v484
    %v1658 = vunpack.c.l.b16 %v485
    %v1659 = vunpack.c.h.b16 %v485
    %v1660 = vunpack.c.l.b16 %v486
    %v1661 = vunpack.c.h.b16 %v486
    %v1662 = vunpack.c.l.b16 %v487
    %v1663 = vunpack.c.h.b16 %v487
    %v1664 = vunpack.c.l.b16 %v488
    %v1665 = vunpack.c.h.b16 %v488
    %v1666 = vunpack.c.l.b16 %v489
    %v1667 = vunpack.c.h.b16 %v489
    %v1668 = vunpack.c.l.b16 %v490
    %v1669 = vunpack.c.h.b16 %v490
    %v1670 = vunpack.c.l.b16 %v491
    %v1671 = vunpack.c.h.b16 %v491
    %v1672 = vunpack.c.l.b16 %v492
    %v1673 = vunpack.c.h.b16 %v492
    %v1674 = vunpack.c.l.b16 %v493
    %v1675 = vunpack.c.h.b16 %v493
    %v1676 = vunpack.c.l.b16 %v494
    %v1677 = vunpack.c.h.b16 %v494
    %v1678 = vunpack.c.l.b16 %v495
    %v1679 = vunpack.c.h.b16 %v495
    %v1680 = vunpack.c.l.b16 %v496
    %v1681 = vunpack.c.h.b16 %v496
    %v1682 = vunpack.c.l.b16 %v497
    %v1683 = vunpack.c.h.b16 %v497
    %v1684 = vunpack.c.l.b16 %v498
    %v1685 = vunpack.c.h.b16 %v498
    %v1686 = vunpack.c.l.b16 %v499
    %v1687 = vunpack.c.h.b16 %v499
    %v1688 = vunpack.c.l.b16 %v500
    %v1689 = vunpack.c.h.b16 %v500
    %v1690 = vunpack.c.l.b16 %v501
    %v1691 = vunpack.c.h.b16 %v501
    %v1692 = vunpack.c.l.b16 %v502
    %v1693 = vunpack.c.h.b16 %v502
    %v1694 = vunpack.c.l.b16 %v503
    %v1695 = vunpack.c.h.b16 %v503
    %v1696 = vunpack.c.l.b16 %v504
    %v1697 = vunpack.c.h.b16 %v504
    %v1698 = vunpack.c.l.b16 %v505
    %v1699 = vunpack.c.h.b16 %v505
    %v1700 = vunpack.c.l.b16 %v506
    %v1701 = vunpack.c.h.b16 %v506
    %v1702 = vunpack.c.l.b16 %v507
    %v1703 = vunpack.c.h.b16 %v507
    %v1704 = vunpack.c.l.b16 %v508
    %v1705 = vunpack.c.h.b16 %v508
    %v1706 = vunpack.c.l.b16 %v509
    %v1707 = vunpack.c.h.b16 %v509
    %v1708 = vunpack.c.l.b16 %v510
    %v1709 = vunpack.c.h.b16 %v510
    %v1710 = vunpack.c.l.b16 %v511
    %v1711 = vunpack.c.h.b16 %v511
    %v1712 = vunpack.c.l.b16 %v512
    %v1713 = vunpack.c.h.b16 %v512
    %v1714 = vunpack.c.l.b16 %v513
    %v1715 = vunpack.c.h.b16 %v513
    %v1716 = vunpack.c.l.b16 %v514
    %v1717 = vunpack.c.h.b16 %v514
    %v1718 = vunpack.c.l.b16 %v515
    %v1719 = vunpack.c.h.b16 %v515
    %v1720 = vunpack.c.l.b16 %v516
    %v1721 = vunpack.c.h.b16 %v516
    %v1722 = vunpack.c.l.b16 %v517
    %v1723 = vunpack.c.h.b16 %v517
    %v1724 = vunpack.c.l.b16 %v518
    %v1725 = vunpack.c.h.b16 %v518
    %v1726 = vunpack.c.l.b16 %v519
    %v1727 = vunpack.c.h.b16 %v519
    %v1728 = vunpack.c.l.b16 %v520
    %v1729 = vunpack.c.h.b16 %v520
    %v1730 = vunpack.c.l.b16 %v521
    %v1731 = vunpack.c.h.b16 %v521
    %v1732 = vunpack.c.l.b16 %v522
    %v1733 = vunpack.c.h.b16 %v522
    %v1734 = vunpack.c.l.b16 %v523
    %v1735 = vunpack.c.h.b16 %v523
    %v1736 = vunpack.c.l.b16 %v524
    %v1737 = vunpack.c.h.b16 %v524
    %v1738 = vunpack.c.l.b16 %v525
    %v1739 = vunpack.c.h.b16 %v525
    %v1740 = vunpack.c.l.b16 %v526
    %v1741 = vunpack.c.h.b16 %v526
    %v1742 = vunpack.c.l.b16 %v527
    %v1743 = vunpack.c.h.b16 %v527
    %v1744 = vunpack.c.l.b16 %v528
    %v1745 = vunpack.c.h.b16 %v528
    %v1746 = vunpack.c.l.b16 %v529
    %v1747 = vunpack.c.h.b16 %v529
    %v1748 = vpack.c.b16 %v972, %v964
    %v1749 = vpack.c.b16 %v973, %v965
    %v1750 = vpack.c.b16 %v974, %v966
    %v1751 = vpack.c.b16 %v975, %v967
    %v1752 = vpack.c.b16 %v976, %v968
    %v1753 = vpack.c.b16 %v977, %v969
    %v1754 = vpack.c.b16 %v978, %v970
    %v1755 = vpack.c.b16 %v979, %v971
    %v1756 = vpack.c.b16 %v988, %v980
    %v1757 = vpack.c.b16 %v989, %v981
    %v1758 = vpack.c.b16 %v990, %v982
    %v1759 = vpack.c.b16 %v991, %v983
    %v1760 = vpack.c.b16 %v992, %v984
    %v1761 = vpack.c.b16 %v993, %v985
    %v1762 = vpack.c.b16 %v994, %v986
    %v1763 = vpack.c.b16 %v995, %v987
    %v1764 = vpack.c.b16 %v1004, %v996
    %v1765 = vpack.c.b16 %v1005, %v997
    %v1766 = vpack.c.b16 %v1006, %v998
    %v1767 = vpack.c.b16 %v1007, %v999
    %v1768 = vpack.c.b16 %v1008, %v1000
    %v1769 = vpack.c.b16 %v1009, %v1001
    %v1770 = vpack.c.b16 %v1010, %v1002
    %v1771 = vpack.c.b16 %v1011, %v1003
    %v1772 = vpack.c.b16 %v1020, %v1012
    %v1773 = vpack.c.b16 %v1021, %v1013
    %v1774 = vpack.c.b16 %v1022, %v1014
    %v1775 = vpack.c.b16 %v1023, %v1015
    %v1776 = vpack.c.b16 %v1024, %v1016
    %v1777 = vpack.c.b16 %v1025, %v1017
    %v1778 = vpack.c.b16 %v1026, %v1018
    %v1779 = vpack.c.b16 %v1027, %v1019
    %v1780 = vpack.c.b16 %v1036, %v1028
    %v1781 = vpack.c.b16 %v1037, %v1029
    %v1782 = vpack.c.b16 %v1038, %v1030
    %v1783 = vpack.c.b16 %v1039, %v1031
    %v1784 = vpack.c.b16 %v1040, %v1032
    %v1785 = vpack.c.b16 %v1041, %v1033
    %v1786 = vpack.c.b16 %v1042, %v1034
    %v1787 = vpack.c.b16 %v1043, %v1035
    %v1788 = vpack.c.b16 %v1052, %v1044
    %v1789 = vpack.c.b16 %v1053, %v1045
    %v1790 = vpack.c.b16 %v1054, %v1046
    %v1791 = vpack.c.b16 %v1055, %v1047
    %v1792 = vpack.c.b16 %v1056, %v1048
    %v1793 = vpack.c.b16 %v1057, %v1049
    %v1794 = vpack.c.b16 %v1058, %v1050
    %v1795 = vpack.c.b16 %v1059, %v1051
    %v1796 = vpack.c.b16 %v1068, %v1060
    %v1797 = vpack.c.b16 %v1069, %v1061
    %v1798 = vpack.c.b16 %v1070, %v1062
    %v1799 = vpack.c.b16 %v1071, %v1063
    %v1800 = vpack.c.b16 %v1072, %v1064
    %v1801 = vpack.c.b16 %v1073, %v1065
    %v1802 = vpack.c.b16 %v1074, %v1066
    %v1803 = vpack.c.b16 %v1075, %v1067
    %v1804 = vpack.c.b16 %v1084, %v1076
    %v1805 = vpack.c.b16 %v1085, %v1077
    %v1806 = vpack.c.b16 %v1086, %v1078
    %v1807 = vpack.c.b16 %v1087, %v1079
    %v1808 = vpack.c.b16 %v1088, %v1080
    %v1809 = vpack.c.b16 %v1089, %v1081
    %v1810 = vpack.c.b16 %v1090, %v1082
    %v1811 = vpack.c.b16 %v1091, %v1083
    %v1812 = vpack.c.b16 %v1100, %v1092
    %v1813 = vpack.c.b16 %v1101, %v1093
    %v1814 = vpack.c.b16 %v1102, %v1094
    %v1815 = vpack.c.b16 %v1103, %v1095
    %v1816 = vpack.c.b16 %v1104, %v1096
    %v1817 = vpack.c.b16 %v1105, %v1097
    %v1818 = vpack.c.b16 %v1106, %v1098
    %v1819 = vpack.c.b16 %v1107, %v1099
    %v1820 = vpack.c.b16 %v1116, %v1108
    %v1821 = vpack.c.b16 %v1117, %v1109
    %v1822 = vpack.c.b16 %v1118, %v1110
    %v1823 = vpack.c.b16 %v1119, %v1111
    %v1824 = vpack.c.b16 %v1120, %v1112
    %v1825 = vpack.c.b16 %v1121, %v1113
    %v1826 = vpack.c.b16 %v1122, %v1114
    %v1827 = vpack.c.b16 %v1123, %v1115
    %v1828 = vpack.c.b16 %v1132, %v1124
    %v1829 = vpack.c.b16 %v1133, %v1125
    %v1830 = vpack.c.b16 %v1134, %v1126
    %v1831 = vpack.c.b16 %v1135, %v1127
    %v1832 = vpack.c.b16 %v1136, %v1128
    %v1833 = vpack.c.b16 %v1137, %v1129
    %v1834 = vpack.c.b16 %v1138, %v1130
    %v1835 = vpack.c.b16 %v1139, %v1131
    %v1836 = vpack.c.b16 %v1148, %v1140
    %v1837 = vpack.c.b16 %v1149, %v1141
    %v1838 = vpack.c.b16 %v1150, %v1142
    %v1839 = vpack.c.b16 %v1151, %v1143
    %v1840 = vpack.c.b16 %v1152, %v1144
    %v1841 = vpack.c.b16 %v1153, %v1145
    %v1842 = vpack.c.b16 %v1154, %v1146
    %v1843 = vpack.c.b16 %v1155, %v1147
    %v1844 = vpack.c.b16 %v1164, %v1156
    %v1845 = vpack.c.b16 %v1165, %v1157
    %v1846 = vpack.c.b16 %v1166, %v1158
    %v1847 = vpack.c.b16 %v1167, %v1159
    %v1848 = vpack.c.b16 %v1168, %v1160
    %v1849 = vpack.c.b16 %v1169, %v1161
    %v1850 = vpack.c.b16 %v1170, %v1162
    %v1851 = vpack.c.b16 %v1171, %v1163
    %v1852 = vpack.c.b16 %v1180, %v1172
    %v1853 = vpack.c.b16 %v1181, %v1173
    %v1854 = vpack.c.b16 %v1182, %v1174
    %v1855 = vpack.c.b16 %v1183, %v1175
    %v1856 = vpack.c.b16 %v1184, %v1176
    %v1857 = vpack.c.b16 %v1185, %v1177
    %v1858 = vpack.c.b16 %v1186, %v1178
    %v1859 = vpack.c.b16 %v1187, %v1179
    %v1860 = vpack.c.b16 %v1196, %v1188
    %v1861 = vpack.c.b16 %v1197, %v1189
    %v1862 = vpack.c.b16 %v1198, %v1190
    %v1863 = vpack.c.b16 %v1199, %v1191
    %v1864 = vpack.c.b16 %v1200, %v1192
    %v1865 = vpack.c.b16 %v1201, %v1193
    %v1866 = vpack.c.b16 %v1202, %v1194
    %v1867 = vpack.c.b16 %v1203, %v1195
    %v1868 = vpack.c.b16 %v1212, %v1204
    %v1869 = vpack.c.b16 %v1213, %v1205
    %v1870 = vpack.c.b16 %v1214, %v1206
    %v1871 = vpack.c.b16 %v1215, %v1207
    %v1872 = vpack.c.b16 %v1216, %v1208
    %v1873 = vpack.c.b16 %v1217, %v1209
    %v1874 = vpack.c.b16 %v1218, %v1210
    %v1875 = vpack.c.b16 %v1219, %v1211
    %v1876 = vpack.c.b16 %v1228, %v1220
    %v1877 = vpack.c.b16 %v1229, %v1221
    %v1878 = vpack.c.b16 %v1230, %v1222
    %v1879 = vpack.c.b16 %v1231, %v1223
    %v1880 = vpack.c.b16 %v1232, %v1224
    %v1881 = vpack.c.b16 %v1233, %v1225
    %v1882 = vpack.c.b16 %v1234, %v1226
    %v1883 = vpack.c.b16 %v1235, %v1227
    %v1884 = vpack.c.b16 %v1244, %v1236
    %v1885 = vpack.c.b16 %v1245, %v1237
    %v1886 = vpack.c.b16 %v1246, %v1238
    %v1887 = vpack.c.b16 %v1247, %v1239
    %v1888 = vpack.c.b16 %v1248, %v1240
    %v1889 = vpack.c.b16 %v1249, %v1241
    %v1890 = vpack.c.b16 %v1250, %v1242
    %v1891 = vpack.c.b16 %v1251, %v1243
    %v1892 = vpack.c.b16 %v1260, %v1252
    %v1893 = vpack.c.b16 %v1261, %v1253
    %v1894 = vpack.c.b16 %v1262, %v1254
    %v1895 = vpack.c.b16 %v1263, %v1255
    %v1896 = vpack.c.b16 %v1264, %v1256
    %v1897 = vpack.c.b16 %v1265, %v1257
    %v1898 = vpack.c.b16 %v1266, %v1258
    %v1899 = vpack.c.b16 %v1267, %v1259
    %v1900 = vpack.c.b16 %v1276, %v1268
    %v1901 = vpack.c.b16 %v1277, %v1269
    %v1902 = vpack.c.b16 %v1278, %v1270
    %v1903 = vpack.c.b16 %v1279, %v1271
    %v1904 = vpack.c.b16 %v1280, %v1272
    %v1905 = vpack.c.b16 %v1281, %v1273
    %v1906 = vpack.c.b16 %v1282, %v1274
    %v1907 = vpack.c.b16 %v1283, %v1275
    %v1908 = vpack.c.b16 %v1292, %v1284
    %v1909 = vpack.c.b16 %v1293, %v1285
    %v1910 = vpack.c.b16 %v1294, %v1286
    %v1911 = vpack.c.b16 %v1295, %v1287
    %v1912 = vpack.c.b16 %v1296, %v1288
    %v1913 = vpack.c.b16 %v1297, %v1289
    %v1914 = vpack.c.b16 %v1298, %v1290
    %v1915 = vpack.c.b16 %v1299, %v1291
    %v1916 = vpack.c.b16 %v1308, %v1300
    %v1917 = vpack.c.b16 %v1309, %v1301
    %v1918 = vpack.c.b16 %v1310, %v1302
    %v1919 = vpack.c.b16 %v1311, %v1303
    %v1920 = vpack.c.b16 %v1312, %v1304
    %v1921 = vpack.c.b16 %v1313, %v1305
    %v1922 = vpack.c.b16 %v1314, %v1306
    %v1923 = vpack.c.b16 %v1315, %v1307
    %v1924 = vpack.c.b16 %v1324, %v1316
    %v1925 = vpack.c.b16 %v1325, %v1317
    %v1926 = vpack.c.b16 %v1326, %v1318
    %v1927 = vpack.c.b16 %v1327, %v1319
    %v1928 = vpack.c.b16 %v1328, %v1320
    %v1929 = vpack.c.b16 %v1329, %v1321
    %v1930 = vpack.c.b16 %v1330, %v1322
    %v1931 = vpack.c.b16 %v1331, %v1323
    %v1932 = vpack.c.b16 %v1340, %v1332
    %v1933 = vpack.c.b16 %v1341, %v1333
    %v1934 = vpack.c.b16 %v1342, %v1334
    %v1935 = vpack.c.b16 %v1343, %v1335
    %v1936 = vpack.c.b16 %v1344, %v1336
    %v1937 = vpack.c.b16 %v1345, %v1337
    %v1938 = vpack.c.b16 %v1346, %v1338
    %v1939 = vpack.c.b16 %v1347, %v1339
    %v1940 = vpack.c.b16 %v1356, %v1348
    %v1941 = vpack.c.b16 %v1357, %v1349
    %v1942 = vpack.c.b16 %v1358, %v1350
    %v1943 = vpack.c.b16 %v1359, %v1351
    %v1944 = vpack.c.b16 %v1360, %v1352
    %v1945 = vpack.c.b16 %v1361, %v1353
    %v1946 = vpack.c.b16 %v1362, %v1354
    %v1947 = vpack.c.b16 %v1363, %v1355
    %v1948 = vpack.c.b16 %v1372, %v1364
    %v1949 = vpack.c.b16 %v1373, %v1365
    %v1950 = vpack.c.b16 %v1374, %v1366
    %v1951 = vpack.c.b16 %v1375, %v1367
    %v1952 = vpack.c.b16 %v1376, %v1368
    %v1953 = vpack.c.b16 %v1377, %v1369
    %v1954 = vpack.c.b16 %v1378, %v1370
    %v1955 = vpack.c.b16 %v1379, %v1371
    %v1956 = vpack.c.b16 %v1388, %v1380
    %v1957 = vpack.c.b16 %v1389, %v1381
    %v1958 = vpack.c.b16 %v1390, %v1382
    %v1959 = vpack.c.b16 %v1391, %v1383
    %v1960 = vpack.c.b16 %v1392, %v1384
    %v1961 = vpack.c.b16 %v1393, %v1385
    %v1962 = vpack.c.b16 %v1394, %v1386
    %v1963 = vpack.c.b16 %v1395, %v1387
    %v1964 = vpack.c.b16 %v1404, %v1396
    %v1965 = vpack.c.b16 %v1405, %v1397
    %v1966 = vpack.c.b16 %v1406, %v1398
    %v1967 = vpack.c.b16 %v1407, %v1399
    %v1968 = vpack.c.b16 %v1408, %v1400
    %v1969 = vpack.c.b16 %v1409, %v1401
    %v1970 = vpack.c.b16 %v1410, %v1402
    %v1971 = vpack.c.b16 %v1411, %v1403
    %v1972 = vpack.c.b16 %v1420, %v1412
    %v1973 = vpack.c.b16 %v1421, %v1413
    %v1974 = vpack.c.b16 %v1422, %v1414
    %v1975 = vpack.c.b16 %v1423, %v1415
    %v1976 = vpack.c.b16 %v1424, %v1416
    %v1977 = vpack.c.b16 %v1425, %v1417
    %v1978 = vpack.c.b16 %v1426, %v1418
    %v1979 = vpack.c.b16 %v1427, %v1419
    %v1980 = vpack.c.b16 %v1436, %v1428
    %v1981 = vpack.c.b16 %v1437, %v1429
    %v1982 = vpack.c.b16 %v1438, %v1430
    %v1983 = vpack.c.b16 %v1439, %v1431
    %v1984 = vpack.c.b16 %v1440, %v1432
    %v1985 = vpack.c.b16 %v1441, %v1433
    %v1986 = vpack.c.b16 %v1442, %v1434
    %v1987 = vpack.c.b16 %v1443, %v1435
    %v1988 = vpack.c.b16 %v1452, %v1444
    %v1989 = vpack.c.b16 %v1453, %v1445
    %v1990 = vpack.c.b16 %v1454, %v1446
    %v1991 = vpack.c.b16 %v1455, %v1447
    %v1992 = vpack.c.b16 %v1456, %v1448
    %v1993 = vpack.c.b16 %v1457, %v1449
    %v1994 = vpack.c.b16 %v1458, %v1450
    %v1995 = vpack.c.b16 %v1459, %v1451
    %v1996 = vpack.c.b16 %v1468, %v1460
    %v1997 = vpack.c.b16 %v1469, %v1461
    %v1998 = vpack.c.b16 %v1470, %v1462
    %v1999 = vpack.c.b16 %v1471, %v1463
    %v2000 = vpack.c.b16 %v1472, %v1464
    %v2001 = vpack.c.b16 %v1473, %v1465
    %v2002 = vpack.c.b16 %v1474, %v1466
    %v2003 = vpack.c.b16 %v1475, %v1467
    %v2004 = vpack.c.b16 %v1484, %v1476
    %v2005 = vpack.c.b16 %v1485, %v1477
    %v2006 = vpack.c.b16 %v1486, %v1478
    %v2007 = vpack.c.b16 %v1487, %v1479
    %v2008 = vpack.c.b16 %v1488, %v1480
    %v2009 = vpack.c.b16 %v1489, %v1481
    %v2010 = vpack.c.b16 %v1490, %v1482
    %v2011 = vpack.c.b16 %v1491, %v1483
    %v2012 = vpack.c.b16 %v1500, %v1492
    %v2013 = vpack.c.b16 %v1501, %v1493
    %v2014 = vpack.c.b16 %v1502, %v1494
    %v2015 = vpack.c.b16 %v1503, %v1495
    %v2016 = vpack.c.b16 %v1504, %v1496
    %v2017 = vpack.c.b16 %v1505, %v1497
    %v2018 = vpack.c.b16 %v1506, %v1498
    %v2019 = vpack.c.b16 %v1507, %v1499
    %v2020 = vpack.c.b16 %v1516, %v1508
    %v2021 = vpack.c.b16 %v1517, %v1509
    %v2022 = vpack.c.b16 %v1518, %v1510
    %v2023 = vpack.c.b16 %v1519, %v1511
    %v2024 = vpack.c.b16 %v1520, %v1512
    %v2025 = vpack.c.b16 %v1521, %v1513
    %v2026 = vpack.c.b16 %v1522, %v1514
    %v2027 = vpack.c.b16 %v1523, %v1515
    %v2028 = vpack.c.b16 %v1532, %v1524
    %v2029 = vpack.c.b16 %v1533, %v1525
    %v2030 = vpack.c.b16 %v1534, %v1526
    %v2031 = vpack.c.b16 %v1535, %v1527
    %v2032 = vpack.c.b16 %v1536, %v1528
    %v2033 = vpack.c.b16 %v1537, %v1529
    %v2034 = vpack.c.b16 %v1538, %v1530
    %v2035 = vpack.c.b16 %v1539, %v1531
    %v2036 = vpack.c.b16 %v1548, %v1540
    %v2037 = vpack.c.b16 %v1549, %v1541
    %v2038 = vpack.c.b16 %v1550, %v1542
    %v2039 = vpack.c.b16 %v1551, %v1543
    %v2040 = vpack.c.b16 %v1552, %v1544
    %v2041 = vpack.c.b16 %v1553, %v1545
    %v2042 = vpack.c.b16 %v1554, %v1546
    %v2043 = vpack.c.b16 %v1555, %v1547
    %v2044 = vpack.c.b16 %v1564, %v1556
    %v2045 = vpack.c.b16 %v1565, %v1557
    %v2046 = vpack.c.b16 %v1566, %v1558
    %v2047 = vpack.c.b16 %v1567, %v1559
    %v2048 = vpack.c.b16 %v1568, %v1560
    %v2049 = vpack.c.b16 %v1569, %v1561
    %v2050 = vpack.c.b16 %v1570, %v1562
    %v2051 = vpack.c.b16 %v1571, %v1563
    %v2052 = vpack.c.b16 %v1580, %v1572
    %v2053 = vpack.c.b16 %v1581, %v1573
    %v2054 = vpack.c.b16 %v1582, %v1574
    %v2055 = vpack.c.b16 %v1583, %v1575
    %v2056 = vpack.c.b16 %v1584, %v1576
    %v2057 = vpack.c.b16 %v1585, %v1577
    %v2058 = vpack.c.b16 %v1586, %v1578
    %v2059 = vpack.c.b16 %v1587, %v1579
    %v2060 = vpack.c.b16 %v1596, %v1588
    %v2061 = vpack.c.b16 %v1597, %v1589
    %v2062 = vpack.c.b16 %v1598, %v1590
    %v2063 = vpack.c.b16 %v1599, %v1591
    %v2064 = vpack.c.b16 %v1600, %v1592
    %v2065 = vpack.c.b16 %v1601, %v1593
    %v2066 = vpack.c.b16 %v1602, %v1594
    %v2067 = vpack.c.b16 %v1603, %v1595
    %v2068 = vpack.c.b16 %v1612, %v1604
    %v2069 = vpack.c.b16 %v1613, %v1605
    %v2070 = vpack.c.b16 %v1614, %v1606
    %v2071 = vpack.c.b16 %v1615, %v1607
    %v2072 = vpack.c.b16 %v1616, %v1608
    %v2073 = vpack.c.b16 %v1617, %v1609
    %v2074 = vpack.c.b16 %v1618, %v1610
    %v2075 = vpack.c.b16 %v1619, %v1611
    %v2076 = vpack.c.b16 %v1628, %v1620
    %v2077 = vpack.c.b16 %v1629, %v1621
    %v2078 = vpack.c.b16 %v1630, %v1622
    %v2079 = vpack.c.b16 %v1631, %v1623
    %v2080 = vpack.c.b16 %v1632, %v1624
    %v2081 = vpack.c.b16 %v1633, %v1625
    %v2082 = vpack.c.b16 %v1634, %v1626
    %v2083 = vpack.c.b16 %v1635, %v1627
    %v2084 = vpack.c.b16 %v1644, %v1636
    %v2085 = vpack.c.b16 %v1645, %v1637
    %v2086 = vpack.c.b16 %v1646, %v1638
    %v2087 = vpack.c.b16 %v1647, %v1639
    %v2088 = vpack.c.b16 %v1648, %v1640
    %v2089 = vpack.c.b16 %v1649, %v1641
    %v2090 = vpack.c.b16 %v1650, %v1642
    %v2091 = vpack.c.b16 %v1651, %v1643
    %v2092 = vpack.c.b16 %v1660, %v1652
    %v2093 = vpack.c.b16 %v1661, %v1653
    %v2094 = vpack.c.b16 %v1662, %v1654
    %v2095 = vpack.c.b16 %v1663, %v1655
    %v2096 = vpack.c.b16 %v1664, %v1656
    %v2097 = vpack.c.b16 %v1665, %v1657
    %v2098 = vpack.c.b16 %v1666, %v1658
    %v2099 = vpack.c.b16 %v1667, %v1659
    %v2100 = vpack.c.b16 %v1676, %v1668
    %v2101 = vpack.c.b16 %v1677, %v1669
    %v2102 = vpack.c.b16 %v1678, %v1670
    %v2103 = vpack.c.b16 %v1679, %v1671
    %v2104 = vpack.c.b16 %v1680, %v1672
    %v2105 = vpack.c.b16 %v1681, %v1673
    %v2106 = vpack.c.b16 %v1682, %v1674
    %v2107 = vpack.c.b16 %v1683, %v1675
    %v2108 = vpack.c.b16 %v1692, %v1684
    %v2109 = vpack.c.b16 %v1693, %v1685
    %v2110 = vpack.c.b16 %v1694, %v1686
    %v2111 = vpack.c.b16 %v1695, %v1687
    %v2112 = vpack.c.b16 %v1696, %v1688
    %v2113 = vpack.c.b16 %v1697, %v1689
    %v2114 = vpack.c.b16 %v1698, %v1690
    %v2115 = vpack.c.b16 %v1699, %v1691
    %v2116 = vpack.c.b16 %v1708, %v1700
    %v2117 = vpack.c.b16 %v1709, %v1701
    %v2118 = vpack.c.b16 %v1710, %v1702
    %v2119 = vpack.c.b16 %v1711, %v1703
    %v2120 = vpack.c.b16 %v1712, %v1704
    %v2121 = vpack.c.b16 %v1713, %v1705
    %v2122 = vpack.c.b16 %v1714, %v1706
    %v2123 = vpack.c.b16 %v1715, %v1707
    %v2124 = vpack.c.b16 %v1724, %v1716
    %v2125 = vpack.c.b16 %v1725, %v1717
    %v2126 = vpack.c.b16 %v1726, %v1718
    %v2127 = vpack.c.b16 %v1727, %v1719
    %v2128 = vpack.c.b16 %v1728, %v1720
    %v2129 = vpack.c.b16 %v1729, %v1721
    %v2130 = vpack.c.b16 %v1730, %v1722
    %v2131 = vpack.c.b16 %v1731, %v1723
    %v2132 = vpack.c.b16 %v1740, %v1732
    %v2133 = vpack.c.b16 %v1741, %v1733
    %v2134 = vpack.c.b16 %v1742, %v1734
    %v2135 = vpack.c.b16 %v1743, %v1735
    %v2136 = vpack.c.b16 %v1744, %v1736
    %v2137 = vpack.c.b16 %v1745, %v1737
    %v2138 = vpack.c.b16 %v1746, %v1738
    %v2139 = vpack.c.b16 %v1747, %v1739
    %vm2532 = vcmask 130048
    %v2534 = vsel %vm2532, %v137, 0
    %2536 = vmatprep.subr.bf16.mxu0 %v1805
    %2537 = vmatpush1.bf16.msra.mxu0 %v1804
    %2538 = vmatprep.subr.bf16.mxu0 %v1797
    %2539 = vmatpush1.bf16.msra.mxu0 %v1796
    %2540 = vmatprep.subr.bf16.mxu0 %v1789
    %2541 = vmatpush1.bf16.msra.mxu0 %v1788
    %2542 = vmatprep.subr.bf16.mxu0 %v1781
    %2543 = vmatpush1.bf16.msra.mxu0 %v1780
    %2544 = vmatprep.subr.bf16.mxu0 %v1773
    %2545 = vmatpush1.bf16.msra.mxu0 %v1772
    %2546 = vmatprep.subr.bf16.mxu0 %v1765
    %2547 = vmatpush1.bf16.msra.mxu0 %v1764
    %2548 = vmatprep.subr.bf16.mxu0 %v1757
    %2549 = vmatpush1.bf16.msra.mxu0 %v1756
    %2550 = vmatprep.subr.bf16.mxu0 %v1749
    %2551 = vmatpush1.bf16.msra.mxu0 %v1748
    %2552 = vmatprep.subr.bf16.mxu0 %v1869
    %2553 = vmatpush2.bf16.msra.mxu0 %v1868
    %2554 = vmatprep.subr.bf16.mxu0 %v1861
    %2555 = vmatpush2.bf16.msra.mxu0 %v1860
    %2556 = vmatprep.subr.bf16.mxu0 %v1853
    %2557 = vmatpush2.bf16.msra.mxu0 %v1852
    %2558 = vmatprep.subr.bf16.mxu0 %v1845
    %2559 = vmatpush2.bf16.msra.mxu0 %v1844
    %2560 = vmatprep.subr.bf16.mxu0 %v1837
    %2561 = vmatpush2.bf16.msra.mxu0 %v1836
    %2562 = vmatprep.subr.bf16.mxu0 %v1829
    %2563 = vmatpush2.bf16.msra.mxu0 %v1828
    %2564 = vmatprep.subr.bf16.mxu0 %v1821
    %2565 = vmatpush2.bf16.msra.mxu0 %v1820
    %2566 = vmatprep.subr.bf16.mxu0 %v1813
    %2567 = vmatpush2.bf16.msra.mxu0 %v1812
    %2568 = vmatprep.mubr.bf16.mxu0 %v132
    %2569 = vmatmul.mubr.bf16.gmra.mxu0 %v131
    %v2570 = vpop.f32.mrf.mxu0
    %v2571 = vadd.f32 %v535, %v2570
    %v2572 = vpop.f32.mrf.mxu0
    %v2573 = vadd.f32 %v539, %v2572
    %v2574 = vpop.f32.mrf.mxu0
    %v2575 = vadd.f32 %v535, %v2574
    %v2576 = vpop.f32.mrf.mxu0
    %v2577 = vadd.f32 %v539, %v2576
    %2578 = vdwg.mxu0
    %2579 = vmatprep.subr.bf16.mxu0 %v1933
    %2580 = vmatpush1.bf16.msra.mxu0 %v1932
    %2581 = vmatprep.subr.bf16.mxu0 %v1925
    %2582 = vmatpush1.bf16.msra.mxu0 %v1924
    %2583 = vmatprep.subr.bf16.mxu0 %v1917
    %2584 = vmatpush1.bf16.msra.mxu0 %v1916
    %2585 = vmatprep.subr.bf16.mxu0 %v1909
    %2586 = vmatpush1.bf16.msra.mxu0 %v1908
    %2587 = vmatprep.subr.bf16.mxu0 %v1901
    %2588 = vmatpush1.bf16.msra.mxu0 %v1900
    %2589 = vmatprep.subr.bf16.mxu0 %v1893
    %2590 = vmatpush1.bf16.msra.mxu0 %v1892
    %2591 = vmatprep.subr.bf16.mxu0 %v1885
    %2592 = vmatpush1.bf16.msra.mxu0 %v1884
    %2593 = vmatprep.subr.bf16.mxu0 %v1877
    %2594 = vmatpush1.bf16.msra.mxu0 %v1876
    %2595 = vmatprep.subr.bf16.mxu0 %v1997
    %2596 = vmatpush2.bf16.msra.mxu0 %v1996
    %2597 = vmatprep.subr.bf16.mxu0 %v1989
    %2598 = vmatpush2.bf16.msra.mxu0 %v1988
    %2599 = vmatprep.subr.bf16.mxu0 %v1981
    %2600 = vmatpush2.bf16.msra.mxu0 %v1980
    %2601 = vmatprep.subr.bf16.mxu0 %v1973
    %2602 = vmatpush2.bf16.msra.mxu0 %v1972
    %2603 = vmatprep.subr.bf16.mxu0 %v1965
    %2604 = vmatpush2.bf16.msra.mxu0 %v1964
    %2605 = vmatprep.subr.bf16.mxu0 %v1957
    %2606 = vmatpush2.bf16.msra.mxu0 %v1956
    %2607 = vmatprep.subr.bf16.mxu0 %v1949
    %2608 = vmatpush2.bf16.msra.mxu0 %v1948
    %2609 = vmatprep.subr.bf16.mxu0 %v1941
    %2610 = vmatpush2.bf16.msra.mxu0 %v1940
    %2611 = vmatprep.mubr.bf16.mxu0 %v134
    %2612 = vmatmul.mubr.bf16.gmra.mxu0 %v133
    %v2613 = vpop.f32.mrf.mxu0
    %v2614 = vadd.f32 %v2571, %v2613
    %v2615 = vpop.f32.mrf.mxu0
    %v2616 = vadd.f32 %v2573, %v2615
    %v2617 = vpop.f32.mrf.mxu0
    %v2618 = vadd.f32 %v2575, %v2617
    %v2619 = vpop.f32.mrf.mxu0
    %v2620 = vadd.f32 %v2577, %v2619
    %2621 = vdwg.mxu0
    %2622 = vmatprep.subr.bf16.mxu0 %v2061
    %2623 = vmatpush1.bf16.msra.mxu0 %v2060
    %2624 = vmatprep.subr.bf16.mxu0 %v2053
    %2625 = vmatpush1.bf16.msra.mxu0 %v2052
    %2626 = vmatprep.subr.bf16.mxu0 %v2045
    %2627 = vmatpush1.bf16.msra.mxu0 %v2044
    %2628 = vmatprep.subr.bf16.mxu0 %v2037
    %2629 = vmatpush1.bf16.msra.mxu0 %v2036
    %2630 = vmatprep.subr.bf16.mxu0 %v2029
    %2631 = vmatpush1.bf16.msra.mxu0 %v2028
    %2632 = vmatprep.subr.bf16.mxu0 %v2021
    %2633 = vmatpush1.bf16.msra.mxu0 %v2020
    %2634 = vmatprep.subr.bf16.mxu0 %v2013
    %2635 = vmatpush1.bf16.msra.mxu0 %v2012
    %2636 = vmatprep.subr.bf16.mxu0 %v2005
    %2637 = vmatpush1.bf16.msra.mxu0 %v2004
    %2638 = vmatprep.subr.bf16.mxu0 %v2125
    %2639 = vmatpush2.bf16.msra.mxu0 %v2124
    %2640 = vmatprep.subr.bf16.mxu0 %v2117
    %2641 = vmatpush2.bf16.msra.mxu0 %v2116
    %2642 = vmatprep.subr.bf16.mxu0 %v2109
    %2643 = vmatpush2.bf16.msra.mxu0 %v2108
    %2644 = vmatprep.subr.bf16.mxu0 %v2101
    %2645 = vmatpush2.bf16.msra.mxu0 %v2100
    %2646 = vmatprep.subr.bf16.mxu0 %v2093
    %2647 = vmatpush2.bf16.msra.mxu0 %v2092
    %2648 = vmatprep.subr.bf16.mxu0 %v2085
    %2649 = vmatpush2.bf16.msra.mxu0 %v2084
    %2650 = vmatprep.subr.bf16.mxu0 %v2077
    %2651 = vmatpush2.bf16.msra.mxu0 %v2076
    %2652 = vmatprep.subr.bf16.mxu0 %v2069
    %2653 = vmatpush2.bf16.msra.mxu0 %v2068
    %2654 = vmatprep.mubr.bf16.mxu0 %v136
    %2655 = vmatmul.mubr.bf16.gmra.mxu0 %v135
    %v2656 = vpop.f32.mrf.mxu0
    %v2657 = vadd.f32 %v2614, %v2656
    %v2658 = vpop.f32.mrf.mxu0
    %v2659 = vadd.f32 %v2616, %v2658
    %v2660 = vpop.f32.mrf.mxu0
    %v2661 = vadd.f32 %v2618, %v2660
    %v2662 = vpop.f32.mrf.mxu0
    %v2663 = vadd.f32 %v2620, %v2662
    %2664 = vdwg.mxu0
    %2665 = vmatprep.subr.bf16.mxu0 0
    %2666 = vmatpush1.bf16.msra.mxu0 0
    %2667 = vmatprep.subr.bf16.mxu0 0
    %2668 = vmatpush1.bf16.msra.mxu0 0
    %2669 = vmatprep.subr.bf16.mxu0 0
    %2670 = vmatpush1.bf16.msra.mxu0 0
    %2671 = vmatprep.subr.bf16.mxu0 0
    %2672 = vmatpush1.bf16.msra.mxu0 0
    %2673 = vmatprep.subr.bf16.mxu0 0
    %2674 = vmatpush1.bf16.msra.mxu0 0
    %2675 = vmatprep.subr.bf16.mxu0 0
    %2676 = vmatpush1.bf16.msra.mxu0 0
    %2677 = vmatprep.subr.bf16.mxu0 0
    %2678 = vmatpush1.bf16.msra.mxu0 0
    %2679 = vmatprep.subr.bf16.mxu0 %v2133
    %2680 = vmatpush1.bf16.msra.mxu0 %v2132
    %2681 = vmatprep.subr.bf16.mxu0 0
    %2682 = vmatpush2.bf16.msra.mxu0 0
    %2683 = vmatprep.subr.bf16.mxu0 0
    %2684 = vmatpush2.bf16.msra.mxu0 0
    %2685 = vmatprep.subr.bf16.mxu0 0
    %2686 = vmatpush2.bf16.msra.mxu0 0
    %2687 = vmatprep.subr.bf16.mxu0 0
    %2688 = vmatpush2.bf16.msra.mxu0 0
    %2689 = vmatprep.subr.bf16.mxu0 0
    %2690 = vmatpush2.bf16.msra.mxu0 0
    %2691 = vmatprep.subr.bf16.mxu0 0
    %2692 = vmatpush2.bf16.msra.mxu0 0
    %2693 = vmatprep.subr.bf16.mxu0 0
    %2694 = vmatpush2.bf16.msra.mxu0 0
    %2695 = vmatprep.subr.bf16.mxu0 0
    %2696 = vmatpush2.bf16.msra.mxu0 0
    %2697 = vmatprep.mubr.bf16.mxu0 0
    %2698 = vmatmul.mubr.bf16.gmra.mxu0 %v2534
    %v2699 = vpop.f32.mrf.mxu0
    %v2700 = vadd.f32 %v2657, %v2699
    %v2701 = vpop.f32.mrf.mxu0
    %v2702 = vadd.f32 %v2659, %v2701
    %v2703 = vpop.f32.mrf.mxu0
    %v2704 = vadd.f32 %v2661, %v2703
    %v2705 = vpop.f32.mrf.mxu0
    %v2706 = vadd.f32 %v2663, %v2705
    %2707 = vdwg.mxu0
    %2708 = vmatprep.subr.bf16.mxu0 %v1807
    %2709 = vmatpush1.bf16.msra.mxu0 %v1806
    %2710 = vmatprep.subr.bf16.mxu0 %v1799
    %2711 = vmatpush1.bf16.msra.mxu0 %v1798
    %2712 = vmatprep.subr.bf16.mxu0 %v1791
    %2713 = vmatpush1.bf16.msra.mxu0 %v1790
    %2714 = vmatprep.subr.bf16.mxu0 %v1783
    %2715 = vmatpush1.bf16.msra.mxu0 %v1782
    %2716 = vmatprep.subr.bf16.mxu0 %v1775
    %2717 = vmatpush1.bf16.msra.mxu0 %v1774
    %2718 = vmatprep.subr.bf16.mxu0 %v1767
    %2719 = vmatpush1.bf16.msra.mxu0 %v1766
    %2720 = vmatprep.subr.bf16.mxu0 %v1759
    %2721 = vmatpush1.bf16.msra.mxu0 %v1758
    %2722 = vmatprep.subr.bf16.mxu0 %v1751
    %2723 = vmatpush1.bf16.msra.mxu0 %v1750
    %2724 = vmatprep.subr.bf16.mxu0 %v1871
    %2725 = vmatpush2.bf16.msra.mxu0 %v1870
    %2726 = vmatprep.subr.bf16.mxu0 %v1863
    %2727 = vmatpush2.bf16.msra.mxu0 %v1862
    %2728 = vmatprep.subr.bf16.mxu0 %v1855
    %2729 = vmatpush2.bf16.msra.mxu0 %v1854
    %2730 = vmatprep.subr.bf16.mxu0 %v1847
    %2731 = vmatpush2.bf16.msra.mxu0 %v1846
    %2732 = vmatprep.subr.bf16.mxu0 %v1839
    %2733 = vmatpush2.bf16.msra.mxu0 %v1838
    %2734 = vmatprep.subr.bf16.mxu0 %v1831
    %2735 = vmatpush2.bf16.msra.mxu0 %v1830
    %2736 = vmatprep.subr.bf16.mxu0 %v1823
    %2737 = vmatpush2.bf16.msra.mxu0 %v1822
    %2738 = vmatprep.subr.bf16.mxu0 %v1815
    %2739 = vmatpush2.bf16.msra.mxu0 %v1814
    %2740 = vmatprep.mubr.bf16.mxu0 %v132
    %2741 = vmatmul.mubr.bf16.gmra.mxu0 %v131
    %v2742 = vpop.f32.mrf.mxu0
    %v2743 = vadd.f32 %v543, %v2742
    %v2744 = vpop.f32.mrf.mxu0
    %v2745 = vadd.f32 %v547, %v2744
    %v2746 = vpop.f32.mrf.mxu0
    %v2747 = vadd.f32 %v543, %v2746
    %v2748 = vpop.f32.mrf.mxu0
    %v2749 = vadd.f32 %v547, %v2748
    %2750 = vdwg.mxu0
    %2751 = vmatprep.subr.bf16.mxu0 %v1935
    %2752 = vmatpush1.bf16.msra.mxu0 %v1934
    %2753 = vmatprep.subr.bf16.mxu0 %v1927
    %2754 = vmatpush1.bf16.msra.mxu0 %v1926
    %2755 = vmatprep.subr.bf16.mxu0 %v1919
    %2756 = vmatpush1.bf16.msra.mxu0 %v1918
    %2757 = vmatprep.subr.bf16.mxu0 %v1911
    %2758 = vmatpush1.bf16.msra.mxu0 %v1910
    %2759 = vmatprep.subr.bf16.mxu0 %v1903
    %2760 = vmatpush1.bf16.msra.mxu0 %v1902
    %2761 = vmatprep.subr.bf16.mxu0 %v1895
    %2762 = vmatpush1.bf16.msra.mxu0 %v1894
    %2763 = vmatprep.subr.bf16.mxu0 %v1887
    %2764 = vmatpush1.bf16.msra.mxu0 %v1886
    %2765 = vmatprep.subr.bf16.mxu0 %v1879
    %2766 = vmatpush1.bf16.msra.mxu0 %v1878
    %2767 = vmatprep.subr.bf16.mxu0 %v1999
    %2768 = vmatpush2.bf16.msra.mxu0 %v1998
    %2769 = vmatprep.subr.bf16.mxu0 %v1991
    %2770 = vmatpush2.bf16.msra.mxu0 %v1990
    %2771 = vmatprep.subr.bf16.mxu0 %v1983
    %2772 = vmatpush2.bf16.msra.mxu0 %v1982
    %2773 = vmatprep.subr.bf16.mxu0 %v1975
    %2774 = vmatpush2.bf16.msra.mxu0 %v1974
    %2775 = vmatprep.subr.bf16.mxu0 %v1967
    %2776 = vmatpush2.bf16.msra.mxu0 %v1966
    %2777 = vmatprep.subr.bf16.mxu0 %v1959
    %2778 = vmatpush2.bf16.msra.mxu0 %v1958
    %2779 = vmatprep.subr.bf16.mxu0 %v1951
    %2780 = vmatpush2.bf16.msra.mxu0 %v1950
    %2781 = vmatprep.subr.bf16.mxu0 %v1943
    %2782 = vmatpush2.bf16.msra.mxu0 %v1942
    %2783 = vmatprep.mubr.bf16.mxu0 %v134
    %2784 = vmatmul.mubr.bf16.gmra.mxu0 %v133
    %v2785 = vpop.f32.mrf.mxu0
    %v2786 = vadd.f32 %v2743, %v2785
    %v2787 = vpop.f32.mrf.mxu0
    %v2788 = vadd.f32 %v2745, %v2787
    %v2789 = vpop.f32.mrf.mxu0
    %v2790 = vadd.f32 %v2747, %v2789
    %v2791 = vpop.f32.mrf.mxu0
    %v2792 = vadd.f32 %v2749, %v2791
    %2793 = vdwg.mxu0
    %2794 = vmatprep.subr.bf16.mxu0 %v2063
    %2795 = vmatpush1.bf16.msra.mxu0 %v2062
    %2796 = vmatprep.subr.bf16.mxu0 %v2055
    %2797 = vmatpush1.bf16.msra.mxu0 %v2054
    %2798 = vmatprep.subr.bf16.mxu0 %v2047
    %2799 = vmatpush1.bf16.msra.mxu0 %v2046
    %2800 = vmatprep.subr.bf16.mxu0 %v2039
    %2801 = vmatpush1.bf16.msra.mxu0 %v2038
    %2802 = vmatprep.subr.bf16.mxu0 %v2031
    %2803 = vmatpush1.bf16.msra.mxu0 %v2030
    %2804 = vmatprep.subr.bf16.mxu0 %v2023
    %2805 = vmatpush1.bf16.msra.mxu0 %v2022
    %2806 = vmatprep.subr.bf16.mxu0 %v2015
    %2807 = vmatpush1.bf16.msra.mxu0 %v2014
    %2808 = vmatprep.subr.bf16.mxu0 %v2007
    %2809 = vmatpush1.bf16.msra.mxu0 %v2006
    %2810 = vmatprep.subr.bf16.mxu0 %v2127
    %2811 = vmatpush2.bf16.msra.mxu0 %v2126
    %2812 = vmatprep.subr.bf16.mxu0 %v2119
    %2813 = vmatpush2.bf16.msra.mxu0 %v2118
    %2814 = vmatprep.subr.bf16.mxu0 %v2111
    %2815 = vmatpush2.bf16.msra.mxu0 %v2110
    %2816 = vmatprep.subr.bf16.mxu0 %v2103
    %2817 = vmatpush2.bf16.msra.mxu0 %v2102
    %2818 = vmatprep.subr.bf16.mxu0 %v2095
    %2819 = vmatpush2.bf16.msra.mxu0 %v2094
    %2820 = vmatprep.subr.bf16.mxu0 %v2087
    %2821 = vmatpush2.bf16.msra.mxu0 %v2086
    %2822 = vmatprep.subr.bf16.mxu0 %v2079
    %2823 = vmatpush2.bf16.msra.mxu0 %v2078
    %2824 = vmatprep.subr.bf16.mxu0 %v2071
    %2825 = vmatpush2.bf16.msra.mxu0 %v2070
    %2826 = vmatprep.mubr.bf16.mxu0 %v136
    %2827 = vmatmul.mubr.bf16.gmra.mxu0 %v135
    %v2828 = vpop.f32.mrf.mxu0
    %v2829 = vadd.f32 %v2786, %v2828
    %v2830 = vpop.f32.mrf.mxu0
    %v2831 = vadd.f32 %v2788, %v2830
    %v2832 = vpop.f32.mrf.mxu0
    %v2833 = vadd.f32 %v2790, %v2832
    %v2834 = vpop.f32.mrf.mxu0
    %v2835 = vadd.f32 %v2792, %v2834
    %2836 = vdwg.mxu0
    %2837 = vmatprep.subr.bf16.mxu0 0
    %2838 = vmatpush1.bf16.msra.mxu0 0
    %2839 = vmatprep.subr.bf16.mxu0 0
    %2840 = vmatpush1.bf16.msra.mxu0 0
    %2841 = vmatprep.subr.bf16.mxu0 0
    %2842 = vmatpush1.bf16.msra.mxu0 0
    %2843 = vmatprep.subr.bf16.mxu0 0
    %2844 = vmatpush1.bf16.msra.mxu0 0
    %2845 = vmatprep.subr.bf16.mxu0 0
    %2846 = vmatpush1.bf16.msra.mxu0 0
    %2847 = vmatprep.subr.bf16.mxu0 0
    %2848 = vmatpush1.bf16.msra.mxu0 0
    %2849 = vmatprep.subr.bf16.mxu0 0
    %2850 = vmatpush1.bf16.msra.mxu0 0
    %2851 = vmatprep.subr.bf16.mxu0 %v2135
    %2852 = vmatpush1.bf16.msra.mxu0 %v2134
    %2853 = vmatprep.subr.bf16.mxu0 0
    %2854 = vmatpush2.bf16.msra.mxu0 0
    %2855 = vmatprep.subr.bf16.mxu0 0
    %2856 = vmatpush2.bf16.msra.mxu0 0
    %2857 = vmatprep.subr.bf16.mxu0 0
    %2858 = vmatpush2.bf16.msra.mxu0 0
    %2859 = vmatprep.subr.bf16.mxu0 0
    %2860 = vmatpush2.bf16.msra.mxu0 0
    %2861 = vmatprep.subr.bf16.mxu0 0
    %2862 = vmatpush2.bf16.msra.mxu0 0
    %2863 = vmatprep.subr.bf16.mxu0 0
    %2864 = vmatpush2.bf16.msra.mxu0 0
    %2865 = vmatprep.subr.bf16.mxu0 0
    %2866 = vmatpush2.bf16.msra.mxu0 0
    %2867 = vmatprep.subr.bf16.mxu0 0
    %2868 = vmatpush2.bf16.msra.mxu0 0
    %2869 = vmatprep.mubr.bf16.mxu0 0
    %2870 = vmatmul.mubr.bf16.gmra.mxu0 %v2534
    %v2871 = vpop.f32.mrf.mxu0
    %v2872 = vadd.f32 %v2829, %v2871
    %v2873 = vpop.f32.mrf.mxu0
    %v2874 = vadd.f32 %v2831, %v2873
    %v2875 = vpop.f32.mrf.mxu0
    %v2876 = vadd.f32 %v2833, %v2875
    %v2877 = vpop.f32.mrf.mxu0
    %v2878 = vadd.f32 %v2835, %v2877
    %2879 = vdwg.mxu0
    %2880 = vmatprep.subr.bf16.mxu0 %v1809
    %2881 = vmatpush1.bf16.msra.mxu0 %v1808
    %2882 = vmatprep.subr.bf16.mxu0 %v1801
    %2883 = vmatpush1.bf16.msra.mxu0 %v1800
    %2884 = vmatprep.subr.bf16.mxu0 %v1793
    %2885 = vmatpush1.bf16.msra.mxu0 %v1792
    %2886 = vmatprep.subr.bf16.mxu0 %v1785
    %2887 = vmatpush1.bf16.msra.mxu0 %v1784
    %2888 = vmatprep.subr.bf16.mxu0 %v1777
    %2889 = vmatpush1.bf16.msra.mxu0 %v1776
    %2890 = vmatprep.subr.bf16.mxu0 %v1769
    %2891 = vmatpush1.bf16.msra.mxu0 %v1768
    %2892 = vmatprep.subr.bf16.mxu0 %v1761
    %2893 = vmatpush1.bf16.msra.mxu0 %v1760
    %2894 = vmatprep.subr.bf16.mxu0 %v1753
    %2895 = vmatpush1.bf16.msra.mxu0 %v1752
    %2896 = vmatprep.subr.bf16.mxu0 %v1873
    %2897 = vmatpush2.bf16.msra.mxu0 %v1872
    %2898 = vmatprep.subr.bf16.mxu0 %v1865
    %2899 = vmatpush2.bf16.msra.mxu0 %v1864
    %2900 = vmatprep.subr.bf16.mxu0 %v1857
    %2901 = vmatpush2.bf16.msra.mxu0 %v1856
    %2902 = vmatprep.subr.bf16.mxu0 %v1849
    %2903 = vmatpush2.bf16.msra.mxu0 %v1848
    %2904 = vmatprep.subr.bf16.mxu0 %v1841
    %2905 = vmatpush2.bf16.msra.mxu0 %v1840
    %2906 = vmatprep.subr.bf16.mxu0 %v1833
    %2907 = vmatpush2.bf16.msra.mxu0 %v1832
    %2908 = vmatprep.subr.bf16.mxu0 %v1825
    %2909 = vmatpush2.bf16.msra.mxu0 %v1824
    %2910 = vmatprep.subr.bf16.mxu0 %v1817
    %2911 = vmatpush2.bf16.msra.mxu0 %v1816
    %2912 = vmatprep.mubr.bf16.mxu0 %v132
    %2913 = vmatmul.mubr.bf16.gmra.mxu0 %v131
    %v2914 = vpop.f32.mrf.mxu0
    %v2915 = vadd.f32 %v551, %v2914
    %v2916 = vpop.f32.mrf.mxu0
    %v2917 = vadd.f32 %v555, %v2916
    %v2918 = vpop.f32.mrf.mxu0
    %v2919 = vadd.f32 %v551, %v2918
    %v2920 = vpop.f32.mrf.mxu0
    %v2921 = vadd.f32 %v555, %v2920
    %2922 = vdwg.mxu0
    %2923 = vmatprep.subr.bf16.mxu0 %v1937
    %2924 = vmatpush1.bf16.msra.mxu0 %v1936
    %2925 = vmatprep.subr.bf16.mxu0 %v1929
    %2926 = vmatpush1.bf16.msra.mxu0 %v1928
    %2927 = vmatprep.subr.bf16.mxu0 %v1921
    %2928 = vmatpush1.bf16.msra.mxu0 %v1920
    %2929 = vmatprep.subr.bf16.mxu0 %v1913
    %2930 = vmatpush1.bf16.msra.mxu0 %v1912
    %2931 = vmatprep.subr.bf16.mxu0 %v1905
    %2932 = vmatpush1.bf16.msra.mxu0 %v1904
    %2933 = vmatprep.subr.bf16.mxu0 %v1897
    %2934 = vmatpush1.bf16.msra.mxu0 %v1896
    %2935 = vmatprep.subr.bf16.mxu0 %v1889
    %2936 = vmatpush1.bf16.msra.mxu0 %v1888
    %2937 = vmatprep.subr.bf16.mxu0 %v1881
    %2938 = vmatpush1.bf16.msra.mxu0 %v1880
    %2939 = vmatprep.subr.bf16.mxu0 %v2001
    %2940 = vmatpush2.bf16.msra.mxu0 %v2000
    %2941 = vmatprep.subr.bf16.mxu0 %v1993
    %2942 = vmatpush2.bf16.msra.mxu0 %v1992
    %2943 = vmatprep.subr.bf16.mxu0 %v1985
    %2944 = vmatpush2.bf16.msra.mxu0 %v1984
    %2945 = vmatprep.subr.bf16.mxu0 %v1977
    %2946 = vmatpush2.bf16.msra.mxu0 %v1976
    %2947 = vmatprep.subr.bf16.mxu0 %v1969
    %2948 = vmatpush2.bf16.msra.mxu0 %v1968
    %2949 = vmatprep.subr.bf16.mxu0 %v1961
    %2950 = vmatpush2.bf16.msra.mxu0 %v1960
    %2951 = vmatprep.subr.bf16.mxu0 %v1953
    %2952 = vmatpush2.bf16.msra.mxu0 %v1952
    %2953 = vmatprep.subr.bf16.mxu0 %v1945
    %2954 = vmatpush2.bf16.msra.mxu0 %v1944
    %2955 = vmatprep.mubr.bf16.mxu0 %v134
    %2956 = vmatmul.mubr.bf16.gmra.mxu0 %v133
    %v2957 = vpop.f32.mrf.mxu0
    %v2958 = vadd.f32 %v2915, %v2957
    %v2959 = vpop.f32.mrf.mxu0
    %v2960 = vadd.f32 %v2917, %v2959
    %v2961 = vpop.f32.mrf.mxu0
    %v2962 = vadd.f32 %v2919, %v2961
    %v2963 = vpop.f32.mrf.mxu0
    %v2964 = vadd.f32 %v2921, %v2963
    %2965 = vdwg.mxu0
    %2966 = vmatprep.subr.bf16.mxu0 %v2065
    %2967 = vmatpush1.bf16.msra.mxu0 %v2064
    %2968 = vmatprep.subr.bf16.mxu0 %v2057
    %2969 = vmatpush1.bf16.msra.mxu0 %v2056
    %2970 = vmatprep.subr.bf16.mxu0 %v2049
    %2971 = vmatpush1.bf16.msra.mxu0 %v2048
    %2972 = vmatprep.subr.bf16.mxu0 %v2041
    %2973 = vmatpush1.bf16.msra.mxu0 %v2040
    %2974 = vmatprep.subr.bf16.mxu0 %v2033
    %2975 = vmatpush1.bf16.msra.mxu0 %v2032
    %2976 = vmatprep.subr.bf16.mxu0 %v2025
    %2977 = vmatpush1.bf16.msra.mxu0 %v2024
    %2978 = vmatprep.subr.bf16.mxu0 %v2017
    %2979 = vmatpush1.bf16.msra.mxu0 %v2016
    %2980 = vmatprep.subr.bf16.mxu0 %v2009
    %2981 = vmatpush1.bf16.msra.mxu0 %v2008
    %2982 = vmatprep.subr.bf16.mxu0 %v2129
    %2983 = vmatpush2.bf16.msra.mxu0 %v2128
    %2984 = vmatprep.subr.bf16.mxu0 %v2121
    %2985 = vmatpush2.bf16.msra.mxu0 %v2120
    %2986 = vmatprep.subr.bf16.mxu0 %v2113
    %2987 = vmatpush2.bf16.msra.mxu0 %v2112
    %2988 = vmatprep.subr.bf16.mxu0 %v2105
    %2989 = vmatpush2.bf16.msra.mxu0 %v2104
    %2990 = vmatprep.subr.bf16.mxu0 %v2097
    %2991 = vmatpush2.bf16.msra.mxu0 %v2096
    %2992 = vmatprep.subr.bf16.mxu0 %v2089
    %2993 = vmatpush2.bf16.msra.mxu0 %v2088
    %2994 = vmatprep.subr.bf16.mxu0 %v2081
    %2995 = vmatpush2.bf16.msra.mxu0 %v2080
    %2996 = vmatprep.subr.bf16.mxu0 %v2073
    %2997 = vmatpush2.bf16.msra.mxu0 %v2072
    %2998 = vmatprep.mubr.bf16.mxu0 %v136
    %2999 = vmatmul.mubr.bf16.gmra.mxu0 %v135
    %v3000 = vpop.f32.mrf.mxu0
    %v3001 = vadd.f32 %v2958, %v3000
    %v3002 = vpop.f32.mrf.mxu0
    %v3003 = vadd.f32 %v2960, %v3002
    %v3004 = vpop.f32.mrf.mxu0
    %v3005 = vadd.f32 %v2962, %v3004
    %v3006 = vpop.f32.mrf.mxu0
    %v3007 = vadd.f32 %v2964, %v3006
    %3008 = vdwg.mxu0
    %3009 = vmatprep.subr.bf16.mxu0 0
    %3010 = vmatpush1.bf16.msra.mxu0 0
    %3011 = vmatprep.subr.bf16.mxu0 0
    %3012 = vmatpush1.bf16.msra.mxu0 0
    %3013 = vmatprep.subr.bf16.mxu0 0
    %3014 = vmatpush1.bf16.msra.mxu0 0
    %3015 = vmatprep.subr.bf16.mxu0 0
    %3016 = vmatpush1.bf16.msra.mxu0 0
    %3017 = vmatprep.subr.bf16.mxu0 0
    %3018 = vmatpush1.bf16.msra.mxu0 0
    %3019 = vmatprep.subr.bf16.mxu0 0
    %3020 = vmatpush1.bf16.msra.mxu0 0
    %3021 = vmatprep.subr.bf16.mxu0 0
    %3022 = vmatpush1.bf16.msra.mxu0 0
    %3023 = vmatprep.subr.bf16.mxu0 %v2137
    %3024 = vmatpush1.bf16.msra.mxu0 %v2136
    %3025 = vmatprep.subr.bf16.mxu0 0
    %3026 = vmatpush2.bf16.msra.mxu0 0
    %3027 = vmatprep.subr.bf16.mxu0 0
    %3028 = vmatpush2.bf16.msra.mxu0 0
    %3029 = vmatprep.subr.bf16.mxu0 0
    %3030 = vmatpush2.bf16.msra.mxu0 0
    %3031 = vmatprep.subr.bf16.mxu0 0
    %3032 = vmatpush2.bf16.msra.mxu0 0
    %3033 = vmatprep.subr.bf16.mxu0 0
    %3034 = vmatpush2.bf16.msra.mxu0 0
    %3035 = vmatprep.subr.bf16.mxu0 0
    %3036 = vmatpush2.bf16.msra.mxu0 0
    %3037 = vmatprep.subr.bf16.mxu0 0
    %3038 = vmatpush2.bf16.msra.mxu0 0
    %3039 = vmatprep.subr.bf16.mxu0 0
    %3040 = vmatpush2.bf16.msra.mxu0 0
    %3041 = vmatprep.mubr.bf16.mxu0 0
    %3042 = vmatmul.mubr.bf16.gmra.mxu0 %v2534
    %v3043 = vpop.f32.mrf.mxu0
    %v3044 = vadd.f32 %v3001, %v3043
    %v3045 = vpop.f32.mrf.mxu0
    %v3046 = vadd.f32 %v3003, %v3045
    %v3047 = vpop.f32.mrf.mxu0
    %v3048 = vadd.f32 %v3005, %v3047
    %v3049 = vpop.f32.mrf.mxu0
    %v3050 = vadd.f32 %v3007, %v3049
    %3051 = vdwg.mxu0
    %3052 = vmatprep.subr.bf16.mxu0 %v1811
    %3053 = vmatpush1.bf16.msra.mxu0 %v1810
    %3054 = vmatprep.subr.bf16.mxu0 %v1803
    %3055 = vmatpush1.bf16.msra.mxu0 %v1802
    %3056 = vmatprep.subr.bf16.mxu0 %v1795
    %3057 = vmatpush1.bf16.msra.mxu0 %v1794
    %3058 = vmatprep.subr.bf16.mxu0 %v1787
    %3059 = vmatpush1.bf16.msra.mxu0 %v1786
    %3060 = vmatprep.subr.bf16.mxu0 %v1779
    %3061 = vmatpush1.bf16.msra.mxu0 %v1778
    %3062 = vmatprep.subr.bf16.mxu0 %v1771
    %3063 = vmatpush1.bf16.msra.mxu0 %v1770
    %3064 = vmatprep.subr.bf16.mxu0 %v1763
    %3065 = vmatpush1.bf16.msra.mxu0 %v1762
    %3066 = vmatprep.subr.bf16.mxu0 %v1755
    %3067 = vmatpush1.bf16.msra.mxu0 %v1754
    %3068 = vmatprep.subr.bf16.mxu0 %v1875
    %3069 = vmatpush2.bf16.msra.mxu0 %v1874
    %3070 = vmatprep.subr.bf16.mxu0 %v1867
    %3071 = vmatpush2.bf16.msra.mxu0 %v1866
    %3072 = vmatprep.subr.bf16.mxu0 %v1859
    %3073 = vmatpush2.bf16.msra.mxu0 %v1858
    %3074 = vmatprep.subr.bf16.mxu0 %v1851
    %3075 = vmatpush2.bf16.msra.mxu0 %v1850
    %3076 = vmatprep.subr.bf16.mxu0 %v1843
    %3077 = vmatpush2.bf16.msra.mxu0 %v1842
    %3078 = vmatprep.subr.bf16.mxu0 %v1835
    %3079 = vmatpush2.bf16.msra.mxu0 %v1834
    %3080 = vmatprep.subr.bf16.mxu0 %v1827
    %3081 = vmatpush2.bf16.msra.mxu0 %v1826
    %3082 = vmatprep.subr.bf16.mxu0 %v1819
    %3083 = vmatpush2.bf16.msra.mxu0 %v1818
    %3084 = vmatprep.mubr.bf16.mxu0 %v132
    %3085 = vmatmul.mubr.bf16.gmra.mxu0 %v131
    %v3086 = vpop.f32.mrf.mxu0
    %v3087 = vadd.f32 %v559, %v3086
    %v3088 = vpop.f32.mrf.mxu0
    %v3089 = vadd.f32 %v563, %v3088
    %v3090 = vpop.f32.mrf.mxu0
    %v3091 = vadd.f32 %v559, %v3090
    %v3092 = vpop.f32.mrf.mxu0
    %v3093 = vadd.f32 %v563, %v3092
    %3094 = vdwg.mxu0
    %3095 = vmatprep.subr.bf16.mxu0 %v1939
    %3096 = vmatpush1.bf16.msra.mxu0 %v1938
    %3097 = vmatprep.subr.bf16.mxu0 %v1931
    %3098 = vmatpush1.bf16.msra.mxu0 %v1930
    %3099 = vmatprep.subr.bf16.mxu0 %v1923
    %3100 = vmatpush1.bf16.msra.mxu0 %v1922
    %3101 = vmatprep.subr.bf16.mxu0 %v1915
    %3102 = vmatpush1.bf16.msra.mxu0 %v1914
    %3103 = vmatprep.subr.bf16.mxu0 %v1907
    %3104 = vmatpush1.bf16.msra.mxu0 %v1906
    %3105 = vmatprep.subr.bf16.mxu0 %v1899
    %3106 = vmatpush1.bf16.msra.mxu0 %v1898
    %3107 = vmatprep.subr.bf16.mxu0 %v1891
    %3108 = vmatpush1.bf16.msra.mxu0 %v1890
    %3109 = vmatprep.subr.bf16.mxu0 %v1883
    %3110 = vmatpush1.bf16.msra.mxu0 %v1882
    %3111 = vmatprep.subr.bf16.mxu0 %v2003
    %3112 = vmatpush2.bf16.msra.mxu0 %v2002
    %3113 = vmatprep.subr.bf16.mxu0 %v1995
    %3114 = vmatpush2.bf16.msra.mxu0 %v1994
    %3115 = vmatprep.subr.bf16.mxu0 %v1987
    %3116 = vmatpush2.bf16.msra.mxu0 %v1986
    %3117 = vmatprep.subr.bf16.mxu0 %v1979
    %3118 = vmatpush2.bf16.msra.mxu0 %v1978
    %3119 = vmatprep.subr.bf16.mxu0 %v1971
    %3120 = vmatpush2.bf16.msra.mxu0 %v1970
    %3121 = vmatprep.subr.bf16.mxu0 %v1963
    %3122 = vmatpush2.bf16.msra.mxu0 %v1962
    %3123 = vmatprep.subr.bf16.mxu0 %v1955
    %3124 = vmatpush2.bf16.msra.mxu0 %v1954
    %3125 = vmatprep.subr.bf16.mxu0 %v1947
    %3126 = vmatpush2.bf16.msra.mxu0 %v1946
    %3127 = vmatprep.mubr.bf16.mxu0 %v134
    %3128 = vmatmul.mubr.bf16.gmra.mxu0 %v133
    %v3129 = vpop.f32.mrf.mxu0
    %v3130 = vadd.f32 %v3087, %v3129
    %v3131 = vpop.f32.mrf.mxu0
    %v3132 = vadd.f32 %v3089, %v3131
    %v3133 = vpop.f32.mrf.mxu0
    %v3134 = vadd.f32 %v3091, %v3133
    %v3135 = vpop.f32.mrf.mxu0
    %v3136 = vadd.f32 %v3093, %v3135
    %3137 = vdwg.mxu0
    %3138 = vmatprep.subr.bf16.mxu0 %v2067
    %3139 = vmatpush1.bf16.msra.mxu0 %v2066
    %3140 = vmatprep.subr.bf16.mxu0 %v2059
    %3141 = vmatpush1.bf16.msra.mxu0 %v2058
    %3142 = vmatprep.subr.bf16.mxu0 %v2051
    %3143 = vmatpush1.bf16.msra.mxu0 %v2050
    %3144 = vmatprep.subr.bf16.mxu0 %v2043
    %3145 = vmatpush1.bf16.msra.mxu0 %v2042
    %3146 = vmatprep.subr.bf16.mxu0 %v2035
    %3147 = vmatpush1.bf16.msra.mxu0 %v2034
    %3148 = vmatprep.subr.bf16.mxu0 %v2027
    %3149 = vmatpush1.bf16.msra.mxu0 %v2026
    %3150 = vmatprep.subr.bf16.mxu0 %v2019
    %3151 = vmatpush1.bf16.msra.mxu0 %v2018
    %3152 = vmatprep.subr.bf16.mxu0 %v2011
    %3153 = vmatpush1.bf16.msra.mxu0 %v2010
    %3154 = vmatprep.subr.bf16.mxu0 %v2131
    %3155 = vmatpush2.bf16.msra.mxu0 %v2130
    %3156 = vmatprep.subr.bf16.mxu0 %v2123
    %3157 = vmatpush2.bf16.msra.mxu0 %v2122
    %3158 = vmatprep.subr.bf16.mxu0 %v2115
    %3159 = vmatpush2.bf16.msra.mxu0 %v2114
    %3160 = vmatprep.subr.bf16.mxu0 %v2107
    %3161 = vmatpush2.bf16.msra.mxu0 %v2106
    %3162 = vmatprep.subr.bf16.mxu0 %v2099
    %3163 = vmatpush2.bf16.msra.mxu0 %v2098
    %3164 = vmatprep.subr.bf16.mxu0 %v2091
    %3165 = vmatpush2.bf16.msra.mxu0 %v2090
    %3166 = vmatprep.subr.bf16.mxu0 %v2083
    %3167 = vmatpush2.bf16.msra.mxu0 %v2082
    %3168 = vmatprep.subr.bf16.mxu0 %v2075
    %3169 = vmatpush2.bf16.msra.mxu0 %v2074
    %3170 = vmatprep.mubr.bf16.mxu0 %v136
    %3171 = vmatmul.mubr.bf16.gmra.mxu0 %v135
    %v3172 = vpop.f32.mrf.mxu0
    %v3173 = vadd.f32 %v3130, %v3172
    %v3174 = vpop.f32.mrf.mxu0
    %v3175 = vadd.f32 %v3132, %v3174
    %v3176 = vpop.f32.mrf.mxu0
    %v3177 = vadd.f32 %v3134, %v3176
    %v3178 = vpop.f32.mrf.mxu0
    %v3179 = vadd.f32 %v3136, %v3178
    %3180 = vdwg.mxu0
    %3181 = vmatprep.subr.bf16.mxu0 0
    %3182 = vmatpush1.bf16.msra.mxu0 0
    %3183 = vmatprep.subr.bf16.mxu0 0
    %3184 = vmatpush1.bf16.msra.mxu0 0
    %3185 = vmatprep.subr.bf16.mxu0 0
    %3186 = vmatpush1.bf16.msra.mxu0 0
    %3187 = vmatprep.subr.bf16.mxu0 0
    %3188 = vmatpush1.bf16.msra.mxu0 0
    %3189 = vmatprep.subr.bf16.mxu0 0
    %3190 = vmatpush1.bf16.msra.mxu0 0
    %3191 = vmatprep.subr.bf16.mxu0 0
    %3192 = vmatpush1.bf16.msra.mxu0 0
    %3193 = vmatprep.subr.bf16.mxu0 0
    %3194 = vmatpush1.bf16.msra.mxu0 0
    %3195 = vmatprep.subr.bf16.mxu0 %v2139
    %3196 = vmatpush1.bf16.msra.mxu0 %v2138
    %3197 = vmatprep.subr.bf16.mxu0 0
    %3198 = vmatpush2.bf16.msra.mxu0 0
    %3199 = vmatprep.subr.bf16.mxu0 0
    %3200 = vmatpush2.bf16.msra.mxu0 0
    %3201 = vmatprep.subr.bf16.mxu0 0
    %3202 = vmatpush2.bf16.msra.mxu0 0
    %3203 = vmatprep.subr.bf16.mxu0 0
    %3204 = vmatpush2.bf16.msra.mxu0 0
    %3205 = vmatprep.subr.bf16.mxu0 0
    %3206 = vmatpush2.bf16.msra.mxu0 0
    %3207 = vmatprep.subr.bf16.mxu0 0
    %3208 = vmatpush2.bf16.msra.mxu0 0
    %3209 = vmatprep.subr.bf16.mxu0 0
    %3210 = vmatpush2.bf16.msra.mxu0 0
    %3211 = vmatprep.subr.bf16.mxu0 0
    %3212 = vmatpush2.bf16.msra.mxu0 0
    %3213 = vmatprep.mubr.bf16.mxu0 0
    %3214 = vmatmul.mubr.bf16.gmra.mxu0 %v2534
    %v3215 = vpop.f32.mrf.mxu0
    %v3216 = vadd.f32 %v3173, %v3215
    %v3217 = vpop.f32.mrf.mxu0
    %v3218 = vadd.f32 %v3175, %v3217
    %v3219 = vpop.f32.mrf.mxu0
    %v3220 = vadd.f32 %v3177, %v3219
    %v3221 = vpop.f32.mrf.mxu0
    %v3222 = vadd.f32 %v3179, %v3221
    %3223 = vdwg.mxu0
    %v3224 = vmax.f32 %v2700, 0.0
    %v3225 = vmax.f32 %v2702, 0.0
    %v3226 = vmax.f32 %v2872, 0.0
    %v3227 = vmax.f32 %v2874, 0.0
    %v3228 = vmax.f32 %v3044, 0.0
    %v3229 = vmax.f32 %v3046, 0.0
    %v3230 = vmax.f32 %v3216, 0.0
    %v3231 = vmax.f32 %v3218, 0.0
    %v3232 = vmax.f32 %v2704, 0.0
    %v3233 = vmax.f32 %v2706, 0.0
    %v3234 = vmax.f32 %v2876, 0.0
    %v3235 = vmax.f32 %v2878, 0.0
    %v3236 = vmax.f32 %v3048, 0.0
    %v3237 = vmax.f32 %v3050, 0.0
    %v3238 = vmax.f32 %v3220, 0.0
    %v3239 = vmax.f32 %v3222, 0.0
    %v3240 = vpack.c.bf16 %v3232, %v3224
    %v3241 = vpack.c.bf16 %v3233, %v3225
    %v3242 = vpack.c.bf16 %v3234, %v3226
    %v3243 = vpack.c.bf16 %v3235, %v3227
    %v3244 = vpack.c.bf16 %v3236, %v3228
    %v3245 = vpack.c.bf16 %v3237, %v3229
    %v3246 = vpack.c.bf16 %v3238, %v3230
    %v3247 = vpack.c.bf16 %v3239, %v3231
    %v3248 = vld [vmem:[#allocation8] sm:$0xff]
    %v3249 = vld [vmem:[#allocation8 + $0x8] sm:$0xff]
    %v3250 = vld [vmem:[#allocation8 + $0x10] sm:$0xff]
    %v3251 = vld [vmem:[#allocation8 + $0x18] sm:$0xff]
    %v3252 = vld [vmem:[#allocation8 + $0x20] sm:$0xff]
    %v3253 = vld [vmem:[#allocation8 + $0x28] sm:$0xff]
    %v3254 = vld [vmem:[#allocation8 + $0x30] sm:$0xff]
    %v3255 = vld [vmem:[#allocation8 + $0x38] sm:$0xff]
    %v3256 = vld [vmem:[#allocation8 + $0x40] sm:$0xff]
    %v3257 = vld [vmem:[#allocation8 + $0x48] sm:$0xff]
    %v3258 = vld [vmem:[#allocation8 + $0x50] sm:$0xff]
    %v3259 = vld [vmem:[#allocation8 + $0x58] sm:$0xff]
    %v3260 = vld [vmem:[#allocation8 + $0x60] sm:$0xff]
    %v3261 = vld [vmem:[#allocation8 + $0x68] sm:$0xff]
    %v3262 = vld [vmem:[#allocation8 + $0x70] sm:$0xff]
    %v3263 = vld [vmem:[#allocation8 + $0x78] sm:$0xff]
    %v3264 = vld [vmem:[#allocation8 + $0x80] sm:$0xff]
    %v3265 = vld [vmem:[#allocation8 + $0x88] sm:$0xff]
    %v3266 = vld [vmem:[#allocation8 + $0x90] sm:$0xff]
    %v3267 = vld [vmem:[#allocation8 + $0x98] sm:$0xff]
    %v3268 = vld [vmem:[#allocation8 + $0xa0] sm:$0xff]
    %v3269 = vld [vmem:[#allocation8 + $0xa8] sm:$0xff]
    %v3270 = vld [vmem:[#allocation8 + $0xb0] sm:$0xff]
    %v3271 = vld [vmem:[#allocation8 + $0xb8] sm:$0xff]
    %v3272 = vld [vmem:[#allocation8 + $0xc0] sm:$0xff]
    %v3273 = vld [vmem:[#allocation8 + $0xc8] sm:$0xff]
    %v3274 = vld [vmem:[#allocation8 + $0xd0] sm:$0xff]
    %v3275 = vld [vmem:[#allocation8 + $0xd8] sm:$0xff]
    %v3276 = vld [vmem:[#allocation8 + $0xe0] sm:$0xff]
    %v3277 = vld [vmem:[#allocation8 + $0xe8] sm:$0xff]
    %v3278 = vld [vmem:[#allocation8 + $0xf0] sm:$0xff]
    %v3279 = vld [vmem:[#allocation8 + $0xf8] sm:$0xff]
    %v3280 = vld [vmem:[#allocation8 + $0x100] sm:$0xff]
    %v3281 = vld [vmem:[#allocation8 + $0x108] sm:$0xff]
    %v3282 = vld [vmem:[#allocation8 + $0x110] sm:$0xff]
    %v3283 = vld [vmem:[#allocation8 + $0x118] sm:$0xff]
    %v3284 = vld [vmem:[#allocation8 + $0x120] sm:$0xff]
    %v3285 = vld [vmem:[#allocation8 + $0x128] sm:$0xff]
    %v3286 = vld [vmem:[#allocation8 + $0x130] sm:$0xff]
    %v3287 = vld [vmem:[#allocation8 + $0x138] sm:$0xff]
    %v3288 = vld [vmem:[#allocation8 + $0x140] sm:$0xff]
    %v3289 = vld [vmem:[#allocation8 + $0x148] sm:$0xff]
    %v3290 = vld [vmem:[#allocation8 + $0x150] sm:$0xff]
    %v3291 = vld [vmem:[#allocation8 + $0x158] sm:$0xff]
    %v3292 = vld [vmem:[#allocation8 + $0x160] sm:$0xff]
    %v3293 = vld [vmem:[#allocation8 + $0x168] sm:$0xff]
    %v3294 = vld [vmem:[#allocation8 + $0x170] sm:$0xff]
    %v3295 = vld [vmem:[#allocation8 + $0x178] sm:$0xff]
    %v3296 = vld [vmem:[#allocation8 + $0x180] sm:$0xff]
    %v3297 = vld [vmem:[#allocation8 + $0x188] sm:$0xff]
    %v3298 = vld [vmem:[#allocation8 + $0x190] sm:$0xff]
    %v3299 = vld [vmem:[#allocation8 + $0x198] sm:$0xff]
    %v3300 = vld [vmem:[#allocation8 + $0x1a0] sm:$0xff]
    %v3301 = vld [vmem:[#allocation8 + $0x1a8] sm:$0xff]
    %v3302 = vld [vmem:[#allocation8 + $0x1b0] sm:$0xff]
    %v3303 = vld [vmem:[#allocation8 + $0x1b8] sm:$0xff]
    %v3304 = vld [vmem:[#allocation8 + $0x1c0] sm:$0xff]
    %v3305 = vld [vmem:[#allocation8 + $0x1c8] sm:$0xff]
    %v3306 = vld [vmem:[#allocation8 + $0x1d0] sm:$0xff]
    %v3307 = vld [vmem:[#allocation8 + $0x1d8] sm:$0xff]
    %v3308 = vld [vmem:[#allocation8 + $0x1e0] sm:$0xff]
    %v3309 = vld [vmem:[#allocation8 + $0x1e8] sm:$0xff]
    %v3310 = vld [vmem:[#allocation8 + $0x1f0] sm:$0xff]
    %v3311 = vld [vmem:[#allocation8 + $0x1f8] sm:$0xff]
    %v3312 = vld [vmem:[#allocation8 + $0x200] sm:$0xff]
    %v3313 = vld [vmem:[#allocation8 + $0x208] sm:$0xff]
    %v3314 = vld [vmem:[#allocation8 + $0x210] sm:$0xff]
    %v3315 = vld [vmem:[#allocation8 + $0x218] sm:$0xff]
    %v3316 = vld [vmem:[#allocation8 + $0x220] sm:$0xff]
    %v3317 = vld [vmem:[#allocation8 + $0x228] sm:$0xff]
    %v3318 = vld [vmem:[#allocation8 + $0x230] sm:$0xff]
    %v3319 = vld [vmem:[#allocation8 + $0x238] sm:$0xff]
    %v3320 = vld [vmem:[#allocation8 + $0x240] sm:$0xff]
    %v3321 = vld [vmem:[#allocation8 + $0x248] sm:$0xff]
    %v3322 = vld [vmem:[#allocation8 + $0x250] sm:$0xff]
    %v3323 = vld [vmem:[#allocation8 + $0x258] sm:$0xff]
    %v3324 = vld [vmem:[#allocation8 + $0x260] sm:$0xff]
    %v3325 = vld [vmem:[#allocation8 + $0x268] sm:$0xff]
    %v3326 = vld [vmem:[#allocation8 + $0x270] sm:$0xff]
    %v3327 = vld [vmem:[#allocation8 + $0x278] sm:$0xff]
    %v3328 = vld [vmem:[#allocation8 + $0x280] sm:$0xff]
    %v3329 = vld [vmem:[#allocation8 + $0x288] sm:$0xff]
    %v3330 = vld [vmem:[#allocation8 + $0x290] sm:$0xff]
    %v3331 = vld [vmem:[#allocation8 + $0x298] sm:$0xff]
    %v3332 = vld [vmem:[#allocation8 + $0x2a0] sm:$0xff]
    %v3333 = vld [vmem:[#allocation8 + $0x2a8] sm:$0xff]
    %v3334 = vld [vmem:[#allocation8 + $0x2b0] sm:$0xff]
    %v3335 = vld [vmem:[#allocation8 + $0x2b8] sm:$0xff]
    %v3336 = vld [vmem:[#allocation8 + $0x2c0] sm:$0xff]
    %v3337 = vld [vmem:[#allocation8 + $0x2c8] sm:$0xff]
    %v3338 = vld [vmem:[#allocation8 + $0x2d0] sm:$0xff]
    %v3339 = vld [vmem:[#allocation8 + $0x2d8] sm:$0xff]
    %v3340 = vld [vmem:[#allocation8 + $0x2e0] sm:$0xff]
    %v3341 = vld [vmem:[#allocation8 + $0x2e8] sm:$0xff]
    %v3342 = vld [vmem:[#allocation8 + $0x2f0] sm:$0xff]
    %v3343 = vld [vmem:[#allocation8 + $0x2f8] sm:$0xff]
    %v3344 = vld [vmem:[#allocation8 + $0x300] sm:$0xff]
    %v3345 = vld [vmem:[#allocation8 + $0x308] sm:$0xff]
    %v3346 = vld [vmem:[#allocation8 + $0x310] sm:$0xff]
    %v3347 = vld [vmem:[#allocation8 + $0x318] sm:$0xff]
    %v3348 = vld [vmem:[#allocation8 + $0x320] sm:$0xff]
    %v3349 = vld [vmem:[#allocation8 + $0x328] sm:$0xff]
    %v3350 = vld [vmem:[#allocation8 + $0x330] sm:$0xff]
    %v3351 = vld [vmem:[#allocation8 + $0x338] sm:$0xff]
    %v3352 = vld [vmem:[#allocation8 + $0x340] sm:$0xff]
    %v3353 = vld [vmem:[#allocation8 + $0x348] sm:$0xff]
    %v3354 = vld [vmem:[#allocation8 + $0x350] sm:$0xff]
    %v3355 = vld [vmem:[#allocation8 + $0x358] sm:$0xff]
    %v3356 = vld [vmem:[#allocation8 + $0x360] sm:$0xff]
    %v3357 = vld [vmem:[#allocation8 + $0x368] sm:$0xff]
    %v3358 = vld [vmem:[#allocation8 + $0x370] sm:$0xff]
    %v3359 = vld [vmem:[#allocation8 + $0x378] sm:$0xff]
    %v3360 = vld [vmem:[#allocation8 + $0x380] sm:$0xff]
    %v3361 = vld [vmem:[#allocation8 + $0x388] sm:$0xff]
    %v3362 = vld [vmem:[#allocation8 + $0x390] sm:$0xff]
    %v3363 = vld [vmem:[#allocation8 + $0x398] sm:$0xff]
    %v3364 = vld [vmem:[#allocation8 + $0x3a0] sm:$0xff]
    %v3365 = vld [vmem:[#allocation8 + $0x3a8] sm:$0xff]
    %v3366 = vld [vmem:[#allocation8 + $0x3b0] sm:$0xff]
    %v3367 = vld [vmem:[#allocation8 + $0x3b8] sm:$0xff]
    %v3368 = vld [vmem:[#allocation8 + $0x3c0] sm:$0xff]
    %v3369 = vld [vmem:[#allocation8 + $0x3c8] sm:$0xff]
    %v3370 = vld [vmem:[#allocation8 + $0x3d0] sm:$0xff]
    %v3371 = vld [vmem:[#allocation8 + $0x3d8] sm:$0xff]
    %v3372 = vld [vmem:[#allocation8 + $0x3e0] sm:$0xff]
    %v3373 = vld [vmem:[#allocation8 + $0x3e8] sm:$0xff]
    %v3374 = vld [vmem:[#allocation8 + $0x3f0] sm:$0xff]
    %v3375 = vld [vmem:[#allocation8 + $0x3f8] sm:$0xff]
    %v3376 = vld [vmem:[#allocation8 + $0x400] sm:$0xff]
    %v3377 = vld [vmem:[#allocation8 + $0x408] sm:$0xff]
    %v3378 = vld [vmem:[#allocation8 + $0x410] sm:$0xff]
    %v3379 = vld [vmem:[#allocation8 + $0x418] sm:$0xff]
    %v3380 = vld [vmem:[#allocation8 + $0x420] sm:$0xff]
    %v3381 = vld [vmem:[#allocation8 + $0x428] sm:$0xff]
    %v3382 = vld [vmem:[#allocation8 + $0x430] sm:$0xff]
    %v3383 = vld [vmem:[#allocation8 + $0x438] sm:$0xff]
    %v3384 = vld [vmem:[#allocation8 + $0x440] sm:$0xff]
    %v3385 = vld [vmem:[#allocation8 + $0x448] sm:$0xff]
    %v3386 = vld [vmem:[#allocation8 + $0x450] sm:$0xff]
    %v3387 = vld [vmem:[#allocation8 + $0x458] sm:$0xff]
    %v3388 = vld [vmem:[#allocation8 + $0x460] sm:$0xff]
    %v3389 = vld [vmem:[#allocation8 + $0x468] sm:$0xff]
    %v3390 = vld [vmem:[#allocation8 + $0x470] sm:$0xff]
    %v3391 = vld [vmem:[#allocation8 + $0x478] sm:$0xff]
    %v3392 = vld [vmem:[#allocation8 + $0x480] sm:$0xff]
    %v3393 = vld [vmem:[#allocation8 + $0x488] sm:$0xff]
    %v3394 = vld [vmem:[#allocation8 + $0x490] sm:$0xff]
    %v3395 = vld [vmem:[#allocation8 + $0x498] sm:$0xff]
    %v3396 = vld [vmem:[#allocation8 + $0x4a0] sm:$0xff]
    %v3397 = vld [vmem:[#allocation8 + $0x4a8] sm:$0xff]
    %v3398 = vld [vmem:[#allocation8 + $0x4b0] sm:$0xff]
    %v3399 = vld [vmem:[#allocation8 + $0x4b8] sm:$0xff]
    %v3400 = vld [vmem:[#allocation8 + $0x4c0] sm:$0xff]
    %v3401 = vld [vmem:[#allocation8 + $0x4c8] sm:$0xff]
    %v3402 = vld [vmem:[#allocation8 + $0x4d0] sm:$0xff]
    %v3403 = vld [vmem:[#allocation8 + $0x4d8] sm:$0xff]
    %v3404 = vld [vmem:[#allocation8 + $0x4e0] sm:$0xff]
    %v3405 = vld [vmem:[#allocation8 + $0x4e8] sm:$0xff]
    %v3406 = vld [vmem:[#allocation8 + $0x4f0] sm:$0xff]
    %v3407 = vld [vmem:[#allocation8 + $0x4f8] sm:$0xff]
    %v3408 = vld [vmem:[#allocation8 + $0x500] sm:$0xff]
    %v3409 = vld [vmem:[#allocation8 + $0x508] sm:$0xff]
    %v3410 = vld [vmem:[#allocation8 + $0x510] sm:$0xff]
    %v3411 = vld [vmem:[#allocation8 + $0x518] sm:$0xff]
    %v3412 = vld [vmem:[#allocation8 + $0x520] sm:$0xff]
    %v3413 = vld [vmem:[#allocation8 + $0x528] sm:$0xff]
    %v3414 = vld [vmem:[#allocation8 + $0x530] sm:$0xff]
    %v3415 = vld [vmem:[#allocation8 + $0x538] sm:$0xff]
    %v3416 = vld [vmem:[#allocation8 + $0x540] sm:$0xff]
    %v3417 = vld [vmem:[#allocation8 + $0x548] sm:$0xff]
    %v3418 = vld [vmem:[#allocation8 + $0x550] sm:$0xff]
    %v3419 = vld [vmem:[#allocation8 + $0x558] sm:$0xff]
    %v3420 = vld [vmem:[#allocation8 + $0x560] sm:$0xff]
    %v3421 = vld [vmem:[#allocation8 + $0x568] sm:$0xff]
    %v3422 = vld [vmem:[#allocation8 + $0x570] sm:$0xff]
    %v3423 = vld [vmem:[#allocation8 + $0x578] sm:$0xff]
    %v3424 = vld [vmem:[#allocation8 + $0x580] sm:$0xff]
    %v3425 = vld [vmem:[#allocation8 + $0x588] sm:$0xff]
    %v3426 = vld [vmem:[#allocation8 + $0x590] sm:$0xff]
    %v3427 = vld [vmem:[#allocation8 + $0x598] sm:$0xff]
    %v3428 = vld [vmem:[#allocation8 + $0x5a0] sm:$0xff]
    %v3429 = vld [vmem:[#allocation8 + $0x5a8] sm:$0xff]
    %v3430 = vld [vmem:[#allocation8 + $0x5b0] sm:$0xff]
    %v3431 = vld [vmem:[#allocation8 + $0x5b8] sm:$0xff]
    %v3432 = vld [vmem:[#allocation8 + $0x5c0] sm:$0xff]
    %v3433 = vld [vmem:[#allocation8 + $0x5c8] sm:$0xff]
    %v3434 = vld [vmem:[#allocation8 + $0x5d0] sm:$0xff]
    %v3435 = vld [vmem:[#allocation8 + $0x5d8] sm:$0xff]
    %v3436 = vld [vmem:[#allocation8 + $0x5e0] sm:$0xff]
    %v3437 = vld [vmem:[#allocation8 + $0x5e8] sm:$0xff]
    %v3438 = vld [vmem:[#allocation8 + $0x5f0] sm:$0xff]
    %v3439 = vld [vmem:[#allocation8 + $0x5f8] sm:$0xff]
    %v3440 = vld [vmem:[#allocation8 + $0x600] sm:$0xff]
    %v3441 = vld [vmem:[#allocation8 + $0x608] sm:$0xff]
    %v3442 = vld [vmem:[#allocation8 + $0x610] sm:$0xff]
    %v3443 = vld [vmem:[#allocation8 + $0x618] sm:$0xff]
    %v3444 = vld [vmem:[#allocation8 + $0x620] sm:$0xff]
    %v3445 = vld [vmem:[#allocation8 + $0x628] sm:$0xff]
    %v3446 = vld [vmem:[#allocation8 + $0x630] sm:$0xff]
    %v3447 = vld [vmem:[#allocation8 + $0x638] sm:$0xff]
    %v3448 = vld [vmem:[#allocation8 + $0x640] sm:$0xff]
    %v3449 = vld [vmem:[#allocation8 + $0x648] sm:$0xff]
    %v3450 = vld [vmem:[#allocation8 + $0x650] sm:$0xff]
    %v3451 = vld [vmem:[#allocation8 + $0x658] sm:$0xff]
    %v3452 = vld [vmem:[#allocation8 + $0x660] sm:$0xff]
    %v3453 = vld [vmem:[#allocation8 + $0x668] sm:$0xff]
    %v3454 = vld [vmem:[#allocation8 + $0x670] sm:$0xff]
    %v3455 = vld [vmem:[#allocation8 + $0x678] sm:$0xff]
    %v3456 = vld [vmem:[#allocation8 + $0x680] sm:$0xff]
    %v3457 = vld [vmem:[#allocation8 + $0x688] sm:$0xff]
    %v3458 = vld [vmem:[#allocation8 + $0x690] sm:$0xff]
    %v3459 = vld [vmem:[#allocation8 + $0x698] sm:$0xff]
    %v3460 = vld [vmem:[#allocation8 + $0x6a0] sm:$0xff]
    %v3461 = vld [vmem:[#allocation8 + $0x6a8] sm:$0xff]
    %v3462 = vld [vmem:[#allocation8 + $0x6b0] sm:$0xff]
    %v3463 = vld [vmem:[#allocation8 + $0x6b8] sm:$0xff]
    %v3464 = vld [vmem:[#allocation8 + $0x6c0] sm:$0xff]
    %v3465 = vld [vmem:[#allocation8 + $0x6c8] sm:$0xff]
    %v3466 = vld [vmem:[#allocation8 + $0x6d0] sm:$0xff]
    %v3467 = vld [vmem:[#allocation8 + $0x6d8] sm:$0xff]
    %v3468 = vld [vmem:[#allocation8 + $0x6e0] sm:$0xff]
    %v3469 = vld [vmem:[#allocation8 + $0x6e8] sm:$0xff]
    %v3470 = vld [vmem:[#allocation8 + $0x6f0] sm:$0xff]
    %v3471 = vld [vmem:[#allocation8 + $0x6f8] sm:$0xff]
    %v3472 = vld [vmem:[#allocation8 + $0x700] sm:$0xff]
    %v3473 = vld [vmem:[#allocation8 + $0x708] sm:$0xff]
    %v3474 = vld [vmem:[#allocation8 + $0x710] sm:$0xff]
    %v3475 = vld [vmem:[#allocation8 + $0x718] sm:$0xff]
    %v3476 = vld [vmem:[#allocation8 + $0x720] sm:$0xff]
    %v3477 = vld [vmem:[#allocation8 + $0x728] sm:$0xff]
    %v3478 = vld [vmem:[#allocation8 + $0x730] sm:$0xff]
    %v3479 = vld [vmem:[#allocation8 + $0x738] sm:$0xff]
    %v3480 = vld [vmem:[#allocation8 + $0x740] sm:$0xff]
    %v3481 = vld [vmem:[#allocation8 + $0x748] sm:$0xff]
    %v3482 = vld [vmem:[#allocation8 + $0x750] sm:$0xff]
    %v3483 = vld [vmem:[#allocation8 + $0x758] sm:$0xff]
    %v3484 = vld [vmem:[#allocation8 + $0x760] sm:$0xff]
    %v3485 = vld [vmem:[#allocation8 + $0x768] sm:$0xff]
    %v3486 = vld [vmem:[#allocation8 + $0x770] sm:$0xff]
    %v3487 = vld [vmem:[#allocation8 + $0x778] sm:$0xff]
    %v3488 = vld [vmem:[#allocation8 + $0x780] sm:$0xff]
    %v3489 = vld [vmem:[#allocation8 + $0x788] sm:$0xff]
    %v3490 = vld [vmem:[#allocation8 + $0x790] sm:$0xff]
    %v3491 = vld [vmem:[#allocation8 + $0x798] sm:$0xff]
    %v3492 = vld [vmem:[#allocation8 + $0x7a0] sm:$0xff]
    %v3493 = vld [vmem:[#allocation8 + $0x7a8] sm:$0xff]
    %v3494 = vld [vmem:[#allocation8 + $0x7b0] sm:$0xff]
    %v3495 = vld [vmem:[#allocation8 + $0x7b8] sm:$0xff]
    %v3496 = vld [vmem:[#allocation8 + $0x7c0] sm:$0xff]
    %v3497 = vld [vmem:[#allocation8 + $0x7c8] sm:$0xff]
    %v3498 = vld [vmem:[#allocation8 + $0x7d0] sm:$0xff]
    %v3499 = vld [vmem:[#allocation8 + $0x7d8] sm:$0xff]
    %v3500 = vld [vmem:[#allocation8 + $0x7e0] sm:$0xff]
    %v3501 = vld [vmem:[#allocation8 + $0x7e8] sm:$0xff]
    %v3502 = vld [vmem:[#allocation8 + $0x7f0] sm:$0xff]
    %v3503 = vld [vmem:[#allocation8 + $0x7f8] sm:$0xff]
    %v3504 = vld [vmem:[#allocation8 + $0x800] sm:$0xff]
    %v3505 = vld [vmem:[#allocation8 + $0x808] sm:$0xff]
    %v3506 = vld [vmem:[#allocation8 + $0x810] sm:$0xff]
    %v3507 = vld [vmem:[#allocation8 + $0x818] sm:$0xff]
    %v3508 = vld [vmem:[#allocation8 + $0x820] sm:$0xff]
    %v3509 = vld [vmem:[#allocation8 + $0x828] sm:$0xff]
    %v3510 = vld [vmem:[#allocation8 + $0x830] sm:$0xff]
    %v3511 = vld [vmem:[#allocation8 + $0x838] sm:$0xff]
    %v3512 = vld [vmem:[#allocation8 + $0x840] sm:$0xff]
    %v3513 = vld [vmem:[#allocation8 + $0x848] sm:$0xff]
    %v3514 = vld [vmem:[#allocation8 + $0x850] sm:$0xff]
    %v3515 = vld [vmem:[#allocation8 + $0x858] sm:$0xff]
    %v3516 = vld [vmem:[#allocation8 + $0x860] sm:$0xff]
    %v3517 = vld [vmem:[#allocation8 + $0x868] sm:$0xff]
    %v3518 = vld [vmem:[#allocation8 + $0x870] sm:$0xff]
    %v3519 = vld [vmem:[#allocation8 + $0x878] sm:$0xff]
    %v3520 = vld [vmem:[#allocation8 + $0x880] sm:$0xff]
    %v3521 = vld [vmem:[#allocation8 + $0x888] sm:$0xff]
    %v3522 = vld [vmem:[#allocation8 + $0x890] sm:$0xff]
    %v3523 = vld [vmem:[#allocation8 + $0x898] sm:$0xff]
    %v3524 = vld [vmem:[#allocation8 + $0x8a0] sm:$0xff]
    %v3525 = vld [vmem:[#allocation8 + $0x8a8] sm:$0xff]
    %v3526 = vld [vmem:[#allocation8 + $0x8b0] sm:$0xff]
    %v3527 = vld [vmem:[#allocation8 + $0x8b8] sm:$0xff]
    %v3528 = vld [vmem:[#allocation8 + $0x8c0] sm:$0xff]
    %v3529 = vld [vmem:[#allocation8 + $0x8c8] sm:$0xff]
    %v3530 = vld [vmem:[#allocation8 + $0x8d0] sm:$0xff]
    %v3531 = vld [vmem:[#allocation8 + $0x8d8] sm:$0xff]
    %v3532 = vld [vmem:[#allocation8 + $0x8e0] sm:$0xff]
    %v3533 = vld [vmem:[#allocation8 + $0x8e8] sm:$0xff]
    %v3534 = vld [vmem:[#allocation8 + $0x8f0] sm:$0xff]
    %v3535 = vld [vmem:[#allocation8 + $0x8f8] sm:$0xff]
    %v3536 = vld [vmem:[#allocation8 + $0x900] sm:$0xff]
    %v3537 = vld [vmem:[#allocation8 + $0x908] sm:$0xff]
    %v3538 = vld [vmem:[#allocation8 + $0x910] sm:$0xff]
    %v3539 = vld [vmem:[#allocation8 + $0x918] sm:$0xff]
    %v3540 = vld [vmem:[#allocation8 + $0x920] sm:$0xff]
    %v3541 = vld [vmem:[#allocation8 + $0x928] sm:$0xff]
    %v3542 = vld [vmem:[#allocation8 + $0x930] sm:$0xff]
    %v3543 = vld [vmem:[#allocation8 + $0x938] sm:$0xff]
    %v3544 = vld [vmem:[#allocation8 + $0x940] sm:$0xff]
    %v3545 = vld [vmem:[#allocation8 + $0x948] sm:$0xff]
    %v3546 = vld [vmem:[#allocation8 + $0x950] sm:$0xff]
    %v3547 = vld [vmem:[#allocation8 + $0x958] sm:$0xff]
    %v3548 = vld [vmem:[#allocation8 + $0x960] sm:$0xff]
    %v3549 = vld [vmem:[#allocation8 + $0x968] sm:$0xff]
    %v3550 = vld [vmem:[#allocation8 + $0x970] sm:$0xff]
    %v3551 = vld [vmem:[#allocation8 + $0x978] sm:$0xff]
    %v3552 = vld [vmem:[#allocation8 + $0x980] sm:$0xff]
    %v3553 = vld [vmem:[#allocation8 + $0x988] sm:$0xff]
    %v3554 = vld [vmem:[#allocation8 + $0x990] sm:$0xff]
    %v3555 = vld [vmem:[#allocation8 + $0x998] sm:$0xff]
    %v3556 = vld [vmem:[#allocation8 + $0x9a0] sm:$0xff]
    %v3557 = vld [vmem:[#allocation8 + $0x9a8] sm:$0xff]
    %v3558 = vld [vmem:[#allocation8 + $0x9b0] sm:$0xff]
    %v3559 = vld [vmem:[#allocation8 + $0x9b8] sm:$0xff]
    %v3560 = vld [vmem:[#allocation8 + $0x9c0] sm:$0xff]
    %v3561 = vld [vmem:[#allocation8 + $0x9c8] sm:$0xff]
    %v3562 = vld [vmem:[#allocation8 + $0x9d0] sm:$0xff]
    %v3563 = vld [vmem:[#allocation8 + $0x9d8] sm:$0xff]
    %v3564 = vld [vmem:[#allocation8 + $0x9e0] sm:$0xff]
    %v3565 = vld [vmem:[#allocation8 + $0x9e8] sm:$0xff]
    %v3566 = vld [vmem:[#allocation8 + $0x9f0] sm:$0xff]
    %v3567 = vld [vmem:[#allocation8 + $0x9f8] sm:$0xff]
    %v3568 = vld [vmem:[#allocation8 + $0xa00] sm:$0xff]
    %v3569 = vld [vmem:[#allocation8 + $0xa08] sm:$0xff]
    %v3570 = vld [vmem:[#allocation8 + $0xa10] sm:$0xff]
    %v3571 = vld [vmem:[#allocation8 + $0xa18] sm:$0xff]
    %v3572 = vld [vmem:[#allocation8 + $0xa20] sm:$0xff]
    %v3573 = vld [vmem:[#allocation8 + $0xa28] sm:$0xff]
    %v3574 = vld [vmem:[#allocation8 + $0xa30] sm:$0xff]
    %v3575 = vld [vmem:[#allocation8 + $0xa38] sm:$0xff]
    %v3576 = vld [vmem:[#allocation8 + $0xa40] sm:$0xff]
    %v3577 = vld [vmem:[#allocation8 + $0xa48] sm:$0xff]
    %v3578 = vld [vmem:[#allocation8 + $0xa50] sm:$0xff]
    %v3579 = vld [vmem:[#allocation8 + $0xa58] sm:$0xff]
    %v3580 = vld [vmem:[#allocation8 + $0xa60] sm:$0xff]
    %v3581 = vld [vmem:[#allocation8 + $0xa68] sm:$0xff]
    %v3582 = vld [vmem:[#allocation8 + $0xa70] sm:$0xff]
    %v3583 = vld [vmem:[#allocation8 + $0xa78] sm:$0xff]
    %v3584 = vld [vmem:[#allocation8 + $0xa80] sm:$0xff]
    %v3585 = vld [vmem:[#allocation8 + $0xa88] sm:$0xff]
    %v3586 = vld [vmem:[#allocation8 + $0xa90] sm:$0xff]
    %v3587 = vld [vmem:[#allocation8 + $0xa98] sm:$0xff]
    %v3588 = vld [vmem:[#allocation8 + $0xaa0] sm:$0xff]
    %v3589 = vld [vmem:[#allocation8 + $0xaa8] sm:$0xff]
    %v3590 = vld [vmem:[#allocation8 + $0xab0] sm:$0xff]
    %v3591 = vld [vmem:[#allocation8 + $0xab8] sm:$0xff]
    %v3592 = vld [vmem:[#allocation8 + $0xac0] sm:$0xff]
    %v3593 = vld [vmem:[#allocation8 + $0xac8] sm:$0xff]
    %v3594 = vld [vmem:[#allocation8 + $0xad0] sm:$0xff]
    %v3595 = vld [vmem:[#allocation8 + $0xad8] sm:$0xff]
    %v3596 = vld [vmem:[#allocation8 + $0xae0] sm:$0xff]
    %v3597 = vld [vmem:[#allocation8 + $0xae8] sm:$0xff]
    %v3598 = vld [vmem:[#allocation8 + $0xaf0] sm:$0xff]
    %v3599 = vld [vmem:[#allocation8 + $0xaf8] sm:$0xff]
    %v3600 = vld [vmem:[#allocation8 + $0xb00] sm:$0xff]
    %v3601 = vld [vmem:[#allocation8 + $0xb08] sm:$0xff]
    %v3602 = vld [vmem:[#allocation8 + $0xb10] sm:$0xff]
    %v3603 = vld [vmem:[#allocation8 + $0xb18] sm:$0xff]
    %v3604 = vld [vmem:[#allocation8 + $0xb20] sm:$0xff]
    %v3605 = vld [vmem:[#allocation8 + $0xb28] sm:$0xff]
    %v3606 = vld [vmem:[#allocation8 + $0xb30] sm:$0xff]
    %v3607 = vld [vmem:[#allocation8 + $0xb38] sm:$0xff]
    %v3608 = vld [vmem:[#allocation8 + $0xb40] sm:$0xff]
    %v3609 = vld [vmem:[#allocation8 + $0xb48] sm:$0xff]
    %v3610 = vld [vmem:[#allocation8 + $0xb50] sm:$0xff]
    %v3611 = vld [vmem:[#allocation8 + $0xb58] sm:$0xff]
    %v3612 = vld [vmem:[#allocation8 + $0xb60] sm:$0xff]
    %v3613 = vld [vmem:[#allocation8 + $0xb68] sm:$0xff]
    %v3614 = vld [vmem:[#allocation8 + $0xb70] sm:$0xff]
    %v3615 = vld [vmem:[#allocation8 + $0xb78] sm:$0xff]
    %v3616 = vld [vmem:[#allocation8 + $0xb80] sm:$0xff]
    %v3617 = vld [vmem:[#allocation8 + $0xb88] sm:$0xff]
    %v3618 = vld [vmem:[#allocation8 + $0xb90] sm:$0xff]
    %v3619 = vld [vmem:[#allocation8 + $0xb98] sm:$0xff]
    %v3620 = vld [vmem:[#allocation8 + $0xba0] sm:$0xff]
    %v3621 = vld [vmem:[#allocation8 + $0xba8] sm:$0xff]
    %v3622 = vld [vmem:[#allocation8 + $0xbb0] sm:$0xff]
    %v3623 = vld [vmem:[#allocation8 + $0xbb8] sm:$0xff]
    %v3624 = vld [vmem:[#allocation8 + $0xbc0] sm:$0xff]
    %v3625 = vld [vmem:[#allocation8 + $0xbc8] sm:$0xff]
    %v3626 = vld [vmem:[#allocation8 + $0xbd0] sm:$0xff]
    %v3627 = vld [vmem:[#allocation8 + $0xbd8] sm:$0xff]
    %v3628 = vld [vmem:[#allocation8 + $0xbe0] sm:$0xff]
    %v3629 = vld [vmem:[#allocation8 + $0xbe8] sm:$0xff]
    %v3630 = vld [vmem:[#allocation8 + $0xbf0] sm:$0xff]
    %v3631 = vld [vmem:[#allocation8 + $0xbf8] sm:$0xff]
    %v3632 = vld [vmem:[#allocation8 + $0xc00] sm:$0xff]
    %v3633 = vld [vmem:[#allocation8 + $0xc08] sm:$0xff]
    %v3634 = vld [vmem:[#allocation8 + $0xc10] sm:$0xff]
    %v3635 = vld [vmem:[#allocation8 + $0xc18] sm:$0xff]
    %v3636 = vld [vmem:[#allocation8 + $0xc20] sm:$0xff]
    %v3637 = vld [vmem:[#allocation8 + $0xc28] sm:$0xff]
    %v3638 = vld [vmem:[#allocation8 + $0xc30] sm:$0xff]
    %v3639 = vld [vmem:[#allocation8 + $0xc38] sm:$0xff]
    %v3640 = vld [vmem:[#allocation8 + $0xc40] sm:$0xff]
    %v3641 = vld [vmem:[#allocation8 + $0xc48] sm:$0xff]
    %v3642 = vld [vmem:[#allocation8 + $0xc50] sm:$0xff]
    %v3643 = vld [vmem:[#allocation8 + $0xc58] sm:$0xff]
    %v3644 = vld [vmem:[#allocation8 + $0xc60] sm:$0xff]
    %v3645 = vld [vmem:[#allocation8 + $0xc68] sm:$0xff]
    %v3646 = vld [vmem:[#allocation8 + $0xc70] sm:$0xff]
    %v3647 = vld [vmem:[#allocation8 + $0xc78] sm:$0xff]
    %v3648 = vld [vmem:[#allocation8 + $0xc80] sm:$0xff]
    %v3649 = vld [vmem:[#allocation8 + $0xc88] sm:$0xff]
    %v3650 = vld [vmem:[#allocation8 + $0xc90] sm:$0xff]
    %v3651 = vld [vmem:[#allocation8 + $0xc98] sm:$0xff]
    %v3652 = vld [vmem:[#allocation8 + $0xca0] sm:$0xff]
    %v3653 = vld [vmem:[#allocation8 + $0xca8] sm:$0xff]
    %v3654 = vld [vmem:[#allocation8 + $0xcb0] sm:$0xff]
    %v3655 = vld [vmem:[#allocation8 + $0xcb8] sm:$0xff]
    %v3656 = vld [vmem:[#allocation8 + $0xcc0] sm:$0xff]
    %v3657 = vld [vmem:[#allocation8 + $0xcc8] sm:$0xff]
    %v3658 = vld [vmem:[#allocation8 + $0xcd0] sm:$0xff]
    %v3659 = vld [vmem:[#allocation8 + $0xcd8] sm:$0xff]
    %v3660 = vld [vmem:[#allocation8 + $0xce0] sm:$0xff]
    %v3661 = vld [vmem:[#allocation8 + $0xce8] sm:$0xff]
    %v3662 = vld [vmem:[#allocation8 + $0xcf0] sm:$0xff]
    %v3663 = vld [vmem:[#allocation8 + $0xcf8] sm:$0xff]
    %v3664 = vld [vmem:[#allocation8 + $0xd00] sm:$0xff]
    %v3665 = vld [vmem:[#allocation8 + $0xd08] sm:$0xff]
    %v3666 = vld [vmem:[#allocation8 + $0xd10] sm:$0xff]
    %v3667 = vld [vmem:[#allocation8 + $0xd18] sm:$0xff]
    %v3668 = vld [vmem:[#allocation8 + $0xd20] sm:$0xff]
    %v3669 = vld [vmem:[#allocation8 + $0xd28] sm:$0xff]
    %v3670 = vld [vmem:[#allocation8 + $0xd30] sm:$0xff]
    %v3671 = vld [vmem:[#allocation8 + $0xd38] sm:$0xff]
    %v3672 = vld [vmem:[#allocation8 + $0xd40] sm:$0xff]
    %v3673 = vld [vmem:[#allocation8 + $0xd48] sm:$0xff]
    %v3674 = vld [vmem:[#allocation8 + $0xd50] sm:$0xff]
    %v3675 = vld [vmem:[#allocation8 + $0xd58] sm:$0xff]
    %v3676 = vld [vmem:[#allocation8 + $0xd60] sm:$0xff]
    %v3677 = vld [vmem:[#allocation8 + $0xd68] sm:$0xff]
    %v3678 = vld [vmem:[#allocation8 + $0xd70] sm:$0xff]
    %v3679 = vld [vmem:[#allocation8 + $0xd78] sm:$0xff]
    %v3680 = vld [vmem:[#allocation8 + $0xd80] sm:$0xff]
    %v3681 = vld [vmem:[#allocation8 + $0xd88] sm:$0xff]
    %v3682 = vld [vmem:[#allocation8 + $0xd90] sm:$0xff]
    %v3683 = vld [vmem:[#allocation8 + $0xd98] sm:$0xff]
    %v3684 = vld [vmem:[#allocation8 + $0xda0] sm:$0xff]
    %v3685 = vld [vmem:[#allocation8 + $0xda8] sm:$0xff]
    %v3686 = vld [vmem:[#allocation8 + $0xdb0] sm:$0xff]
    %v3687 = vld [vmem:[#allocation8 + $0xdb8] sm:$0xff]
    %v3688 = vld [vmem:[#allocation8 + $0xdc0] sm:$0xff]
    %v3689 = vld [vmem:[#allocation8 + $0xdc8] sm:$0xff]
    %v3690 = vld [vmem:[#allocation8 + $0xdd0] sm:$0xff]
    %v3691 = vld [vmem:[#allocation8 + $0xdd8] sm:$0xff]
    %v3692 = vld [vmem:[#allocation8 + $0xde0] sm:$0xff]
    %v3693 = vld [vmem:[#allocation8 + $0xde8] sm:$0xff]
    %v3694 = vld [vmem:[#allocation8 + $0xdf0] sm:$0xff]
    %v3695 = vld [vmem:[#allocation8 + $0xdf8] sm:$0xff]
    %v3696 = vld [vmem:[#allocation8 + $0xe00] sm:$0xff]
    %v3697 = vld [vmem:[#allocation8 + $0xe08] sm:$0xff]
    %v3698 = vld [vmem:[#allocation8 + $0xe10] sm:$0xff]
    %v3699 = vld [vmem:[#allocation8 + $0xe18] sm:$0xff]
    %v3700 = vld [vmem:[#allocation8 + $0xe20] sm:$0xff]
    %v3701 = vld [vmem:[#allocation8 + $0xe28] sm:$0xff]
    %v3702 = vld [vmem:[#allocation8 + $0xe30] sm:$0xff]
    %v3703 = vld [vmem:[#allocation8 + $0xe38] sm:$0xff]
    %v3704 = vld [vmem:[#allocation8 + $0xe40] sm:$0xff]
    %v3705 = vld [vmem:[#allocation8 + $0xe48] sm:$0xff]
    %v3706 = vld [vmem:[#allocation8 + $0xe50] sm:$0xff]
    %v3707 = vld [vmem:[#allocation8 + $0xe58] sm:$0xff]
    %v3708 = vld [vmem:[#allocation8 + $0xe60] sm:$0xff]
    %v3709 = vld [vmem:[#allocation8 + $0xe68] sm:$0xff]
    %v3710 = vld [vmem:[#allocation8 + $0xe70] sm:$0xff]
    %v3711 = vld [vmem:[#allocation8 + $0xe78] sm:$0xff]
    %v3712 = vld [vmem:[#allocation8 + $0xe80] sm:$0xff]
    %v3713 = vld [vmem:[#allocation8 + $0xe88] sm:$0xff]
    %v3714 = vld [vmem:[#allocation8 + $0xe90] sm:$0xff]
    %v3715 = vld [vmem:[#allocation8 + $0xe98] sm:$0xff]
    %v3716 = vld [vmem:[#allocation8 + $0xea0] sm:$0xff]
    %v3717 = vld [vmem:[#allocation8 + $0xea8] sm:$0xff]
    %v3718 = vld [vmem:[#allocation8 + $0xeb0] sm:$0xff]
    %v3719 = vld [vmem:[#allocation8 + $0xeb8] sm:$0xff]
    %v3720 = vld [vmem:[#allocation8 + $0xec0] sm:$0xff]
    %v3721 = vld [vmem:[#allocation8 + $0xec8] sm:$0xff]
    %v3722 = vld [vmem:[#allocation8 + $0xed0] sm:$0xff]
    %v3723 = vld [vmem:[#allocation8 + $0xed8] sm:$0xff]
    %v3724 = vld [vmem:[#allocation8 + $0xee0] sm:$0xff]
    %v3725 = vld [vmem:[#allocation8 + $0xee8] sm:$0xff]
    %v3726 = vld [vmem:[#allocation8 + $0xef0] sm:$0xff]
    %v3727 = vld [vmem:[#allocation8 + $0xef8] sm:$0xff]
    %v3728 = vld [vmem:[#allocation8 + $0xf00] sm:$0xff]
    %v3729 = vld [vmem:[#allocation8 + $0xf08] sm:$0xff]
    %v3730 = vld [vmem:[#allocation8 + $0xf10] sm:$0xff]
    %v3731 = vld [vmem:[#allocation8 + $0xf18] sm:$0xff]
    %v3732 = vld [vmem:[#allocation8 + $0xf20] sm:$0xff]
    %v3733 = vld [vmem:[#allocation8 + $0xf28] sm:$0xff]
    %v3734 = vld [vmem:[#allocation8 + $0xf30] sm:$0xff]
    %v3735 = vld [vmem:[#allocation8 + $0xf38] sm:$0xff]
    %v3736 = vld [vmem:[#allocation8 + $0xf40] sm:$0xff]
    %v3737 = vld [vmem:[#allocation8 + $0xf48] sm:$0xff]
    %v3738 = vld [vmem:[#allocation8 + $0xf50] sm:$0xff]
    %v3739 = vld [vmem:[#allocation8 + $0xf58] sm:$0xff]
    %v3740 = vld [vmem:[#allocation8 + $0xf60] sm:$0xff]
    %v3741 = vld [vmem:[#allocation8 + $0xf68] sm:$0xff]
    %v3742 = vld [vmem:[#allocation8 + $0xf70] sm:$0xff]
    %v3743 = vld [vmem:[#allocation8 + $0xf78] sm:$0xff]
    %v3744 = vld [vmem:[#allocation8 + $0xf80] sm:$0xff]
    %v3745 = vld [vmem:[#allocation8 + $0xf88] sm:$0xff]
    %v3746 = vld [vmem:[#allocation8 + $0xf90] sm:$0xff]
    %v3747 = vld [vmem:[#allocation8 + $0xf98] sm:$0xff]
    %v3748 = vld [vmem:[#allocation8 + $0xfa0] sm:$0xff]
    %v3749 = vld [vmem:[#allocation8 + $0xfa8] sm:$0xff]
    %v3750 = vld [vmem:[#allocation8 + $0xfb0] sm:$0xff]
    %v3751 = vld [vmem:[#allocation8 + $0xfb8] sm:$0xff]
    %v3752 = vld [vmem:[#allocation8 + $0xfc0] sm:$0xff]
    %v3753 = vld [vmem:[#allocation8 + $0xfc8] sm:$0xff]
    %v3754 = vld [vmem:[#allocation8 + $0xfd0] sm:$0xff]
    %v3755 = vld [vmem:[#allocation8 + $0xfd8] sm:$0xff]
    %v3756 = vld [vmem:[#allocation8 + $0xfe0] sm:$0xff]
    %v3757 = vld [vmem:[#allocation8 + $0xfe8] sm:$0xff]
    %v3758 = vld [vmem:[#allocation8 + $0xff0] sm:$0xff]
    %v3759 = vld [vmem:[#allocation8 + $0xff8] sm:$0xff]
    %v3760 = vld [vmem:[#allocation10] sm:$0xff]
    %v3762 = vlaneseq
    %v3763 = vshrl.u32 %v3762, 7
    %v3764 = vsub.s32 0, %v3763
    %v3765 = vrot.slane %v3760, %v3764
    %v3766 = vlaneseq
    %v3767 = vshrl.u32 %v3766, 7
    %v3768 = vsub.s32 1, %v3767
    %v3769 = vrot.slane %v3760, %v3768
    %v3770 = vlaneseq
    %v3771 = vshrl.u32 %v3770, 7
    %v3772 = vsub.s32 2, %v3771
    %v3773 = vrot.slane %v3760, %v3772
    %v3774 = vlaneseq
    %v3775 = vshrl.u32 %v3774, 7
    %v3776 = vsub.s32 3, %v3775
    %v3777 = vrot.slane %v3760, %v3776
    %v3778 = vlaneseq
    %v3779 = vshrl.u32 %v3778, 7
    %v3780 = vsub.s32 4, %v3779
    %v3781 = vrot.slane %v3760, %v3780
    %v3782 = vlaneseq
    %v3783 = vshrl.u32 %v3782, 7
    %v3784 = vsub.s32 5, %v3783
    %v3785 = vrot.slane %v3760, %v3784
    %v3786 = vlaneseq
    %v3787 = vshrl.u32 %v3786, 7
    %v3788 = vsub.s32 6, %v3787
    %v3789 = vrot.slane %v3760, %v3788
    %v3790 = vlaneseq
    %v3791 = vshrl.u32 %v3790, 7
    %v3792 = vsub.s32 7, %v3791
    %v3793 = vrot.slane %v3760, %v3792
    %v4314 = vunpack.c.l.b16 %v3248
    %v4315 = vunpack.c.h.b16 %v3248
    %v4316 = vunpack.c.l.b16 %v3249
    %v4317 = vunpack.c.h.b16 %v3249
    %v4318 = vunpack.c.l.b16 %v3250
    %v4319 = vunpack.c.h.b16 %v3250
    %v4320 = vunpack.c.l.b16 %v3251
    %v4321 = vunpack.c.h.b16 %v3251
    %v4322 = vunpack.c.l.b16 %v3252
    %v4323 = vunpack.c.h.b16 %v3252
    %v4324 = vunpack.c.l.b16 %v3253
    %v4325 = vunpack.c.h.b16 %v3253
    %v4326 = vunpack.c.l.b16 %v3254
    %v4327 = vunpack.c.h.b16 %v3254
    %v4328 = vunpack.c.l.b16 %v3255
    %v4329 = vunpack.c.h.b16 %v3255
    %v4330 = vunpack.c.l.b16 %v3256
    %v4331 = vunpack.c.h.b16 %v3256
    %v4332 = vunpack.c.l.b16 %v3257
    %v4333 = vunpack.c.h.b16 %v3257
    %v4334 = vunpack.c.l.b16 %v3258
    %v4335 = vunpack.c.h.b16 %v3258
    %v4336 = vunpack.c.l.b16 %v3259
    %v4337 = vunpack.c.h.b16 %v3259
    %v4338 = vunpack.c.l.b16 %v3260
    %v4339 = vunpack.c.h.b16 %v3260
    %v4340 = vunpack.c.l.b16 %v3261
    %v4341 = vunpack.c.h.b16 %v3261
    %v4342 = vunpack.c.l.b16 %v3262
    %v4343 = vunpack.c.h.b16 %v3262
    %v4344 = vunpack.c.l.b16 %v3263
    %v4345 = vunpack.c.h.b16 %v3263
    %v4346 = vunpack.c.l.b16 %v3264
    %v4347 = vunpack.c.h.b16 %v3264
    %v4348 = vunpack.c.l.b16 %v3265
    %v4349 = vunpack.c.h.b16 %v3265
    %v4350 = vunpack.c.l.b16 %v3266
    %v4351 = vunpack.c.h.b16 %v3266
    %v4352 = vunpack.c.l.b16 %v3267
    %v4353 = vunpack.c.h.b16 %v3267
    %v4354 = vunpack.c.l.b16 %v3268
    %v4355 = vunpack.c.h.b16 %v3268
    %v4356 = vunpack.c.l.b16 %v3269
    %v4357 = vunpack.c.h.b16 %v3269
    %v4358 = vunpack.c.l.b16 %v3270
    %v4359 = vunpack.c.h.b16 %v3270
    %v4360 = vunpack.c.l.b16 %v3271
    %v4361 = vunpack.c.h.b16 %v3271
    %v4362 = vunpack.c.l.b16 %v3272
    %v4363 = vunpack.c.h.b16 %v3272
    %v4364 = vunpack.c.l.b16 %v3273
    %v4365 = vunpack.c.h.b16 %v3273
    %v4366 = vunpack.c.l.b16 %v3274
    %v4367 = vunpack.c.h.b16 %v3274
    %v4368 = vunpack.c.l.b16 %v3275
    %v4369 = vunpack.c.h.b16 %v3275
    %v4370 = vunpack.c.l.b16 %v3276
    %v4371 = vunpack.c.h.b16 %v3276
    %v4372 = vunpack.c.l.b16 %v3277
    %v4373 = vunpack.c.h.b16 %v3277
    %v4374 = vunpack.c.l.b16 %v3278
    %v4375 = vunpack.c.h.b16 %v3278
    %v4376 = vunpack.c.l.b16 %v3279
    %v4377 = vunpack.c.h.b16 %v3279
    %v4378 = vunpack.c.l.b16 %v3280
    %v4379 = vunpack.c.h.b16 %v3280
    %v4380 = vunpack.c.l.b16 %v3281
    %v4381 = vunpack.c.h.b16 %v3281
    %v4382 = vunpack.c.l.b16 %v3282
    %v4383 = vunpack.c.h.b16 %v3282
    %v4384 = vunpack.c.l.b16 %v3283
    %v4385 = vunpack.c.h.b16 %v3283
    %v4386 = vunpack.c.l.b16 %v3284
    %v4387 = vunpack.c.h.b16 %v3284
    %v4388 = vunpack.c.l.b16 %v3285
    %v4389 = vunpack.c.h.b16 %v3285
    %v4390 = vunpack.c.l.b16 %v3286
    %v4391 = vunpack.c.h.b16 %v3286
    %v4392 = vunpack.c.l.b16 %v3287
    %v4393 = vunpack.c.h.b16 %v3287
    %v4394 = vunpack.c.l.b16 %v3288
    %v4395 = vunpack.c.h.b16 %v3288
    %v4396 = vunpack.c.l.b16 %v3289
    %v4397 = vunpack.c.h.b16 %v3289
    %v4398 = vunpack.c.l.b16 %v3290
    %v4399 = vunpack.c.h.b16 %v3290
    %v4400 = vunpack.c.l.b16 %v3291
    %v4401 = vunpack.c.h.b16 %v3291
    %v4402 = vunpack.c.l.b16 %v3292
    %v4403 = vunpack.c.h.b16 %v3292
    %v4404 = vunpack.c.l.b16 %v3293
    %v4405 = vunpack.c.h.b16 %v3293
    %v4406 = vunpack.c.l.b16 %v3294
    %v4407 = vunpack.c.h.b16 %v3294
    %v4408 = vunpack.c.l.b16 %v3295
    %v4409 = vunpack.c.h.b16 %v3295
    %v4410 = vunpack.c.l.b16 %v3296
    %v4411 = vunpack.c.h.b16 %v3296
    %v4412 = vunpack.c.l.b16 %v3297
    %v4413 = vunpack.c.h.b16 %v3297
    %v4414 = vunpack.c.l.b16 %v3298
    %v4415 = vunpack.c.h.b16 %v3298
    %v4416 = vunpack.c.l.b16 %v3299
    %v4417 = vunpack.c.h.b16 %v3299
    %v4418 = vunpack.c.l.b16 %v3300
    %v4419 = vunpack.c.h.b16 %v3300
    %v4420 = vunpack.c.l.b16 %v3301
    %v4421 = vunpack.c.h.b16 %v3301
    %v4422 = vunpack.c.l.b16 %v3302
    %v4423 = vunpack.c.h.b16 %v3302
    %v4424 = vunpack.c.l.b16 %v3303
    %v4425 = vunpack.c.h.b16 %v3303
    %v4426 = vunpack.c.l.b16 %v3304
    %v4427 = vunpack.c.h.b16 %v3304
    %v4428 = vunpack.c.l.b16 %v3305
    %v4429 = vunpack.c.h.b16 %v3305
    %v4430 = vunpack.c.l.b16 %v3306
    %v4431 = vunpack.c.h.b16 %v3306
    %v4432 = vunpack.c.l.b16 %v3307
    %v4433 = vunpack.c.h.b16 %v3307
    %v4434 = vunpack.c.l.b16 %v3308
    %v4435 = vunpack.c.h.b16 %v3308
    %v4436 = vunpack.c.l.b16 %v3309
    %v4437 = vunpack.c.h.b16 %v3309
    %v4438 = vunpack.c.l.b16 %v3310
    %v4439 = vunpack.c.h.b16 %v3310
    %v4440 = vunpack.c.l.b16 %v3311
    %v4441 = vunpack.c.h.b16 %v3311
    %v4442 = vunpack.c.l.b16 %v3312
    %v4443 = vunpack.c.h.b16 %v3312
    %v4444 = vunpack.c.l.b16 %v3313
    %v4445 = vunpack.c.h.b16 %v3313
    %v4446 = vunpack.c.l.b16 %v3314
    %v4447 = vunpack.c.h.b16 %v3314
    %v4448 = vunpack.c.l.b16 %v3315
    %v4449 = vunpack.c.h.b16 %v3315
    %v4450 = vunpack.c.l.b16 %v3316
    %v4451 = vunpack.c.h.b16 %v3316
    %v4452 = vunpack.c.l.b16 %v3317
    %v4453 = vunpack.c.h.b16 %v3317
    %v4454 = vunpack.c.l.b16 %v3318
    %v4455 = vunpack.c.h.b16 %v3318
    %v4456 = vunpack.c.l.b16 %v3319
    %v4457 = vunpack.c.h.b16 %v3319
    %v4458 = vunpack.c.l.b16 %v3320
    %v4459 = vunpack.c.h.b16 %v3320
    %v4460 = vunpack.c.l.b16 %v3321
    %v4461 = vunpack.c.h.b16 %v3321
    %v4462 = vunpack.c.l.b16 %v3322
    %v4463 = vunpack.c.h.b16 %v3322
    %v4464 = vunpack.c.l.b16 %v3323
    %v4465 = vunpack.c.h.b16 %v3323
    %v4466 = vunpack.c.l.b16 %v3324
    %v4467 = vunpack.c.h.b16 %v3324
    %v4468 = vunpack.c.l.b16 %v3325
    %v4469 = vunpack.c.h.b16 %v3325
    %v4470 = vunpack.c.l.b16 %v3326
    %v4471 = vunpack.c.h.b16 %v3326
    %v4472 = vunpack.c.l.b16 %v3327
    %v4473 = vunpack.c.h.b16 %v3327
    %v4474 = vunpack.c.l.b16 %v3328
    %v4475 = vunpack.c.h.b16 %v3328
    %v4476 = vunpack.c.l.b16 %v3329
    %v4477 = vunpack.c.h.b16 %v3329
    %v4478 = vunpack.c.l.b16 %v3330
    %v4479 = vunpack.c.h.b16 %v3330
    %v4480 = vunpack.c.l.b16 %v3331
    %v4481 = vunpack.c.h.b16 %v3331
    %v4482 = vunpack.c.l.b16 %v3332
    %v4483 = vunpack.c.h.b16 %v3332
    %v4484 = vunpack.c.l.b16 %v3333
    %v4485 = vunpack.c.h.b16 %v3333
    %v4486 = vunpack.c.l.b16 %v3334
    %v4487 = vunpack.c.h.b16 %v3334
    %v4488 = vunpack.c.l.b16 %v3335
    %v4489 = vunpack.c.h.b16 %v3335
    %v4490 = vunpack.c.l.b16 %v3336
    %v4491 = vunpack.c.h.b16 %v3336
    %v4492 = vunpack.c.l.b16 %v3337
    %v4493 = vunpack.c.h.b16 %v3337
    %v4494 = vunpack.c.l.b16 %v3338
    %v4495 = vunpack.c.h.b16 %v3338
    %v4496 = vunpack.c.l.b16 %v3339
    %v4497 = vunpack.c.h.b16 %v3339
    %v4498 = vunpack.c.l.b16 %v3340
    %v4499 = vunpack.c.h.b16 %v3340
    %v4500 = vunpack.c.l.b16 %v3341
    %v4501 = vunpack.c.h.b16 %v3341
    %v4502 = vunpack.c.l.b16 %v3342
    %v4503 = vunpack.c.h.b16 %v3342
    %v4504 = vunpack.c.l.b16 %v3343
    %v4505 = vunpack.c.h.b16 %v3343
    %v4506 = vunpack.c.l.b16 %v3344
    %v4507 = vunpack.c.h.b16 %v3344
    %v4508 = vunpack.c.l.b16 %v3345
    %v4509 = vunpack.c.h.b16 %v3345
    %v4510 = vunpack.c.l.b16 %v3346
    %v4511 = vunpack.c.h.b16 %v3346
    %v4512 = vunpack.c.l.b16 %v3347
    %v4513 = vunpack.c.h.b16 %v3347
    %v4514 = vunpack.c.l.b16 %v3348
    %v4515 = vunpack.c.h.b16 %v3348
    %v4516 = vunpack.c.l.b16 %v3349
    %v4517 = vunpack.c.h.b16 %v3349
    %v4518 = vunpack.c.l.b16 %v3350
    %v4519 = vunpack.c.h.b16 %v3350
    %v4520 = vunpack.c.l.b16 %v3351
    %v4521 = vunpack.c.h.b16 %v3351
    %v4522 = vunpack.c.l.b16 %v3352
    %v4523 = vunpack.c.h.b16 %v3352
    %v4524 = vunpack.c.l.b16 %v3353
    %v4525 = vunpack.c.h.b16 %v3353
    %v4526 = vunpack.c.l.b16 %v3354
    %v4527 = vunpack.c.h.b16 %v3354
    %v4528 = vunpack.c.l.b16 %v3355
    %v4529 = vunpack.c.h.b16 %v3355
    %v4530 = vunpack.c.l.b16 %v3356
    %v4531 = vunpack.c.h.b16 %v3356
    %v4532 = vunpack.c.l.b16 %v3357
    %v4533 = vunpack.c.h.b16 %v3357
    %v4534 = vunpack.c.l.b16 %v3358
    %v4535 = vunpack.c.h.b16 %v3358
    %v4536 = vunpack.c.l.b16 %v3359
    %v4537 = vunpack.c.h.b16 %v3359
    %v4538 = vunpack.c.l.b16 %v3360
    %v4539 = vunpack.c.h.b16 %v3360
    %v4540 = vunpack.c.l.b16 %v3361
    %v4541 = vunpack.c.h.b16 %v3361
    %v4542 = vunpack.c.l.b16 %v3362
    %v4543 = vunpack.c.h.b16 %v3362
    %v4544 = vunpack.c.l.b16 %v3363
    %v4545 = vunpack.c.h.b16 %v3363
    %v4546 = vunpack.c.l.b16 %v3364
    %v4547 = vunpack.c.h.b16 %v3364
    %v4548 = vunpack.c.l.b16 %v3365
    %v4549 = vunpack.c.h.b16 %v3365
    %v4550 = vunpack.c.l.b16 %v3366
    %v4551 = vunpack.c.h.b16 %v3366
    %v4552 = vunpack.c.l.b16 %v3367
    %v4553 = vunpack.c.h.b16 %v3367
    %v4554 = vunpack.c.l.b16 %v3368
    %v4555 = vunpack.c.h.b16 %v3368
    %v4556 = vunpack.c.l.b16 %v3369
    %v4557 = vunpack.c.h.b16 %v3369
    %v4558 = vunpack.c.l.b16 %v3370
    %v4559 = vunpack.c.h.b16 %v3370
    %v4560 = vunpack.c.l.b16 %v3371
    %v4561 = vunpack.c.h.b16 %v3371
    %v4562 = vunpack.c.l.b16 %v3372
    %v4563 = vunpack.c.h.b16 %v3372
    %v4564 = vunpack.c.l.b16 %v3373
    %v4565 = vunpack.c.h.b16 %v3373
    %v4566 = vunpack.c.l.b16 %v3374
    %v4567 = vunpack.c.h.b16 %v3374
    %v4568 = vunpack.c.l.b16 %v3375
    %v4569 = vunpack.c.h.b16 %v3375
    %v4570 = vunpack.c.l.b16 %v3376
    %v4571 = vunpack.c.h.b16 %v3376
    %v4572 = vunpack.c.l.b16 %v3377
    %v4573 = vunpack.c.h.b16 %v3377
    %v4574 = vunpack.c.l.b16 %v3378
    %v4575 = vunpack.c.h.b16 %v3378
    %v4576 = vunpack.c.l.b16 %v3379
    %v4577 = vunpack.c.h.b16 %v3379
    %v4578 = vunpack.c.l.b16 %v3380
    %v4579 = vunpack.c.h.b16 %v3380
    %v4580 = vunpack.c.l.b16 %v3381
    %v4581 = vunpack.c.h.b16 %v3381
    %v4582 = vunpack.c.l.b16 %v3382
    %v4583 = vunpack.c.h.b16 %v3382
    %v4584 = vunpack.c.l.b16 %v3383
    %v4585 = vunpack.c.h.b16 %v3383
    %v4586 = vunpack.c.l.b16 %v3384
    %v4587 = vunpack.c.h.b16 %v3384
    %v4588 = vunpack.c.l.b16 %v3385
    %v4589 = vunpack.c.h.b16 %v3385
    %v4590 = vunpack.c.l.b16 %v3386
    %v4591 = vunpack.c.h.b16 %v3386
    %v4592 = vunpack.c.l.b16 %v3387
    %v4593 = vunpack.c.h.b16 %v3387
    %v4594 = vunpack.c.l.b16 %v3388
    %v4595 = vunpack.c.h.b16 %v3388
    %v4596 = vunpack.c.l.b16 %v3389
    %v4597 = vunpack.c.h.b16 %v3389
    %v4598 = vunpack.c.l.b16 %v3390
    %v4599 = vunpack.c.h.b16 %v3390
    %v4600 = vunpack.c.l.b16 %v3391
    %v4601 = vunpack.c.h.b16 %v3391
    %v4602 = vunpack.c.l.b16 %v3392
    %v4603 = vunpack.c.h.b16 %v3392
    %v4604 = vunpack.c.l.b16 %v3393
    %v4605 = vunpack.c.h.b16 %v3393
    %v4606 = vunpack.c.l.b16 %v3394
    %v4607 = vunpack.c.h.b16 %v3394
    %v4608 = vunpack.c.l.b16 %v3395
    %v4609 = vunpack.c.h.b16 %v3395
    %v4610 = vunpack.c.l.b16 %v3396
    %v4611 = vunpack.c.h.b16 %v3396
    %v4612 = vunpack.c.l.b16 %v3397
    %v4613 = vunpack.c.h.b16 %v3397
    %v4614 = vunpack.c.l.b16 %v3398
    %v4615 = vunpack.c.h.b16 %v3398
    %v4616 = vunpack.c.l.b16 %v3399
    %v4617 = vunpack.c.h.b16 %v3399
    %v4618 = vunpack.c.l.b16 %v3400
    %v4619 = vunpack.c.h.b16 %v3400
    %v4620 = vunpack.c.l.b16 %v3401
    %v4621 = vunpack.c.h.b16 %v3401
    %v4622 = vunpack.c.l.b16 %v3402
    %v4623 = vunpack.c.h.b16 %v3402
    %v4624 = vunpack.c.l.b16 %v3403
    %v4625 = vunpack.c.h.b16 %v3403
    %v4626 = vunpack.c.l.b16 %v3404
    %v4627 = vunpack.c.h.b16 %v3404
    %v4628 = vunpack.c.l.b16 %v3405
    %v4629 = vunpack.c.h.b16 %v3405
    %v4630 = vunpack.c.l.b16 %v3406
    %v4631 = vunpack.c.h.b16 %v3406
    %v4632 = vunpack.c.l.b16 %v3407
    %v4633 = vunpack.c.h.b16 %v3407
    %v4634 = vunpack.c.l.b16 %v3408
    %v4635 = vunpack.c.h.b16 %v3408
    %v4636 = vunpack.c.l.b16 %v3409
    %v4637 = vunpack.c.h.b16 %v3409
    %v4638 = vunpack.c.l.b16 %v3410
    %v4639 = vunpack.c.h.b16 %v3410
    %v4640 = vunpack.c.l.b16 %v3411
    %v4641 = vunpack.c.h.b16 %v3411
    %v4642 = vunpack.c.l.b16 %v3412
    %v4643 = vunpack.c.h.b16 %v3412
    %v4644 = vunpack.c.l.b16 %v3413
    %v4645 = vunpack.c.h.b16 %v3413
    %v4646 = vunpack.c.l.b16 %v3414
    %v4647 = vunpack.c.h.b16 %v3414
    %v4648 = vunpack.c.l.b16 %v3415
    %v4649 = vunpack.c.h.b16 %v3415
    %v4650 = vunpack.c.l.b16 %v3416
    %v4651 = vunpack.c.h.b16 %v3416
    %v4652 = vunpack.c.l.b16 %v3417
    %v4653 = vunpack.c.h.b16 %v3417
    %v4654 = vunpack.c.l.b16 %v3418
    %v4655 = vunpack.c.h.b16 %v3418
    %v4656 = vunpack.c.l.b16 %v3419
    %v4657 = vunpack.c.h.b16 %v3419
    %v4658 = vunpack.c.l.b16 %v3420
    %v4659 = vunpack.c.h.b16 %v3420
    %v4660 = vunpack.c.l.b16 %v3421
    %v4661 = vunpack.c.h.b16 %v3421
    %v4662 = vunpack.c.l.b16 %v3422
    %v4663 = vunpack.c.h.b16 %v3422
    %v4664 = vunpack.c.l.b16 %v3423
    %v4665 = vunpack.c.h.b16 %v3423
    %v4666 = vunpack.c.l.b16 %v3424
    %v4667 = vunpack.c.h.b16 %v3424
    %v4668 = vunpack.c.l.b16 %v3425
    %v4669 = vunpack.c.h.b16 %v3425
    %v4670 = vunpack.c.l.b16 %v3426
    %v4671 = vunpack.c.h.b16 %v3426
    %v4672 = vunpack.c.l.b16 %v3427
    %v4673 = vunpack.c.h.b16 %v3427
    %v4674 = vunpack.c.l.b16 %v3428
    %v4675 = vunpack.c.h.b16 %v3428
    %v4676 = vunpack.c.l.b16 %v3429
    %v4677 = vunpack.c.h.b16 %v3429
    %v4678 = vunpack.c.l.b16 %v3430
    %v4679 = vunpack.c.h.b16 %v3430
    %v4680 = vunpack.c.l.b16 %v3431
    %v4681 = vunpack.c.h.b16 %v3431
    %v4682 = vunpack.c.l.b16 %v3432
    %v4683 = vunpack.c.h.b16 %v3432
    %v4684 = vunpack.c.l.b16 %v3433
    %v4685 = vunpack.c.h.b16 %v3433
    %v4686 = vunpack.c.l.b16 %v3434
    %v4687 = vunpack.c.h.b16 %v3434
    %v4688 = vunpack.c.l.b16 %v3435
    %v4689 = vunpack.c.h.b16 %v3435
    %v4690 = vunpack.c.l.b16 %v3436
    %v4691 = vunpack.c.h.b16 %v3436
    %v4692 = vunpack.c.l.b16 %v3437
    %v4693 = vunpack.c.h.b16 %v3437
    %v4694 = vunpack.c.l.b16 %v3438
    %v4695 = vunpack.c.h.b16 %v3438
    %v4696 = vunpack.c.l.b16 %v3439
    %v4697 = vunpack.c.h.b16 %v3439
    %v4698 = vunpack.c.l.b16 %v3440
    %v4699 = vunpack.c.h.b16 %v3440
    %v4700 = vunpack.c.l.b16 %v3441
    %v4701 = vunpack.c.h.b16 %v3441
    %v4702 = vunpack.c.l.b16 %v3442
    %v4703 = vunpack.c.h.b16 %v3442
    %v4704 = vunpack.c.l.b16 %v3443
    %v4705 = vunpack.c.h.b16 %v3443
    %v4706 = vunpack.c.l.b16 %v3444
    %v4707 = vunpack.c.h.b16 %v3444
    %v4708 = vunpack.c.l.b16 %v3445
    %v4709 = vunpack.c.h.b16 %v3445
    %v4710 = vunpack.c.l.b16 %v3446
    %v4711 = vunpack.c.h.b16 %v3446
    %v4712 = vunpack.c.l.b16 %v3447
    %v4713 = vunpack.c.h.b16 %v3447
    %v4714 = vunpack.c.l.b16 %v3448
    %v4715 = vunpack.c.h.b16 %v3448
    %v4716 = vunpack.c.l.b16 %v3449
    %v4717 = vunpack.c.h.b16 %v3449
    %v4718 = vunpack.c.l.b16 %v3450
    %v4719 = vunpack.c.h.b16 %v3450
    %v4720 = vunpack.c.l.b16 %v3451
    %v4721 = vunpack.c.h.b16 %v3451
    %v4722 = vunpack.c.l.b16 %v3452
    %v4723 = vunpack.c.h.b16 %v3452
    %v4724 = vunpack.c.l.b16 %v3453
    %v4725 = vunpack.c.h.b16 %v3453
    %v4726 = vunpack.c.l.b16 %v3454
    %v4727 = vunpack.c.h.b16 %v3454
    %v4728 = vunpack.c.l.b16 %v3455
    %v4729 = vunpack.c.h.b16 %v3455
    %v4730 = vunpack.c.l.b16 %v3456
    %v4731 = vunpack.c.h.b16 %v3456
    %v4732 = vunpack.c.l.b16 %v3457
    %v4733 = vunpack.c.h.b16 %v3457
    %v4734 = vunpack.c.l.b16 %v3458
    %v4735 = vunpack.c.h.b16 %v3458
    %v4736 = vunpack.c.l.b16 %v3459
    %v4737 = vunpack.c.h.b16 %v3459
    %v4738 = vunpack.c.l.b16 %v3460
    %v4739 = vunpack.c.h.b16 %v3460
    %v4740 = vunpack.c.l.b16 %v3461
    %v4741 = vunpack.c.h.b16 %v3461
    %v4742 = vunpack.c.l.b16 %v3462
    %v4743 = vunpack.c.h.b16 %v3462
    %v4744 = vunpack.c.l.b16 %v3463
    %v4745 = vunpack.c.h.b16 %v3463
    %v4746 = vunpack.c.l.b16 %v3464
    %v4747 = vunpack.c.h.b16 %v3464
    %v4748 = vunpack.c.l.b16 %v3465
    %v4749 = vunpack.c.h.b16 %v3465
    %v4750 = vunpack.c.l.b16 %v3466
    %v4751 = vunpack.c.h.b16 %v3466
    %v4752 = vunpack.c.l.b16 %v3467
    %v4753 = vunpack.c.h.b16 %v3467
    %v4754 = vunpack.c.l.b16 %v3468
    %v4755 = vunpack.c.h.b16 %v3468
    %v4756 = vunpack.c.l.b16 %v3469
    %v4757 = vunpack.c.h.b16 %v3469
    %v4758 = vunpack.c.l.b16 %v3470
    %v4759 = vunpack.c.h.b16 %v3470
    %v4760 = vunpack.c.l.b16 %v3471
    %v4761 = vunpack.c.h.b16 %v3471
    %v4762 = vunpack.c.l.b16 %v3472
    %v4763 = vunpack.c.h.b16 %v3472
    %v4764 = vunpack.c.l.b16 %v3473
    %v4765 = vunpack.c.h.b16 %v3473
    %v4766 = vunpack.c.l.b16 %v3474
    %v4767 = vunpack.c.h.b16 %v3474
    %v4768 = vunpack.c.l.b16 %v3475
    %v4769 = vunpack.c.h.b16 %v3475
    %v4770 = vunpack.c.l.b16 %v3476
    %v4771 = vunpack.c.h.b16 %v3476
    %v4772 = vunpack.c.l.b16 %v3477
    %v4773 = vunpack.c.h.b16 %v3477
    %v4774 = vunpack.c.l.b16 %v3478
    %v4775 = vunpack.c.h.b16 %v3478
    %v4776 = vunpack.c.l.b16 %v3479
    %v4777 = vunpack.c.h.b16 %v3479
    %v4778 = vunpack.c.l.b16 %v3480
    %v4779 = vunpack.c.h.b16 %v3480
    %v4780 = vunpack.c.l.b16 %v3481
    %v4781 = vunpack.c.h.b16 %v3481
    %v4782 = vunpack.c.l.b16 %v3482
    %v4783 = vunpack.c.h.b16 %v3482
    %v4784 = vunpack.c.l.b16 %v3483
    %v4785 = vunpack.c.h.b16 %v3483
    %v4786 = vunpack.c.l.b16 %v3484
    %v4787 = vunpack.c.h.b16 %v3484
    %v4788 = vunpack.c.l.b16 %v3485
    %v4789 = vunpack.c.h.b16 %v3485
    %v4790 = vunpack.c.l.b16 %v3486
    %v4791 = vunpack.c.h.b16 %v3486
    %v4792 = vunpack.c.l.b16 %v3487
    %v4793 = vunpack.c.h.b16 %v3487
    %v4794 = vunpack.c.l.b16 %v3488
    %v4795 = vunpack.c.h.b16 %v3488
    %v4796 = vunpack.c.l.b16 %v3489
    %v4797 = vunpack.c.h.b16 %v3489
    %v4798 = vunpack.c.l.b16 %v3490
    %v4799 = vunpack.c.h.b16 %v3490
    %v4800 = vunpack.c.l.b16 %v3491
    %v4801 = vunpack.c.h.b16 %v3491
    %v4802 = vunpack.c.l.b16 %v3492
    %v4803 = vunpack.c.h.b16 %v3492
    %v4804 = vunpack.c.l.b16 %v3493
    %v4805 = vunpack.c.h.b16 %v3493
    %v4806 = vunpack.c.l.b16 %v3494
    %v4807 = vunpack.c.h.b16 %v3494
    %v4808 = vunpack.c.l.b16 %v3495
    %v4809 = vunpack.c.h.b16 %v3495
    %v4810 = vunpack.c.l.b16 %v3496
    %v4811 = vunpack.c.h.b16 %v3496
    %v4812 = vunpack.c.l.b16 %v3497
    %v4813 = vunpack.c.h.b16 %v3497
    %v4814 = vunpack.c.l.b16 %v3498
    %v4815 = vunpack.c.h.b16 %v3498
    %v4816 = vunpack.c.l.b16 %v3499
    %v4817 = vunpack.c.h.b16 %v3499
    %v4818 = vunpack.c.l.b16 %v3500
    %v4819 = vunpack.c.h.b16 %v3500
    %v4820 = vunpack.c.l.b16 %v3501
    %v4821 = vunpack.c.h.b16 %v3501
    %v4822 = vunpack.c.l.b16 %v3502
    %v4823 = vunpack.c.h.b16 %v3502
    %v4824 = vunpack.c.l.b16 %v3503
    %v4825 = vunpack.c.h.b16 %v3503
    %v4826 = vunpack.c.l.b16 %v3504
    %v4827 = vunpack.c.h.b16 %v3504
    %v4828 = vunpack.c.l.b16 %v3505
    %v4829 = vunpack.c.h.b16 %v3505
    %v4830 = vunpack.c.l.b16 %v3506
    %v4831 = vunpack.c.h.b16 %v3506
    %v4832 = vunpack.c.l.b16 %v3507
    %v4833 = vunpack.c.h.b16 %v3507
    %v4834 = vunpack.c.l.b16 %v3508
    %v4835 = vunpack.c.h.b16 %v3508
    %v4836 = vunpack.c.l.b16 %v3509
    %v4837 = vunpack.c.h.b16 %v3509
    %v4838 = vunpack.c.l.b16 %v3510
    %v4839 = vunpack.c.h.b16 %v3510
    %v4840 = vunpack.c.l.b16 %v3511
    %v4841 = vunpack.c.h.b16 %v3511
    %v4842 = vunpack.c.l.b16 %v3512
    %v4843 = vunpack.c.h.b16 %v3512
    %v4844 = vunpack.c.l.b16 %v3513
    %v4845 = vunpack.c.h.b16 %v3513
    %v4846 = vunpack.c.l.b16 %v3514
    %v4847 = vunpack.c.h.b16 %v3514
    %v4848 = vunpack.c.l.b16 %v3515
    %v4849 = vunpack.c.h.b16 %v3515
    %v4850 = vunpack.c.l.b16 %v3516
    %v4851 = vunpack.c.h.b16 %v3516
    %v4852 = vunpack.c.l.b16 %v3517
    %v4853 = vunpack.c.h.b16 %v3517
    %v4854 = vunpack.c.l.b16 %v3518
    %v4855 = vunpack.c.h.b16 %v3518
    %v4856 = vunpack.c.l.b16 %v3519
    %v4857 = vunpack.c.h.b16 %v3519
    %v4858 = vunpack.c.l.b16 %v3520
    %v4859 = vunpack.c.h.b16 %v3520
    %v4860 = vunpack.c.l.b16 %v3521
    %v4861 = vunpack.c.h.b16 %v3521
    %v4862 = vunpack.c.l.b16 %v3522
    %v4863 = vunpack.c.h.b16 %v3522
    %v4864 = vunpack.c.l.b16 %v3523
    %v4865 = vunpack.c.h.b16 %v3523
    %v4866 = vunpack.c.l.b16 %v3524
    %v4867 = vunpack.c.h.b16 %v3524
    %v4868 = vunpack.c.l.b16 %v3525
    %v4869 = vunpack.c.h.b16 %v3525
    %v4870 = vunpack.c.l.b16 %v3526
    %v4871 = vunpack.c.h.b16 %v3526
    %v4872 = vunpack.c.l.b16 %v3527
    %v4873 = vunpack.c.h.b16 %v3527
    %v4874 = vunpack.c.l.b16 %v3528
    %v4875 = vunpack.c.h.b16 %v3528
    %v4876 = vunpack.c.l.b16 %v3529
    %v4877 = vunpack.c.h.b16 %v3529
    %v4878 = vunpack.c.l.b16 %v3530
    %v4879 = vunpack.c.h.b16 %v3530
    %v4880 = vunpack.c.l.b16 %v3531
    %v4881 = vunpack.c.h.b16 %v3531
    %v4882 = vunpack.c.l.b16 %v3532
    %v4883 = vunpack.c.h.b16 %v3532
    %v4884 = vunpack.c.l.b16 %v3533
    %v4885 = vunpack.c.h.b16 %v3533
    %v4886 = vunpack.c.l.b16 %v3534
    %v4887 = vunpack.c.h.b16 %v3534
    %v4888 = vunpack.c.l.b16 %v3535
    %v4889 = vunpack.c.h.b16 %v3535
    %v4890 = vunpack.c.l.b16 %v3536
    %v4891 = vunpack.c.h.b16 %v3536
    %v4892 = vunpack.c.l.b16 %v3537
    %v4893 = vunpack.c.h.b16 %v3537
    %v4894 = vunpack.c.l.b16 %v3538
    %v4895 = vunpack.c.h.b16 %v3538
    %v4896 = vunpack.c.l.b16 %v3539
    %v4897 = vunpack.c.h.b16 %v3539
    %v4898 = vunpack.c.l.b16 %v3540
    %v4899 = vunpack.c.h.b16 %v3540
    %v4900 = vunpack.c.l.b16 %v3541
    %v4901 = vunpack.c.h.b16 %v3541
    %v4902 = vunpack.c.l.b16 %v3542
    %v4903 = vunpack.c.h.b16 %v3542
    %v4904 = vunpack.c.l.b16 %v3543
    %v4905 = vunpack.c.h.b16 %v3543
    %v4906 = vunpack.c.l.b16 %v3544
    %v4907 = vunpack.c.h.b16 %v3544
    %v4908 = vunpack.c.l.b16 %v3545
    %v4909 = vunpack.c.h.b16 %v3545
    %v4910 = vunpack.c.l.b16 %v3546
    %v4911 = vunpack.c.h.b16 %v3546
    %v4912 = vunpack.c.l.b16 %v3547
    %v4913 = vunpack.c.h.b16 %v3547
    %v4914 = vunpack.c.l.b16 %v3548
    %v4915 = vunpack.c.h.b16 %v3548
    %v4916 = vunpack.c.l.b16 %v3549
    %v4917 = vunpack.c.h.b16 %v3549
    %v4918 = vunpack.c.l.b16 %v3550
    %v4919 = vunpack.c.h.b16 %v3550
    %v4920 = vunpack.c.l.b16 %v3551
    %v4921 = vunpack.c.h.b16 %v3551
    %v4922 = vunpack.c.l.b16 %v3552
    %v4923 = vunpack.c.h.b16 %v3552
    %v4924 = vunpack.c.l.b16 %v3553
    %v4925 = vunpack.c.h.b16 %v3553
    %v4926 = vunpack.c.l.b16 %v3554
    %v4927 = vunpack.c.h.b16 %v3554
    %v4928 = vunpack.c.l.b16 %v3555
    %v4929 = vunpack.c.h.b16 %v3555
    %v4930 = vunpack.c.l.b16 %v3556
    %v4931 = vunpack.c.h.b16 %v3556
    %v4932 = vunpack.c.l.b16 %v3557
    %v4933 = vunpack.c.h.b16 %v3557
    %v4934 = vunpack.c.l.b16 %v3558
    %v4935 = vunpack.c.h.b16 %v3558
    %v4936 = vunpack.c.l.b16 %v3559
    %v4937 = vunpack.c.h.b16 %v3559
    %v4938 = vunpack.c.l.b16 %v3560
    %v4939 = vunpack.c.h.b16 %v3560
    %v4940 = vunpack.c.l.b16 %v3561
    %v4941 = vunpack.c.h.b16 %v3561
    %v4942 = vunpack.c.l.b16 %v3562
    %v4943 = vunpack.c.h.b16 %v3562
    %v4944 = vunpack.c.l.b16 %v3563
    %v4945 = vunpack.c.h.b16 %v3563
    %v4946 = vunpack.c.l.b16 %v3564
    %v4947 = vunpack.c.h.b16 %v3564
    %v4948 = vunpack.c.l.b16 %v3565
    %v4949 = vunpack.c.h.b16 %v3565
    %v4950 = vunpack.c.l.b16 %v3566
    %v4951 = vunpack.c.h.b16 %v3566
    %v4952 = vunpack.c.l.b16 %v3567
    %v4953 = vunpack.c.h.b16 %v3567
    %v4954 = vunpack.c.l.b16 %v3568
    %v4955 = vunpack.c.h.b16 %v3568
    %v4956 = vunpack.c.l.b16 %v3569
    %v4957 = vunpack.c.h.b16 %v3569
    %v4958 = vunpack.c.l.b16 %v3570
    %v4959 = vunpack.c.h.b16 %v3570
    %v4960 = vunpack.c.l.b16 %v3571
    %v4961 = vunpack.c.h.b16 %v3571
    %v4962 = vunpack.c.l.b16 %v3572
    %v4963 = vunpack.c.h.b16 %v3572
    %v4964 = vunpack.c.l.b16 %v3573
    %v4965 = vunpack.c.h.b16 %v3573
    %v4966 = vunpack.c.l.b16 %v3574
    %v4967 = vunpack.c.h.b16 %v3574
    %v4968 = vunpack.c.l.b16 %v3575
    %v4969 = vunpack.c.h.b16 %v3575
    %v4970 = vunpack.c.l.b16 %v3576
    %v4971 = vunpack.c.h.b16 %v3576
    %v4972 = vunpack.c.l.b16 %v3577
    %v4973 = vunpack.c.h.b16 %v3577
    %v4974 = vunpack.c.l.b16 %v3578
    %v4975 = vunpack.c.h.b16 %v3578
    %v4976 = vunpack.c.l.b16 %v3579
    %v4977 = vunpack.c.h.b16 %v3579
    %v4978 = vunpack.c.l.b16 %v3580
    %v4979 = vunpack.c.h.b16 %v3580
    %v4980 = vunpack.c.l.b16 %v3581
    %v4981 = vunpack.c.h.b16 %v3581
    %v4982 = vunpack.c.l.b16 %v3582
    %v4983 = vunpack.c.h.b16 %v3582
    %v4984 = vunpack.c.l.b16 %v3583
    %v4985 = vunpack.c.h.b16 %v3583
    %v4986 = vunpack.c.l.b16 %v3584
    %v4987 = vunpack.c.h.b16 %v3584
    %v4988 = vunpack.c.l.b16 %v3585
    %v4989 = vunpack.c.h.b16 %v3585
    %v4990 = vunpack.c.l.b16 %v3586
    %v4991 = vunpack.c.h.b16 %v3586
    %v4992 = vunpack.c.l.b16 %v3587
    %v4993 = vunpack.c.h.b16 %v3587
    %v4994 = vunpack.c.l.b16 %v3588
    %v4995 = vunpack.c.h.b16 %v3588
    %v4996 = vunpack.c.l.b16 %v3589
    %v4997 = vunpack.c.h.b16 %v3589
    %v4998 = vunpack.c.l.b16 %v3590
    %v4999 = vunpack.c.h.b16 %v3590
    %v5000 = vunpack.c.l.b16 %v3591
    %v5001 = vunpack.c.h.b16 %v3591
    %v5002 = vunpack.c.l.b16 %v3592
    %v5003 = vunpack.c.h.b16 %v3592
    %v5004 = vunpack.c.l.b16 %v3593
    %v5005 = vunpack.c.h.b16 %v3593
    %v5006 = vunpack.c.l.b16 %v3594
    %v5007 = vunpack.c.h.b16 %v3594
    %v5008 = vunpack.c.l.b16 %v3595
    %v5009 = vunpack.c.h.b16 %v3595
    %v5010 = vunpack.c.l.b16 %v3596
    %v5011 = vunpack.c.h.b16 %v3596
    %v5012 = vunpack.c.l.b16 %v3597
    %v5013 = vunpack.c.h.b16 %v3597
    %v5014 = vunpack.c.l.b16 %v3598
    %v5015 = vunpack.c.h.b16 %v3598
    %v5016 = vunpack.c.l.b16 %v3599
    %v5017 = vunpack.c.h.b16 %v3599
    %v5018 = vunpack.c.l.b16 %v3600
    %v5019 = vunpack.c.h.b16 %v3600
    %v5020 = vunpack.c.l.b16 %v3601
    %v5021 = vunpack.c.h.b16 %v3601
    %v5022 = vunpack.c.l.b16 %v3602
    %v5023 = vunpack.c.h.b16 %v3602
    %v5024 = vunpack.c.l.b16 %v3603
    %v5025 = vunpack.c.h.b16 %v3603
    %v5026 = vunpack.c.l.b16 %v3604
    %v5027 = vunpack.c.h.b16 %v3604
    %v5028 = vunpack.c.l.b16 %v3605
    %v5029 = vunpack.c.h.b16 %v3605
    %v5030 = vunpack.c.l.b16 %v3606
    %v5031 = vunpack.c.h.b16 %v3606
    %v5032 = vunpack.c.l.b16 %v3607
    %v5033 = vunpack.c.h.b16 %v3607
    %v5034 = vunpack.c.l.b16 %v3608
    %v5035 = vunpack.c.h.b16 %v3608
    %v5036 = vunpack.c.l.b16 %v3609
    %v5037 = vunpack.c.h.b16 %v3609
    %v5038 = vunpack.c.l.b16 %v3610
    %v5039 = vunpack.c.h.b16 %v3610
    %v5040 = vunpack.c.l.b16 %v3611
    %v5041 = vunpack.c.h.b16 %v3611
    %v5042 = vunpack.c.l.b16 %v3612
    %v5043 = vunpack.c.h.b16 %v3612
    %v5044 = vunpack.c.l.b16 %v3613
    %v5045 = vunpack.c.h.b16 %v3613
    %v5046 = vunpack.c.l.b16 %v3614
    %v5047 = vunpack.c.h.b16 %v3614
    %v5048 = vunpack.c.l.b16 %v3615
    %v5049 = vunpack.c.h.b16 %v3615
    %v5050 = vunpack.c.l.b16 %v3616
    %v5051 = vunpack.c.h.b16 %v3616
    %v5052 = vunpack.c.l.b16 %v3617
    %v5053 = vunpack.c.h.b16 %v3617
    %v5054 = vunpack.c.l.b16 %v3618
    %v5055 = vunpack.c.h.b16 %v3618
    %v5056 = vunpack.c.l.b16 %v3619
    %v5057 = vunpack.c.h.b16 %v3619
    %v5058 = vunpack.c.l.b16 %v3620
    %v5059 = vunpack.c.h.b16 %v3620
    %v5060 = vunpack.c.l.b16 %v3621
    %v5061 = vunpack.c.h.b16 %v3621
    %v5062 = vunpack.c.l.b16 %v3622
    %v5063 = vunpack.c.h.b16 %v3622
    %v5064 = vunpack.c.l.b16 %v3623
    %v5065 = vunpack.c.h.b16 %v3623
    %v5066 = vunpack.c.l.b16 %v3624
    %v5067 = vunpack.c.h.b16 %v3624
    %v5068 = vunpack.c.l.b16 %v3625
    %v5069 = vunpack.c.h.b16 %v3625
    %v5070 = vunpack.c.l.b16 %v3626
    %v5071 = vunpack.c.h.b16 %v3626
    %v5072 = vunpack.c.l.b16 %v3627
    %v5073 = vunpack.c.h.b16 %v3627
    %v5074 = vunpack.c.l.b16 %v3628
    %v5075 = vunpack.c.h.b16 %v3628
    %v5076 = vunpack.c.l.b16 %v3629
    %v5077 = vunpack.c.h.b16 %v3629
    %v5078 = vunpack.c.l.b16 %v3630
    %v5079 = vunpack.c.h.b16 %v3630
    %v5080 = vunpack.c.l.b16 %v3631
    %v5081 = vunpack.c.h.b16 %v3631
    %v5082 = vunpack.c.l.b16 %v3632
    %v5083 = vunpack.c.h.b16 %v3632
    %v5084 = vunpack.c.l.b16 %v3633
    %v5085 = vunpack.c.h.b16 %v3633
    %v5086 = vunpack.c.l.b16 %v3634
    %v5087 = vunpack.c.h.b16 %v3634
    %v5088 = vunpack.c.l.b16 %v3635
    %v5089 = vunpack.c.h.b16 %v3635
    %v5090 = vunpack.c.l.b16 %v3636
    %v5091 = vunpack.c.h.b16 %v3636
    %v5092 = vunpack.c.l.b16 %v3637
    %v5093 = vunpack.c.h.b16 %v3637
    %v5094 = vunpack.c.l.b16 %v3638
    %v5095 = vunpack.c.h.b16 %v3638
    %v5096 = vunpack.c.l.b16 %v3639
    %v5097 = vunpack.c.h.b16 %v3639
    %v5098 = vunpack.c.l.b16 %v3640
    %v5099 = vunpack.c.h.b16 %v3640
    %v5100 = vunpack.c.l.b16 %v3641
    %v5101 = vunpack.c.h.b16 %v3641
    %v5102 = vunpack.c.l.b16 %v3642
    %v5103 = vunpack.c.h.b16 %v3642
    %v5104 = vunpack.c.l.b16 %v3643
    %v5105 = vunpack.c.h.b16 %v3643
    %v5106 = vunpack.c.l.b16 %v3644
    %v5107 = vunpack.c.h.b16 %v3644
    %v5108 = vunpack.c.l.b16 %v3645
    %v5109 = vunpack.c.h.b16 %v3645
    %v5110 = vunpack.c.l.b16 %v3646
    %v5111 = vunpack.c.h.b16 %v3646
    %v5112 = vunpack.c.l.b16 %v3647
    %v5113 = vunpack.c.h.b16 %v3647
    %v5114 = vunpack.c.l.b16 %v3648
    %v5115 = vunpack.c.h.b16 %v3648
    %v5116 = vunpack.c.l.b16 %v3649
    %v5117 = vunpack.c.h.b16 %v3649
    %v5118 = vunpack.c.l.b16 %v3650
    %v5119 = vunpack.c.h.b16 %v3650
    %v5120 = vunpack.c.l.b16 %v3651
    %v5121 = vunpack.c.h.b16 %v3651
    %v5122 = vunpack.c.l.b16 %v3652
    %v5123 = vunpack.c.h.b16 %v3652
    %v5124 = vunpack.c.l.b16 %v3653
    %v5125 = vunpack.c.h.b16 %v3653
    %v5126 = vunpack.c.l.b16 %v3654
    %v5127 = vunpack.c.h.b16 %v3654
    %v5128 = vunpack.c.l.b16 %v3655
    %v5129 = vunpack.c.h.b16 %v3655
    %v5130 = vunpack.c.l.b16 %v3656
    %v5131 = vunpack.c.h.b16 %v3656
    %v5132 = vunpack.c.l.b16 %v3657
    %v5133 = vunpack.c.h.b16 %v3657
    %v5134 = vunpack.c.l.b16 %v3658
    %v5135 = vunpack.c.h.b16 %v3658
    %v5136 = vunpack.c.l.b16 %v3659
    %v5137 = vunpack.c.h.b16 %v3659
    %v5138 = vunpack.c.l.b16 %v3660
    %v5139 = vunpack.c.h.b16 %v3660
    %v5140 = vunpack.c.l.b16 %v3661
    %v5141 = vunpack.c.h.b16 %v3661
    %v5142 = vunpack.c.l.b16 %v3662
    %v5143 = vunpack.c.h.b16 %v3662
    %v5144 = vunpack.c.l.b16 %v3663
    %v5145 = vunpack.c.h.b16 %v3663
    %v5146 = vunpack.c.l.b16 %v3664
    %v5147 = vunpack.c.h.b16 %v3664
    %v5148 = vunpack.c.l.b16 %v3665
    %v5149 = vunpack.c.h.b16 %v3665
    %v5150 = vunpack.c.l.b16 %v3666
    %v5151 = vunpack.c.h.b16 %v3666
    %v5152 = vunpack.c.l.b16 %v3667
    %v5153 = vunpack.c.h.b16 %v3667
    %v5154 = vunpack.c.l.b16 %v3668
    %v5155 = vunpack.c.h.b16 %v3668
    %v5156 = vunpack.c.l.b16 %v3669
    %v5157 = vunpack.c.h.b16 %v3669
    %v5158 = vunpack.c.l.b16 %v3670
    %v5159 = vunpack.c.h.b16 %v3670
    %v5160 = vunpack.c.l.b16 %v3671
    %v5161 = vunpack.c.h.b16 %v3671
    %v5162 = vunpack.c.l.b16 %v3672
    %v5163 = vunpack.c.h.b16 %v3672
    %v5164 = vunpack.c.l.b16 %v3673
    %v5165 = vunpack.c.h.b16 %v3673
    %v5166 = vunpack.c.l.b16 %v3674
    %v5167 = vunpack.c.h.b16 %v3674
    %v5168 = vunpack.c.l.b16 %v3675
    %v5169 = vunpack.c.h.b16 %v3675
    %v5170 = vunpack.c.l.b16 %v3676
    %v5171 = vunpack.c.h.b16 %v3676
    %v5172 = vunpack.c.l.b16 %v3677
    %v5173 = vunpack.c.h.b16 %v3677
    %v5174 = vunpack.c.l.b16 %v3678
    %v5175 = vunpack.c.h.b16 %v3678
    %v5176 = vunpack.c.l.b16 %v3679
    %v5177 = vunpack.c.h.b16 %v3679
    %v5178 = vunpack.c.l.b16 %v3680
    %v5179 = vunpack.c.h.b16 %v3680
    %v5180 = vunpack.c.l.b16 %v3681
    %v5181 = vunpack.c.h.b16 %v3681
    %v5182 = vunpack.c.l.b16 %v3682
    %v5183 = vunpack.c.h.b16 %v3682
    %v5184 = vunpack.c.l.b16 %v3683
    %v5185 = vunpack.c.h.b16 %v3683
    %v5186 = vunpack.c.l.b16 %v3684
    %v5187 = vunpack.c.h.b16 %v3684
    %v5188 = vunpack.c.l.b16 %v3685
    %v5189 = vunpack.c.h.b16 %v3685
    %v5190 = vunpack.c.l.b16 %v3686
    %v5191 = vunpack.c.h.b16 %v3686
    %v5192 = vunpack.c.l.b16 %v3687
    %v5193 = vunpack.c.h.b16 %v3687
    %v5194 = vunpack.c.l.b16 %v3688
    %v5195 = vunpack.c.h.b16 %v3688
    %v5196 = vunpack.c.l.b16 %v3689
    %v5197 = vunpack.c.h.b16 %v3689
    %v5198 = vunpack.c.l.b16 %v3690
    %v5199 = vunpack.c.h.b16 %v3690
    %v5200 = vunpack.c.l.b16 %v3691
    %v5201 = vunpack.c.h.b16 %v3691
    %v5202 = vunpack.c.l.b16 %v3692
    %v5203 = vunpack.c.h.b16 %v3692
    %v5204 = vunpack.c.l.b16 %v3693
    %v5205 = vunpack.c.h.b16 %v3693
    %v5206 = vunpack.c.l.b16 %v3694
    %v5207 = vunpack.c.h.b16 %v3694
    %v5208 = vunpack.c.l.b16 %v3695
    %v5209 = vunpack.c.h.b16 %v3695
    %v5210 = vunpack.c.l.b16 %v3696
    %v5211 = vunpack.c.h.b16 %v3696
    %v5212 = vunpack.c.l.b16 %v3697
    %v5213 = vunpack.c.h.b16 %v3697
    %v5214 = vunpack.c.l.b16 %v3698
    %v5215 = vunpack.c.h.b16 %v3698
    %v5216 = vunpack.c.l.b16 %v3699
    %v5217 = vunpack.c.h.b16 %v3699
    %v5218 = vunpack.c.l.b16 %v3700
    %v5219 = vunpack.c.h.b16 %v3700
    %v5220 = vunpack.c.l.b16 %v3701
    %v5221 = vunpack.c.h.b16 %v3701
    %v5222 = vunpack.c.l.b16 %v3702
    %v5223 = vunpack.c.h.b16 %v3702
    %v5224 = vunpack.c.l.b16 %v3703
    %v5225 = vunpack.c.h.b16 %v3703
    %v5226 = vunpack.c.l.b16 %v3704
    %v5227 = vunpack.c.h.b16 %v3704
    %v5228 = vunpack.c.l.b16 %v3705
    %v5229 = vunpack.c.h.b16 %v3705
    %v5230 = vunpack.c.l.b16 %v3706
    %v5231 = vunpack.c.h.b16 %v3706
    %v5232 = vunpack.c.l.b16 %v3707
    %v5233 = vunpack.c.h.b16 %v3707
    %v5234 = vunpack.c.l.b16 %v3708
    %v5235 = vunpack.c.h.b16 %v3708
    %v5236 = vunpack.c.l.b16 %v3709
    %v5237 = vunpack.c.h.b16 %v3709
    %v5238 = vunpack.c.l.b16 %v3710
    %v5239 = vunpack.c.h.b16 %v3710
    %v5240 = vunpack.c.l.b16 %v3711
    %v5241 = vunpack.c.h.b16 %v3711
    %v5242 = vunpack.c.l.b16 %v3712
    %v5243 = vunpack.c.h.b16 %v3712
    %v5244 = vunpack.c.l.b16 %v3713
    %v5245 = vunpack.c.h.b16 %v3713
    %v5246 = vunpack.c.l.b16 %v3714
    %v5247 = vunpack.c.h.b16 %v3714
    %v5248 = vunpack.c.l.b16 %v3715
    %v5249 = vunpack.c.h.b16 %v3715
    %v5250 = vunpack.c.l.b16 %v3716
    %v5251 = vunpack.c.h.b16 %v3716
    %v5252 = vunpack.c.l.b16 %v3717
    %v5253 = vunpack.c.h.b16 %v3717
    %v5254 = vunpack.c.l.b16 %v3718
    %v5255 = vunpack.c.h.b16 %v3718
    %v5256 = vunpack.c.l.b16 %v3719
    %v5257 = vunpack.c.h.b16 %v3719
    %v5258 = vunpack.c.l.b16 %v3720
    %v5259 = vunpack.c.h.b16 %v3720
    %v5260 = vunpack.c.l.b16 %v3721
    %v5261 = vunpack.c.h.b16 %v3721
    %v5262 = vunpack.c.l.b16 %v3722
    %v5263 = vunpack.c.h.b16 %v3722
    %v5264 = vunpack.c.l.b16 %v3723
    %v5265 = vunpack.c.h.b16 %v3723
    %v5266 = vunpack.c.l.b16 %v3724
    %v5267 = vunpack.c.h.b16 %v3724
    %v5268 = vunpack.c.l.b16 %v3725
    %v5269 = vunpack.c.h.b16 %v3725
    %v5270 = vunpack.c.l.b16 %v3726
    %v5271 = vunpack.c.h.b16 %v3726
    %v5272 = vunpack.c.l.b16 %v3727
    %v5273 = vunpack.c.h.b16 %v3727
    %v5274 = vunpack.c.l.b16 %v3728
    %v5275 = vunpack.c.h.b16 %v3728
    %v5276 = vunpack.c.l.b16 %v3729
    %v5277 = vunpack.c.h.b16 %v3729
    %v5278 = vunpack.c.l.b16 %v3730
    %v5279 = vunpack.c.h.b16 %v3730
    %v5280 = vunpack.c.l.b16 %v3731
    %v5281 = vunpack.c.h.b16 %v3731
    %v5282 = vunpack.c.l.b16 %v3732
    %v5283 = vunpack.c.h.b16 %v3732
    %v5284 = vunpack.c.l.b16 %v3733
    %v5285 = vunpack.c.h.b16 %v3733
    %v5286 = vunpack.c.l.b16 %v3734
    %v5287 = vunpack.c.h.b16 %v3734
    %v5288 = vunpack.c.l.b16 %v3735
    %v5289 = vunpack.c.h.b16 %v3735
    %v5290 = vunpack.c.l.b16 %v3736
    %v5291 = vunpack.c.h.b16 %v3736
    %v5292 = vunpack.c.l.b16 %v3737
    %v5293 = vunpack.c.h.b16 %v3737
    %v5294 = vunpack.c.l.b16 %v3738
    %v5295 = vunpack.c.h.b16 %v3738
    %v5296 = vunpack.c.l.b16 %v3739
    %v5297 = vunpack.c.h.b16 %v3739
    %v5298 = vunpack.c.l.b16 %v3740
    %v5299 = vunpack.c.h.b16 %v3740
    %v5300 = vunpack.c.l.b16 %v3741
    %v5301 = vunpack.c.h.b16 %v3741
    %v5302 = vunpack.c.l.b16 %v3742
    %v5303 = vunpack.c.h.b16 %v3742
    %v5304 = vunpack.c.l.b16 %v3743
    %v5305 = vunpack.c.h.b16 %v3743
    %v5306 = vunpack.c.l.b16 %v3744
    %v5307 = vunpack.c.h.b16 %v3744
    %v5308 = vunpack.c.l.b16 %v3745
    %v5309 = vunpack.c.h.b16 %v3745
    %v5310 = vunpack.c.l.b16 %v3746
    %v5311 = vunpack.c.h.b16 %v3746
    %v5312 = vunpack.c.l.b16 %v3747
    %v5313 = vunpack.c.h.b16 %v3747
    %v5314 = vunpack.c.l.b16 %v3748
    %v5315 = vunpack.c.h.b16 %v3748
    %v5316 = vunpack.c.l.b16 %v3749
    %v5317 = vunpack.c.h.b16 %v3749
    %v5318 = vunpack.c.l.b16 %v3750
    %v5319 = vunpack.c.h.b16 %v3750
    %v5320 = vunpack.c.l.b16 %v3751
    %v5321 = vunpack.c.h.b16 %v3751
    %v5322 = vunpack.c.l.b16 %v3752
    %v5323 = vunpack.c.h.b16 %v3752
    %v5324 = vunpack.c.l.b16 %v3753
    %v5325 = vunpack.c.h.b16 %v3753
    %v5326 = vunpack.c.l.b16 %v3754
    %v5327 = vunpack.c.h.b16 %v3754
    %v5328 = vunpack.c.l.b16 %v3755
    %v5329 = vunpack.c.h.b16 %v3755
    %v5330 = vunpack.c.l.b16 %v3756
    %v5331 = vunpack.c.h.b16 %v3756
    %v5332 = vunpack.c.l.b16 %v3757
    %v5333 = vunpack.c.h.b16 %v3757
    %v5334 = vunpack.c.l.b16 %v3758
    %v5335 = vunpack.c.h.b16 %v3758
    %v5336 = vunpack.c.l.b16 %v3759
    %v5337 = vunpack.c.h.b16 %v3759
    %v5338 = vpack.c.b16 %v4322, %v4314
    %v5339 = vpack.c.b16 %v4323, %v4315
    %v5340 = vpack.c.b16 %v4324, %v4316
    %v5341 = vpack.c.b16 %v4325, %v4317
    %v5342 = vpack.c.b16 %v4326, %v4318
    %v5343 = vpack.c.b16 %v4327, %v4319
    %v5344 = vpack.c.b16 %v4328, %v4320
    %v5345 = vpack.c.b16 %v4329, %v4321
    %v5346 = vpack.c.b16 %v4338, %v4330
    %v5347 = vpack.c.b16 %v4339, %v4331
    %v5348 = vpack.c.b16 %v4340, %v4332
    %v5349 = vpack.c.b16 %v4341, %v4333
    %v5350 = vpack.c.b16 %v4342, %v4334
    %v5351 = vpack.c.b16 %v4343, %v4335
    %v5352 = vpack.c.b16 %v4344, %v4336
    %v5353 = vpack.c.b16 %v4345, %v4337
    %v5354 = vpack.c.b16 %v4354, %v4346
    %v5355 = vpack.c.b16 %v4355, %v4347
    %v5356 = vpack.c.b16 %v4356, %v4348
    %v5357 = vpack.c.b16 %v4357, %v4349
    %v5358 = vpack.c.b16 %v4358, %v4350
    %v5359 = vpack.c.b16 %v4359, %v4351
    %v5360 = vpack.c.b16 %v4360, %v4352
    %v5361 = vpack.c.b16 %v4361, %v4353
    %v5362 = vpack.c.b16 %v4370, %v4362
    %v5363 = vpack.c.b16 %v4371, %v4363
    %v5364 = vpack.c.b16 %v4372, %v4364
    %v5365 = vpack.c.b16 %v4373, %v4365
    %v5366 = vpack.c.b16 %v4374, %v4366
    %v5367 = vpack.c.b16 %v4375, %v4367
    %v5368 = vpack.c.b16 %v4376, %v4368
    %v5369 = vpack.c.b16 %v4377, %v4369
    %v5370 = vpack.c.b16 %v4386, %v4378
    %v5371 = vpack.c.b16 %v4387, %v4379
    %v5372 = vpack.c.b16 %v4388, %v4380
    %v5373 = vpack.c.b16 %v4389, %v4381
    %v5374 = vpack.c.b16 %v4390, %v4382
    %v5375 = vpack.c.b16 %v4391, %v4383
    %v5376 = vpack.c.b16 %v4392, %v4384
    %v5377 = vpack.c.b16 %v4393, %v4385
    %v5378 = vpack.c.b16 %v4402, %v4394
    %v5379 = vpack.c.b16 %v4403, %v4395
    %v5380 = vpack.c.b16 %v4404, %v4396
    %v5381 = vpack.c.b16 %v4405, %v4397
    %v5382 = vpack.c.b16 %v4406, %v4398
    %v5383 = vpack.c.b16 %v4407, %v4399
    %v5384 = vpack.c.b16 %v4408, %v4400
    %v5385 = vpack.c.b16 %v4409, %v4401
    %v5386 = vpack.c.b16 %v4418, %v4410
    %v5387 = vpack.c.b16 %v4419, %v4411
    %v5388 = vpack.c.b16 %v4420, %v4412
    %v5389 = vpack.c.b16 %v4421, %v4413
    %v5390 = vpack.c.b16 %v4422, %v4414
    %v5391 = vpack.c.b16 %v4423, %v4415
    %v5392 = vpack.c.b16 %v4424, %v4416
    %v5393 = vpack.c.b16 %v4425, %v4417
    %v5394 = vpack.c.b16 %v4434, %v4426
    %v5395 = vpack.c.b16 %v4435, %v4427
    %v5396 = vpack.c.b16 %v4436, %v4428
    %v5397 = vpack.c.b16 %v4437, %v4429
    %v5398 = vpack.c.b16 %v4438, %v4430
    %v5399 = vpack.c.b16 %v4439, %v4431
    %v5400 = vpack.c.b16 %v4440, %v4432
    %v5401 = vpack.c.b16 %v4441, %v4433
    %v5402 = vpack.c.b16 %v4450, %v4442
    %v5403 = vpack.c.b16 %v4451, %v4443
    %v5404 = vpack.c.b16 %v4452, %v4444
    %v5405 = vpack.c.b16 %v4453, %v4445
    %v5406 = vpack.c.b16 %v4454, %v4446
    %v5407 = vpack.c.b16 %v4455, %v4447
    %v5408 = vpack.c.b16 %v4456, %v4448
    %v5409 = vpack.c.b16 %v4457, %v4449
    %v5410 = vpack.c.b16 %v4466, %v4458
    %v5411 = vpack.c.b16 %v4467, %v4459
    %v5412 = vpack.c.b16 %v4468, %v4460
    %v5413 = vpack.c.b16 %v4469, %v4461
    %v5414 = vpack.c.b16 %v4470, %v4462
    %v5415 = vpack.c.b16 %v4471, %v4463
    %v5416 = vpack.c.b16 %v4472, %v4464
    %v5417 = vpack.c.b16 %v4473, %v4465
    %v5418 = vpack.c.b16 %v4482, %v4474
    %v5419 = vpack.c.b16 %v4483, %v4475
    %v5420 = vpack.c.b16 %v4484, %v4476
    %v5421 = vpack.c.b16 %v4485, %v4477
    %v5422 = vpack.c.b16 %v4486, %v4478
    %v5423 = vpack.c.b16 %v4487, %v4479
    %v5424 = vpack.c.b16 %v4488, %v4480
    %v5425 = vpack.c.b16 %v4489, %v4481
    %v5426 = vpack.c.b16 %v4498, %v4490
    %v5427 = vpack.c.b16 %v4499, %v4491
    %v5428 = vpack.c.b16 %v4500, %v4492
    %v5429 = vpack.c.b16 %v4501, %v4493
    %v5430 = vpack.c.b16 %v4502, %v4494
    %v5431 = vpack.c.b16 %v4503, %v4495
    %v5432 = vpack.c.b16 %v4504, %v4496
    %v5433 = vpack.c.b16 %v4505, %v4497
    %v5434 = vpack.c.b16 %v4514, %v4506
    %v5435 = vpack.c.b16 %v4515, %v4507
    %v5436 = vpack.c.b16 %v4516, %v4508
    %v5437 = vpack.c.b16 %v4517, %v4509
    %v5438 = vpack.c.b16 %v4518, %v4510
    %v5439 = vpack.c.b16 %v4519, %v4511
    %v5440 = vpack.c.b16 %v4520, %v4512
    %v5441 = vpack.c.b16 %v4521, %v4513
    %v5442 = vpack.c.b16 %v4530, %v4522
    %v5443 = vpack.c.b16 %v4531, %v4523
    %v5444 = vpack.c.b16 %v4532, %v4524
    %v5445 = vpack.c.b16 %v4533, %v4525
    %v5446 = vpack.c.b16 %v4534, %v4526
    %v5447 = vpack.c.b16 %v4535, %v4527
    %v5448 = vpack.c.b16 %v4536, %v4528
    %v5449 = vpack.c.b16 %v4537, %v4529
    %v5450 = vpack.c.b16 %v4546, %v4538
    %v5451 = vpack.c.b16 %v4547, %v4539
    %v5452 = vpack.c.b16 %v4548, %v4540
    %v5453 = vpack.c.b16 %v4549, %v4541
    %v5454 = vpack.c.b16 %v4550, %v4542
    %v5455 = vpack.c.b16 %v4551, %v4543
    %v5456 = vpack.c.b16 %v4552, %v4544
    %v5457 = vpack.c.b16 %v4553, %v4545
    %v5458 = vpack.c.b16 %v4562, %v4554
    %v5459 = vpack.c.b16 %v4563, %v4555
    %v5460 = vpack.c.b16 %v4564, %v4556
    %v5461 = vpack.c.b16 %v4565, %v4557
    %v5462 = vpack.c.b16 %v4566, %v4558
    %v5463 = vpack.c.b16 %v4567, %v4559
    %v5464 = vpack.c.b16 %v4568, %v4560
    %v5465 = vpack.c.b16 %v4569, %v4561
    %v5466 = vpack.c.b16 %v4578, %v4570
    %v5467 = vpack.c.b16 %v4579, %v4571
    %v5468 = vpack.c.b16 %v4580, %v4572
    %v5469 = vpack.c.b16 %v4581, %v4573
    %v5470 = vpack.c.b16 %v4582, %v4574
    %v5471 = vpack.c.b16 %v4583, %v4575
    %v5472 = vpack.c.b16 %v4584, %v4576
    %v5473 = vpack.c.b16 %v4585, %v4577
    %v5474 = vpack.c.b16 %v4594, %v4586
    %v5475 = vpack.c.b16 %v4595, %v4587
    %v5476 = vpack.c.b16 %v4596, %v4588
    %v5477 = vpack.c.b16 %v4597, %v4589
    %v5478 = vpack.c.b16 %v4598, %v4590
    %v5479 = vpack.c.b16 %v4599, %v4591
    %v5480 = vpack.c.b16 %v4600, %v4592
    %v5481 = vpack.c.b16 %v4601, %v4593
    %v5482 = vpack.c.b16 %v4610, %v4602
    %v5483 = vpack.c.b16 %v4611, %v4603
    %v5484 = vpack.c.b16 %v4612, %v4604
    %v5485 = vpack.c.b16 %v4613, %v4605
    %v5486 = vpack.c.b16 %v4614, %v4606
    %v5487 = vpack.c.b16 %v4615, %v4607
    %v5488 = vpack.c.b16 %v4616, %v4608
    %v5489 = vpack.c.b16 %v4617, %v4609
    %v5490 = vpack.c.b16 %v4626, %v4618
    %v5491 = vpack.c.b16 %v4627, %v4619
    %v5492 = vpack.c.b16 %v4628, %v4620
    %v5493 = vpack.c.b16 %v4629, %v4621
    %v5494 = vpack.c.b16 %v4630, %v4622
    %v5495 = vpack.c.b16 %v4631, %v4623
    %v5496 = vpack.c.b16 %v4632, %v4624
    %v5497 = vpack.c.b16 %v4633, %v4625
    %v5498 = vpack.c.b16 %v4642, %v4634
    %v5499 = vpack.c.b16 %v4643, %v4635
    %v5500 = vpack.c.b16 %v4644, %v4636
    %v5501 = vpack.c.b16 %v4645, %v4637
    %v5502 = vpack.c.b16 %v4646, %v4638
    %v5503 = vpack.c.b16 %v4647, %v4639
    %v5504 = vpack.c.b16 %v4648, %v4640
    %v5505 = vpack.c.b16 %v4649, %v4641
    %v5506 = vpack.c.b16 %v4658, %v4650
    %v5507 = vpack.c.b16 %v4659, %v4651
    %v5508 = vpack.c.b16 %v4660, %v4652
    %v5509 = vpack.c.b16 %v4661, %v4653
    %v5510 = vpack.c.b16 %v4662, %v4654
    %v5511 = vpack.c.b16 %v4663, %v4655
    %v5512 = vpack.c.b16 %v4664, %v4656
    %v5513 = vpack.c.b16 %v4665, %v4657
    %v5514 = vpack.c.b16 %v4674, %v4666
    %v5515 = vpack.c.b16 %v4675, %v4667
    %v5516 = vpack.c.b16 %v4676, %v4668
    %v5517 = vpack.c.b16 %v4677, %v4669
    %v5518 = vpack.c.b16 %v4678, %v4670
    %v5519 = vpack.c.b16 %v4679, %v4671
    %v5520 = vpack.c.b16 %v4680, %v4672
    %v5521 = vpack.c.b16 %v4681, %v4673
    %v5522 = vpack.c.b16 %v4690, %v4682
    %v5523 = vpack.c.b16 %v4691, %v4683
    %v5524 = vpack.c.b16 %v4692, %v4684
    %v5525 = vpack.c.b16 %v4693, %v4685
    %v5526 = vpack.c.b16 %v4694, %v4686
    %v5527 = vpack.c.b16 %v4695, %v4687
    %v5528 = vpack.c.b16 %v4696, %v4688
    %v5529 = vpack.c.b16 %v4697, %v4689
    %v5530 = vpack.c.b16 %v4706, %v4698
    %v5531 = vpack.c.b16 %v4707, %v4699
    %v5532 = vpack.c.b16 %v4708, %v4700
    %v5533 = vpack.c.b16 %v4709, %v4701
    %v5534 = vpack.c.b16 %v4710, %v4702
    %v5535 = vpack.c.b16 %v4711, %v4703
    %v5536 = vpack.c.b16 %v4712, %v4704
    %v5537 = vpack.c.b16 %v4713, %v4705
    %v5538 = vpack.c.b16 %v4722, %v4714
    %v5539 = vpack.c.b16 %v4723, %v4715
    %v5540 = vpack.c.b16 %v4724, %v4716
    %v5541 = vpack.c.b16 %v4725, %v4717
    %v5542 = vpack.c.b16 %v4726, %v4718
    %v5543 = vpack.c.b16 %v4727, %v4719
    %v5544 = vpack.c.b16 %v4728, %v4720
    %v5545 = vpack.c.b16 %v4729, %v4721
    %v5546 = vpack.c.b16 %v4738, %v4730
    %v5547 = vpack.c.b16 %v4739, %v4731
    %v5548 = vpack.c.b16 %v4740, %v4732
    %v5549 = vpack.c.b16 %v4741, %v4733
    %v5550 = vpack.c.b16 %v4742, %v4734
    %v5551 = vpack.c.b16 %v4743, %v4735
    %v5552 = vpack.c.b16 %v4744, %v4736
    %v5553 = vpack.c.b16 %v4745, %v4737
    %v5554 = vpack.c.b16 %v4754, %v4746
    %v5555 = vpack.c.b16 %v4755, %v4747
    %v5556 = vpack.c.b16 %v4756, %v4748
    %v5557 = vpack.c.b16 %v4757, %v4749
    %v5558 = vpack.c.b16 %v4758, %v4750
    %v5559 = vpack.c.b16 %v4759, %v4751
    %v5560 = vpack.c.b16 %v4760, %v4752
    %v5561 = vpack.c.b16 %v4761, %v4753
    %v5562 = vpack.c.b16 %v4770, %v4762
    %v5563 = vpack.c.b16 %v4771, %v4763
    %v5564 = vpack.c.b16 %v4772, %v4764
    %v5565 = vpack.c.b16 %v4773, %v4765
    %v5566 = vpack.c.b16 %v4774, %v4766
    %v5567 = vpack.c.b16 %v4775, %v4767
    %v5568 = vpack.c.b16 %v4776, %v4768
    %v5569 = vpack.c.b16 %v4777, %v4769
    %v5570 = vpack.c.b16 %v4786, %v4778
    %v5571 = vpack.c.b16 %v4787, %v4779
    %v5572 = vpack.c.b16 %v4788, %v4780
    %v5573 = vpack.c.b16 %v4789, %v4781
    %v5574 = vpack.c.b16 %v4790, %v4782
    %v5575 = vpack.c.b16 %v4791, %v4783
    %v5576 = vpack.c.b16 %v4792, %v4784
    %v5577 = vpack.c.b16 %v4793, %v4785
    %v5578 = vpack.c.b16 %v4802, %v4794
    %v5579 = vpack.c.b16 %v4803, %v4795
    %v5580 = vpack.c.b16 %v4804, %v4796
    %v5581 = vpack.c.b16 %v4805, %v4797
    %v5582 = vpack.c.b16 %v4806, %v4798
    %v5583 = vpack.c.b16 %v4807, %v4799
    %v5584 = vpack.c.b16 %v4808, %v4800
    %v5585 = vpack.c.b16 %v4809, %v4801
    %v5586 = vpack.c.b16 %v4818, %v4810
    %v5587 = vpack.c.b16 %v4819, %v4811
    %v5588 = vpack.c.b16 %v4820, %v4812
    %v5589 = vpack.c.b16 %v4821, %v4813
    %v5590 = vpack.c.b16 %v4822, %v4814
    %v5591 = vpack.c.b16 %v4823, %v4815
    %v5592 = vpack.c.b16 %v4824, %v4816
    %v5593 = vpack.c.b16 %v4825, %v4817
    %v5594 = vpack.c.b16 %v4834, %v4826
    %v5595 = vpack.c.b16 %v4835, %v4827
    %v5596 = vpack.c.b16 %v4836, %v4828
    %v5597 = vpack.c.b16 %v4837, %v4829
    %v5598 = vpack.c.b16 %v4838, %v4830
    %v5599 = vpack.c.b16 %v4839, %v4831
    %v5600 = vpack.c.b16 %v4840, %v4832
    %v5601 = vpack.c.b16 %v4841, %v4833
    %v5602 = vpack.c.b16 %v4850, %v4842
    %v5603 = vpack.c.b16 %v4851, %v4843
    %v5604 = vpack.c.b16 %v4852, %v4844
    %v5605 = vpack.c.b16 %v4853, %v4845
    %v5606 = vpack.c.b16 %v4854, %v4846
    %v5607 = vpack.c.b16 %v4855, %v4847
    %v5608 = vpack.c.b16 %v4856, %v4848
    %v5609 = vpack.c.b16 %v4857, %v4849
    %v5610 = vpack.c.b16 %v4866, %v4858
    %v5611 = vpack.c.b16 %v4867, %v4859
    %v5612 = vpack.c.b16 %v4868, %v4860
    %v5613 = vpack.c.b16 %v4869, %v4861
    %v5614 = vpack.c.b16 %v4870, %v4862
    %v5615 = vpack.c.b16 %v4871, %v4863
    %v5616 = vpack.c.b16 %v4872, %v4864
    %v5617 = vpack.c.b16 %v4873, %v4865
    %v5618 = vpack.c.b16 %v4882, %v4874
    %v5619 = vpack.c.b16 %v4883, %v4875
    %v5620 = vpack.c.b16 %v4884, %v4876
    %v5621 = vpack.c.b16 %v4885, %v4877
    %v5622 = vpack.c.b16 %v4886, %v4878
    %v5623 = vpack.c.b16 %v4887, %v4879
    %v5624 = vpack.c.b16 %v4888, %v4880
    %v5625 = vpack.c.b16 %v4889, %v4881
    %v5626 = vpack.c.b16 %v4898, %v4890
    %v5627 = vpack.c.b16 %v4899, %v4891
    %v5628 = vpack.c.b16 %v4900, %v4892
    %v5629 = vpack.c.b16 %v4901, %v4893
    %v5630 = vpack.c.b16 %v4902, %v4894
    %v5631 = vpack.c.b16 %v4903, %v4895
    %v5632 = vpack.c.b16 %v4904, %v4896
    %v5633 = vpack.c.b16 %v4905, %v4897
    %v5634 = vpack.c.b16 %v4914, %v4906
    %v5635 = vpack.c.b16 %v4915, %v4907
    %v5636 = vpack.c.b16 %v4916, %v4908
    %v5637 = vpack.c.b16 %v4917, %v4909
    %v5638 = vpack.c.b16 %v4918, %v4910
    %v5639 = vpack.c.b16 %v4919, %v4911
    %v5640 = vpack.c.b16 %v4920, %v4912
    %v5641 = vpack.c.b16 %v4921, %v4913
    %v5642 = vpack.c.b16 %v4930, %v4922
    %v5643 = vpack.c.b16 %v4931, %v4923
    %v5644 = vpack.c.b16 %v4932, %v4924
    %v5645 = vpack.c.b16 %v4933, %v4925
    %v5646 = vpack.c.b16 %v4934, %v4926
    %v5647 = vpack.c.b16 %v4935, %v4927
    %v5648 = vpack.c.b16 %v4936, %v4928
    %v5649 = vpack.c.b16 %v4937, %v4929
    %v5650 = vpack.c.b16 %v4946, %v4938
    %v5651 = vpack.c.b16 %v4947, %v4939
    %v5652 = vpack.c.b16 %v4948, %v4940
    %v5653 = vpack.c.b16 %v4949, %v4941
    %v5654 = vpack.c.b16 %v4950, %v4942
    %v5655 = vpack.c.b16 %v4951, %v4943
    %v5656 = vpack.c.b16 %v4952, %v4944
    %v5657 = vpack.c.b16 %v4953, %v4945
    %v5658 = vpack.c.b16 %v4962, %v4954
    %v5659 = vpack.c.b16 %v4963, %v4955
    %v5660 = vpack.c.b16 %v4964, %v4956
    %v5661 = vpack.c.b16 %v4965, %v4957
    %v5662 = vpack.c.b16 %v4966, %v4958
    %v5663 = vpack.c.b16 %v4967, %v4959
    %v5664 = vpack.c.b16 %v4968, %v4960
    %v5665 = vpack.c.b16 %v4969, %v4961
    %v5666 = vpack.c.b16 %v4978, %v4970
    %v5667 = vpack.c.b16 %v4979, %v4971
    %v5668 = vpack.c.b16 %v4980, %v4972
    %v5669 = vpack.c.b16 %v4981, %v4973
    %v5670 = vpack.c.b16 %v4982, %v4974
    %v5671 = vpack.c.b16 %v4983, %v4975
    %v5672 = vpack.c.b16 %v4984, %v4976
    %v5673 = vpack.c.b16 %v4985, %v4977
    %v5674 = vpack.c.b16 %v4994, %v4986
    %v5675 = vpack.c.b16 %v4995, %v4987
    %v5676 = vpack.c.b16 %v4996, %v4988
    %v5677 = vpack.c.b16 %v4997, %v4989
    %v5678 = vpack.c.b16 %v4998, %v4990
    %v5679 = vpack.c.b16 %v4999, %v4991
    %v5680 = vpack.c.b16 %v5000, %v4992
    %v5681 = vpack.c.b16 %v5001, %v4993
    %v5682 = vpack.c.b16 %v5010, %v5002
    %v5683 = vpack.c.b16 %v5011, %v5003
    %v5684 = vpack.c.b16 %v5012, %v5004
    %v5685 = vpack.c.b16 %v5013, %v5005
    %v5686 = vpack.c.b16 %v5014, %v5006
    %v5687 = vpack.c.b16 %v5015, %v5007
    %v5688 = vpack.c.b16 %v5016, %v5008
    %v5689 = vpack.c.b16 %v5017, %v5009
    %v5690 = vpack.c.b16 %v5026, %v5018
    %v5691 = vpack.c.b16 %v5027, %v5019
    %v5692 = vpack.c.b16 %v5028, %v5020
    %v5693 = vpack.c.b16 %v5029, %v5021
    %v5694 = vpack.c.b16 %v5030, %v5022
    %v5695 = vpack.c.b16 %v5031, %v5023
    %v5696 = vpack.c.b16 %v5032, %v5024
    %v5697 = vpack.c.b16 %v5033, %v5025
    %v5698 = vpack.c.b16 %v5042, %v5034
    %v5699 = vpack.c.b16 %v5043, %v5035
    %v5700 = vpack.c.b16 %v5044, %v5036
    %v5701 = vpack.c.b16 %v5045, %v5037
    %v5702 = vpack.c.b16 %v5046, %v5038
    %v5703 = vpack.c.b16 %v5047, %v5039
    %v5704 = vpack.c.b16 %v5048, %v5040
    %v5705 = vpack.c.b16 %v5049, %v5041
    %v5706 = vpack.c.b16 %v5058, %v5050
    %v5707 = vpack.c.b16 %v5059, %v5051
    %v5708 = vpack.c.b16 %v5060, %v5052
    %v5709 = vpack.c.b16 %v5061, %v5053
    %v5710 = vpack.c.b16 %v5062, %v5054
    %v5711 = vpack.c.b16 %v5063, %v5055
    %v5712 = vpack.c.b16 %v5064, %v5056
    %v5713 = vpack.c.b16 %v5065, %v5057
    %v5714 = vpack.c.b16 %v5074, %v5066
    %v5715 = vpack.c.b16 %v5075, %v5067
    %v5716 = vpack.c.b16 %v5076, %v5068
    %v5717 = vpack.c.b16 %v5077, %v5069
    %v5718 = vpack.c.b16 %v5078, %v5070
    %v5719 = vpack.c.b16 %v5079, %v5071
    %v5720 = vpack.c.b16 %v5080, %v5072
    %v5721 = vpack.c.b16 %v5081, %v5073
    %v5722 = vpack.c.b16 %v5090, %v5082
    %v5723 = vpack.c.b16 %v5091, %v5083
    %v5724 = vpack.c.b16 %v5092, %v5084
    %v5725 = vpack.c.b16 %v5093, %v5085
    %v5726 = vpack.c.b16 %v5094, %v5086
    %v5727 = vpack.c.b16 %v5095, %v5087
    %v5728 = vpack.c.b16 %v5096, %v5088
    %v5729 = vpack.c.b16 %v5097, %v5089
    %v5730 = vpack.c.b16 %v5106, %v5098
    %v5731 = vpack.c.b16 %v5107, %v5099
    %v5732 = vpack.c.b16 %v5108, %v5100
    %v5733 = vpack.c.b16 %v5109, %v5101
    %v5734 = vpack.c.b16 %v5110, %v5102
    %v5735 = vpack.c.b16 %v5111, %v5103
    %v5736 = vpack.c.b16 %v5112, %v5104
    %v5737 = vpack.c.b16 %v5113, %v5105
    %v5738 = vpack.c.b16 %v5122, %v5114
    %v5739 = vpack.c.b16 %v5123, %v5115
    %v5740 = vpack.c.b16 %v5124, %v5116
    %v5741 = vpack.c.b16 %v5125, %v5117
    %v5742 = vpack.c.b16 %v5126, %v5118
    %v5743 = vpack.c.b16 %v5127, %v5119
    %v5744 = vpack.c.b16 %v5128, %v5120
    %v5745 = vpack.c.b16 %v5129, %v5121
    %v5746 = vpack.c.b16 %v5138, %v5130
    %v5747 = vpack.c.b16 %v5139, %v5131
    %v5748 = vpack.c.b16 %v5140, %v5132
    %v5749 = vpack.c.b16 %v5141, %v5133
    %v5750 = vpack.c.b16 %v5142, %v5134
    %v5751 = vpack.c.b16 %v5143, %v5135
    %v5752 = vpack.c.b16 %v5144, %v5136
    %v5753 = vpack.c.b16 %v5145, %v5137
    %v5754 = vpack.c.b16 %v5154, %v5146
    %v5755 = vpack.c.b16 %v5155, %v5147
    %v5756 = vpack.c.b16 %v5156, %v5148
    %v5757 = vpack.c.b16 %v5157, %v5149
    %v5758 = vpack.c.b16 %v5158, %v5150
    %v5759 = vpack.c.b16 %v5159, %v5151
    %v5760 = vpack.c.b16 %v5160, %v5152
    %v5761 = vpack.c.b16 %v5161, %v5153
    %v5762 = vpack.c.b16 %v5170, %v5162
    %v5763 = vpack.c.b16 %v5171, %v5163
    %v5764 = vpack.c.b16 %v5172, %v5164
    %v5765 = vpack.c.b16 %v5173, %v5165
    %v5766 = vpack.c.b16 %v5174, %v5166
    %v5767 = vpack.c.b16 %v5175, %v5167
    %v5768 = vpack.c.b16 %v5176, %v5168
    %v5769 = vpack.c.b16 %v5177, %v5169
    %v5770 = vpack.c.b16 %v5186, %v5178
    %v5771 = vpack.c.b16 %v5187, %v5179
    %v5772 = vpack.c.b16 %v5188, %v5180
    %v5773 = vpack.c.b16 %v5189, %v5181
    %v5774 = vpack.c.b16 %v5190, %v5182
    %v5775 = vpack.c.b16 %v5191, %v5183
    %v5776 = vpack.c.b16 %v5192, %v5184
    %v5777 = vpack.c.b16 %v5193, %v5185
    %v5778 = vpack.c.b16 %v5202, %v5194
    %v5779 = vpack.c.b16 %v5203, %v5195
    %v5780 = vpack.c.b16 %v5204, %v5196
    %v5781 = vpack.c.b16 %v5205, %v5197
    %v5782 = vpack.c.b16 %v5206, %v5198
    %v5783 = vpack.c.b16 %v5207, %v5199
    %v5784 = vpack.c.b16 %v5208, %v5200
    %v5785 = vpack.c.b16 %v5209, %v5201
    %v5786 = vpack.c.b16 %v5218, %v5210
    %v5787 = vpack.c.b16 %v5219, %v5211
    %v5788 = vpack.c.b16 %v5220, %v5212
    %v5789 = vpack.c.b16 %v5221, %v5213
    %v5790 = vpack.c.b16 %v5222, %v5214
    %v5791 = vpack.c.b16 %v5223, %v5215
    %v5792 = vpack.c.b16 %v5224, %v5216
    %v5793 = vpack.c.b16 %v5225, %v5217
    %v5794 = vpack.c.b16 %v5234, %v5226
    %v5795 = vpack.c.b16 %v5235, %v5227
    %v5796 = vpack.c.b16 %v5236, %v5228
    %v5797 = vpack.c.b16 %v5237, %v5229
    %v5798 = vpack.c.b16 %v5238, %v5230
    %v5799 = vpack.c.b16 %v5239, %v5231
    %v5800 = vpack.c.b16 %v5240, %v5232
    %v5801 = vpack.c.b16 %v5241, %v5233
    %v5802 = vpack.c.b16 %v5250, %v5242
    %v5803 = vpack.c.b16 %v5251, %v5243
    %v5804 = vpack.c.b16 %v5252, %v5244
    %v5805 = vpack.c.b16 %v5253, %v5245
    %v5806 = vpack.c.b16 %v5254, %v5246
    %v5807 = vpack.c.b16 %v5255, %v5247
    %v5808 = vpack.c.b16 %v5256, %v5248
    %v5809 = vpack.c.b16 %v5257, %v5249
    %v5810 = vpack.c.b16 %v5266, %v5258
    %v5811 = vpack.c.b16 %v5267, %v5259
    %v5812 = vpack.c.b16 %v5268, %v5260
    %v5813 = vpack.c.b16 %v5269, %v5261
    %v5814 = vpack.c.b16 %v5270, %v5262
    %v5815 = vpack.c.b16 %v5271, %v5263
    %v5816 = vpack.c.b16 %v5272, %v5264
    %v5817 = vpack.c.b16 %v5273, %v5265
    %v5818 = vpack.c.b16 %v5282, %v5274
    %v5819 = vpack.c.b16 %v5283, %v5275
    %v5820 = vpack.c.b16 %v5284, %v5276
    %v5821 = vpack.c.b16 %v5285, %v5277
    %v5822 = vpack.c.b16 %v5286, %v5278
    %v5823 = vpack.c.b16 %v5287, %v5279
    %v5824 = vpack.c.b16 %v5288, %v5280
    %v5825 = vpack.c.b16 %v5289, %v5281
    %v5826 = vpack.c.b16 %v5298, %v5290
    %v5827 = vpack.c.b16 %v5299, %v5291
    %v5828 = vpack.c.b16 %v5300, %v5292
    %v5829 = vpack.c.b16 %v5301, %v5293
    %v5830 = vpack.c.b16 %v5302, %v5294
    %v5831 = vpack.c.b16 %v5303, %v5295
    %v5832 = vpack.c.b16 %v5304, %v5296
    %v5833 = vpack.c.b16 %v5305, %v5297
    %v5834 = vpack.c.b16 %v5314, %v5306
    %v5835 = vpack.c.b16 %v5315, %v5307
    %v5836 = vpack.c.b16 %v5316, %v5308
    %v5837 = vpack.c.b16 %v5317, %v5309
    %v5838 = vpack.c.b16 %v5318, %v5310
    %v5839 = vpack.c.b16 %v5319, %v5311
    %v5840 = vpack.c.b16 %v5320, %v5312
    %v5841 = vpack.c.b16 %v5321, %v5313
    %v5842 = vpack.c.b16 %v5330, %v5322
    %v5843 = vpack.c.b16 %v5331, %v5323
    %v5844 = vpack.c.b16 %v5332, %v5324
    %v5845 = vpack.c.b16 %v5333, %v5325
    %v5846 = vpack.c.b16 %v5334, %v5326
    %v5847 = vpack.c.b16 %v5335, %v5327
    %v5848 = vpack.c.b16 %v5336, %v5328
    %v5849 = vpack.c.b16 %v5337, %v5329
    %6362 = vmatprep.subr.bf16.mxu0 %v5395
    %6363 = vmatpush1.bf16.msra.mxu0 %v5394
    %6364 = vmatprep.subr.bf16.mxu0 %v5387
    %6365 = vmatpush1.bf16.msra.mxu0 %v5386
    %6366 = vmatprep.subr.bf16.mxu0 %v5379
    %6367 = vmatpush1.bf16.msra.mxu0 %v5378
    %6368 = vmatprep.subr.bf16.mxu0 %v5371
    %6369 = vmatpush1.bf16.msra.mxu0 %v5370
    %6370 = vmatprep.subr.bf16.mxu0 %v5363
    %6371 = vmatpush1.bf16.msra.mxu0 %v5362
    %6372 = vmatprep.subr.bf16.mxu0 %v5355
    %6373 = vmatpush1.bf16.msra.mxu0 %v5354
    %6374 = vmatprep.subr.bf16.mxu0 %v5347
    %6375 = vmatpush1.bf16.msra.mxu0 %v5346
    %6376 = vmatprep.subr.bf16.mxu0 %v5339
    %6377 = vmatpush1.bf16.msra.mxu0 %v5338
    %6378 = vmatprep.subr.bf16.mxu0 %v5459
    %6379 = vmatpush2.bf16.msra.mxu0 %v5458
    %6380 = vmatprep.subr.bf16.mxu0 %v5451
    %6381 = vmatpush2.bf16.msra.mxu0 %v5450
    %6382 = vmatprep.subr.bf16.mxu0 %v5443
    %6383 = vmatpush2.bf16.msra.mxu0 %v5442
    %6384 = vmatprep.subr.bf16.mxu0 %v5435
    %6385 = vmatpush2.bf16.msra.mxu0 %v5434
    %6386 = vmatprep.subr.bf16.mxu0 %v5427
    %6387 = vmatpush2.bf16.msra.mxu0 %v5426
    %6388 = vmatprep.subr.bf16.mxu0 %v5419
    %6389 = vmatpush2.bf16.msra.mxu0 %v5418
    %6390 = vmatprep.subr.bf16.mxu0 %v5411
    %6391 = vmatpush2.bf16.msra.mxu0 %v5410
    %6392 = vmatprep.subr.bf16.mxu0 %v5403
    %6393 = vmatpush2.bf16.msra.mxu0 %v5402
    %6394 = vmatprep.mubr.bf16.mxu0 %v3241
    %6395 = vmatmul.mubr.bf16.gmra.mxu0 %v3240
    %v6396 = vpop.f32.mrf.mxu0
    %v6397 = vadd.f32 %v3765, %v6396
    %v6398 = vpop.f32.mrf.mxu0
    %v6399 = vadd.f32 %v3769, %v6398
    %v6400 = vpop.f32.mrf.mxu0
    %v6401 = vadd.f32 %v3765, %v6400
    %v6402 = vpop.f32.mrf.mxu0
    %v6403 = vadd.f32 %v3769, %v6402
    %6404 = vdwg.mxu0
    %6405 = vmatprep.subr.bf16.mxu0 %v5523
    %6406 = vmatpush1.bf16.msra.mxu0 %v5522
    %6407 = vmatprep.subr.bf16.mxu0 %v5515
    %6408 = vmatpush1.bf16.msra.mxu0 %v5514
    %6409 = vmatprep.subr.bf16.mxu0 %v5507
    %6410 = vmatpush1.bf16.msra.mxu0 %v5506
    %6411 = vmatprep.subr.bf16.mxu0 %v5499
    %6412 = vmatpush1.bf16.msra.mxu0 %v5498
    %6413 = vmatprep.subr.bf16.mxu0 %v5491
    %6414 = vmatpush1.bf16.msra.mxu0 %v5490
    %6415 = vmatprep.subr.bf16.mxu0 %v5483
    %6416 = vmatpush1.bf16.msra.mxu0 %v5482
    %6417 = vmatprep.subr.bf16.mxu0 %v5475
    %6418 = vmatpush1.bf16.msra.mxu0 %v5474
    %6419 = vmatprep.subr.bf16.mxu0 %v5467
    %6420 = vmatpush1.bf16.msra.mxu0 %v5466
    %6421 = vmatprep.subr.bf16.mxu0 %v5587
    %6422 = vmatpush2.bf16.msra.mxu0 %v5586
    %6423 = vmatprep.subr.bf16.mxu0 %v5579
    %6424 = vmatpush2.bf16.msra.mxu0 %v5578
    %6425 = vmatprep.subr.bf16.mxu0 %v5571
    %6426 = vmatpush2.bf16.msra.mxu0 %v5570
    %6427 = vmatprep.subr.bf16.mxu0 %v5563
    %6428 = vmatpush2.bf16.msra.mxu0 %v5562
    %6429 = vmatprep.subr.bf16.mxu0 %v5555
    %6430 = vmatpush2.bf16.msra.mxu0 %v5554
    %6431 = vmatprep.subr.bf16.mxu0 %v5547
    %6432 = vmatpush2.bf16.msra.mxu0 %v5546
    %6433 = vmatprep.subr.bf16.mxu0 %v5539
    %6434 = vmatpush2.bf16.msra.mxu0 %v5538
    %6435 = vmatprep.subr.bf16.mxu0 %v5531
    %6436 = vmatpush2.bf16.msra.mxu0 %v5530
    %6437 = vmatprep.mubr.bf16.mxu0 %v3243
    %6438 = vmatmul.mubr.bf16.gmra.mxu0 %v3242
    %v6439 = vpop.f32.mrf.mxu0
    %v6440 = vadd.f32 %v6397, %v6439
    %v6441 = vpop.f32.mrf.mxu0
    %v6442 = vadd.f32 %v6399, %v6441
    %v6443 = vpop.f32.mrf.mxu0
    %v6444 = vadd.f32 %v6401, %v6443
    %v6445 = vpop.f32.mrf.mxu0
    %v6446 = vadd.f32 %v6403, %v6445
    %6447 = vdwg.mxu0
    %6448 = vmatprep.subr.bf16.mxu0 %v5651
    %6449 = vmatpush1.bf16.msra.mxu0 %v5650
    %6450 = vmatprep.subr.bf16.mxu0 %v5643
    %6451 = vmatpush1.bf16.msra.mxu0 %v5642
    %6452 = vmatprep.subr.bf16.mxu0 %v5635
    %6453 = vmatpush1.bf16.msra.mxu0 %v5634
    %6454 = vmatprep.subr.bf16.mxu0 %v5627
    %6455 = vmatpush1.bf16.msra.mxu0 %v5626
    %6456 = vmatprep.subr.bf16.mxu0 %v5619
    %6457 = vmatpush1.bf16.msra.mxu0 %v5618
    %6458 = vmatprep.subr.bf16.mxu0 %v5611
    %6459 = vmatpush1.bf16.msra.mxu0 %v5610
    %6460 = vmatprep.subr.bf16.mxu0 %v5603
    %6461 = vmatpush1.bf16.msra.mxu0 %v5602
    %6462 = vmatprep.subr.bf16.mxu0 %v5595
    %6463 = vmatpush1.bf16.msra.mxu0 %v5594
    %6464 = vmatprep.subr.bf16.mxu0 %v5715
    %6465 = vmatpush2.bf16.msra.mxu0 %v5714
    %6466 = vmatprep.subr.bf16.mxu0 %v5707
    %6467 = vmatpush2.bf16.msra.mxu0 %v5706
    %6468 = vmatprep.subr.bf16.mxu0 %v5699
    %6469 = vmatpush2.bf16.msra.mxu0 %v5698
    %6470 = vmatprep.subr.bf16.mxu0 %v5691
    %6471 = vmatpush2.bf16.msra.mxu0 %v5690
    %6472 = vmatprep.subr.bf16.mxu0 %v5683
    %6473 = vmatpush2.bf16.msra.mxu0 %v5682
    %6474 = vmatprep.subr.bf16.mxu0 %v5675
    %6475 = vmatpush2.bf16.msra.mxu0 %v5674
    %6476 = vmatprep.subr.bf16.mxu0 %v5667
    %6477 = vmatpush2.bf16.msra.mxu0 %v5666
    %6478 = vmatprep.subr.bf16.mxu0 %v5659
    %6479 = vmatpush2.bf16.msra.mxu0 %v5658
    %6480 = vmatprep.mubr.bf16.mxu0 %v3245
    %6481 = vmatmul.mubr.bf16.gmra.mxu0 %v3244
    %v6482 = vpop.f32.mrf.mxu0
    %v6483 = vadd.f32 %v6440, %v6482
    %v6484 = vpop.f32.mrf.mxu0
    %v6485 = vadd.f32 %v6442, %v6484
    %v6486 = vpop.f32.mrf.mxu0
    %v6487 = vadd.f32 %v6444, %v6486
    %v6488 = vpop.f32.mrf.mxu0
    %v6489 = vadd.f32 %v6446, %v6488
    %6490 = vdwg.mxu0
    %6491 = vmatprep.subr.bf16.mxu0 %v5779
    %6492 = vmatpush1.bf16.msra.mxu0 %v5778
    %6493 = vmatprep.subr.bf16.mxu0 %v5771
    %6494 = vmatpush1.bf16.msra.mxu0 %v5770
    %6495 = vmatprep.subr.bf16.mxu0 %v5763
    %6496 = vmatpush1.bf16.msra.mxu0 %v5762
    %6497 = vmatprep.subr.bf16.mxu0 %v5755
    %6498 = vmatpush1.bf16.msra.mxu0 %v5754
    %6499 = vmatprep.subr.bf16.mxu0 %v5747
    %6500 = vmatpush1.bf16.msra.mxu0 %v5746
    %6501 = vmatprep.subr.bf16.mxu0 %v5739
    %6502 = vmatpush1.bf16.msra.mxu0 %v5738
    %6503 = vmatprep.subr.bf16.mxu0 %v5731
    %6504 = vmatpush1.bf16.msra.mxu0 %v5730
    %6505 = vmatprep.subr.bf16.mxu0 %v5723
    %6506 = vmatpush1.bf16.msra.mxu0 %v5722
    %6507 = vmatprep.subr.bf16.mxu0 %v5843
    %6508 = vmatpush2.bf16.msra.mxu0 %v5842
    %6509 = vmatprep.subr.bf16.mxu0 %v5835
    %6510 = vmatpush2.bf16.msra.mxu0 %v5834
    %6511 = vmatprep.subr.bf16.mxu0 %v5827
    %6512 = vmatpush2.bf16.msra.mxu0 %v5826
    %6513 = vmatprep.subr.bf16.mxu0 %v5819
    %6514 = vmatpush2.bf16.msra.mxu0 %v5818
    %6515 = vmatprep.subr.bf16.mxu0 %v5811
    %6516 = vmatpush2.bf16.msra.mxu0 %v5810
    %6517 = vmatprep.subr.bf16.mxu0 %v5803
    %6518 = vmatpush2.bf16.msra.mxu0 %v5802
    %6519 = vmatprep.subr.bf16.mxu0 %v5795
    %6520 = vmatpush2.bf16.msra.mxu0 %v5794
    %6521 = vmatprep.subr.bf16.mxu0 %v5787
    %6522 = vmatpush2.bf16.msra.mxu0 %v5786
    %6523 = vmatprep.mubr.bf16.mxu0 %v3247
    %6524 = vmatmul.mubr.bf16.gmra.mxu0 %v3246
    %v6525 = vpop.f32.mrf.mxu0
    %v6526 = vadd.f32 %v6483, %v6525
    %v6527 = vpop.f32.mrf.mxu0
    %v6528 = vadd.f32 %v6485, %v6527
    %v6529 = vpop.f32.mrf.mxu0
    %v6530 = vadd.f32 %v6487, %v6529
    %v6531 = vpop.f32.mrf.mxu0
    %v6532 = vadd.f32 %v6489, %v6531
    %6533 = vdwg.mxu0
    %6534 = vmatprep.subr.bf16.mxu0 %v5397
    %6535 = vmatpush1.bf16.msra.mxu0 %v5396
    %6536 = vmatprep.subr.bf16.mxu0 %v5389
    %6537 = vmatpush1.bf16.msra.mxu0 %v5388
    %6538 = vmatprep.subr.bf16.mxu0 %v5381
    %6539 = vmatpush1.bf16.msra.mxu0 %v5380
    %6540 = vmatprep.subr.bf16.mxu0 %v5373
    %6541 = vmatpush1.bf16.msra.mxu0 %v5372
    %6542 = vmatprep.subr.bf16.mxu0 %v5365
    %6543 = vmatpush1.bf16.msra.mxu0 %v5364
    %6544 = vmatprep.subr.bf16.mxu0 %v5357
    %6545 = vmatpush1.bf16.msra.mxu0 %v5356
    %6546 = vmatprep.subr.bf16.mxu0 %v5349
    %6547 = vmatpush1.bf16.msra.mxu0 %v5348
    %6548 = vmatprep.subr.bf16.mxu0 %v5341
    %6549 = vmatpush1.bf16.msra.mxu0 %v5340
    %6550 = vmatprep.subr.bf16.mxu0 %v5461
    %6551 = vmatpush2.bf16.msra.mxu0 %v5460
    %6552 = vmatprep.subr.bf16.mxu0 %v5453
    %6553 = vmatpush2.bf16.msra.mxu0 %v5452
    %6554 = vmatprep.subr.bf16.mxu0 %v5445
    %6555 = vmatpush2.bf16.msra.mxu0 %v5444
    %6556 = vmatprep.subr.bf16.mxu0 %v5437
    %6557 = vmatpush2.bf16.msra.mxu0 %v5436
    %6558 = vmatprep.subr.bf16.mxu0 %v5429
    %6559 = vmatpush2.bf16.msra.mxu0 %v5428
    %6560 = vmatprep.subr.bf16.mxu0 %v5421
    %6561 = vmatpush2.bf16.msra.mxu0 %v5420
    %6562 = vmatprep.subr.bf16.mxu0 %v5413
    %6563 = vmatpush2.bf16.msra.mxu0 %v5412
    %6564 = vmatprep.subr.bf16.mxu0 %v5405
    %6565 = vmatpush2.bf16.msra.mxu0 %v5404
    %6566 = vmatprep.mubr.bf16.mxu0 %v3241
    %6567 = vmatmul.mubr.bf16.gmra.mxu0 %v3240
    %v6568 = vpop.f32.mrf.mxu0
    %v6569 = vadd.f32 %v3773, %v6568
    %v6570 = vpop.f32.mrf.mxu0
    %v6571 = vadd.f32 %v3777, %v6570
    %v6572 = vpop.f32.mrf.mxu0
    %v6573 = vadd.f32 %v3773, %v6572
    %v6574 = vpop.f32.mrf.mxu0
    %v6575 = vadd.f32 %v3777, %v6574
    %6576 = vdwg.mxu0
    %6577 = vmatprep.subr.bf16.mxu0 %v5525
    %6578 = vmatpush1.bf16.msra.mxu0 %v5524
    %6579 = vmatprep.subr.bf16.mxu0 %v5517
    %6580 = vmatpush1.bf16.msra.mxu0 %v5516
    %6581 = vmatprep.subr.bf16.mxu0 %v5509
    %6582 = vmatpush1.bf16.msra.mxu0 %v5508
    %6583 = vmatprep.subr.bf16.mxu0 %v5501
    %6584 = vmatpush1.bf16.msra.mxu0 %v5500
    %6585 = vmatprep.subr.bf16.mxu0 %v5493
    %6586 = vmatpush1.bf16.msra.mxu0 %v5492
    %6587 = vmatprep.subr.bf16.mxu0 %v5485
    %6588 = vmatpush1.bf16.msra.mxu0 %v5484
    %6589 = vmatprep.subr.bf16.mxu0 %v5477
    %6590 = vmatpush1.bf16.msra.mxu0 %v5476
    %6591 = vmatprep.subr.bf16.mxu0 %v5469
    %6592 = vmatpush1.bf16.msra.mxu0 %v5468
    %6593 = vmatprep.subr.bf16.mxu0 %v5589
    %6594 = vmatpush2.bf16.msra.mxu0 %v5588
    %6595 = vmatprep.subr.bf16.mxu0 %v5581
    %6596 = vmatpush2.bf16.msra.mxu0 %v5580
    %6597 = vmatprep.subr.bf16.mxu0 %v5573
    %6598 = vmatpush2.bf16.msra.mxu0 %v5572
    %6599 = vmatprep.subr.bf16.mxu0 %v5565
    %6600 = vmatpush2.bf16.msra.mxu0 %v5564
    %6601 = vmatprep.subr.bf16.mxu0 %v5557
    %6602 = vmatpush2.bf16.msra.mxu0 %v5556
    %6603 = vmatprep.subr.bf16.mxu0 %v5549
    %6604 = vmatpush2.bf16.msra.mxu0 %v5548
    %6605 = vmatprep.subr.bf16.mxu0 %v5541
    %6606 = vmatpush2.bf16.msra.mxu0 %v5540
    %6607 = vmatprep.subr.bf16.mxu0 %v5533
    %6608 = vmatpush2.bf16.msra.mxu0 %v5532
    %6609 = vmatprep.mubr.bf16.mxu0 %v3243
    %6610 = vmatmul.mubr.bf16.gmra.mxu0 %v3242
    %v6611 = vpop.f32.mrf.mxu0
    %v6612 = vadd.f32 %v6569, %v6611
    %v6613 = vpop.f32.mrf.mxu0
    %v6614 = vadd.f32 %v6571, %v6613
    %v6615 = vpop.f32.mrf.mxu0
    %v6616 = vadd.f32 %v6573, %v6615
    %v6617 = vpop.f32.mrf.mxu0
    %v6618 = vadd.f32 %v6575, %v6617
    %6619 = vdwg.mxu0
    %6620 = vmatprep.subr.bf16.mxu0 %v5653
    %6621 = vmatpush1.bf16.msra.mxu0 %v5652
    %6622 = vmatprep.subr.bf16.mxu0 %v5645
    %6623 = vmatpush1.bf16.msra.mxu0 %v5644
    %6624 = vmatprep.subr.bf16.mxu0 %v5637
    %6625 = vmatpush1.bf16.msra.mxu0 %v5636
    %6626 = vmatprep.subr.bf16.mxu0 %v5629
    %6627 = vmatpush1.bf16.msra.mxu0 %v5628
    %6628 = vmatprep.subr.bf16.mxu0 %v5621
    %6629 = vmatpush1.bf16.msra.mxu0 %v5620
    %6630 = vmatprep.subr.bf16.mxu0 %v5613
    %6631 = vmatpush1.bf16.msra.mxu0 %v5612
    %6632 = vmatprep.subr.bf16.mxu0 %v5605
    %6633 = vmatpush1.bf16.msra.mxu0 %v5604
    %6634 = vmatprep.subr.bf16.mxu0 %v5597
    %6635 = vmatpush1.bf16.msra.mxu0 %v5596
    %6636 = vmatprep.subr.bf16.mxu0 %v5717
    %6637 = vmatpush2.bf16.msra.mxu0 %v5716
    %6638 = vmatprep.subr.bf16.mxu0 %v5709
    %6639 = vmatpush2.bf16.msra.mxu0 %v5708
    %6640 = vmatprep.subr.bf16.mxu0 %v5701
    %6641 = vmatpush2.bf16.msra.mxu0 %v5700
    %6642 = vmatprep.subr.bf16.mxu0 %v5693
    %6643 = vmatpush2.bf16.msra.mxu0 %v5692
    %6644 = vmatprep.subr.bf16.mxu0 %v5685
    %6645 = vmatpush2.bf16.msra.mxu0 %v5684
    %6646 = vmatprep.subr.bf16.mxu0 %v5677
    %6647 = vmatpush2.bf16.msra.mxu0 %v5676
    %6648 = vmatprep.subr.bf16.mxu0 %v5669
    %6649 = vmatpush2.bf16.msra.mxu0 %v5668
    %6650 = vmatprep.subr.bf16.mxu0 %v5661
    %6651 = vmatpush2.bf16.msra.mxu0 %v5660
    %6652 = vmatprep.mubr.bf16.mxu0 %v3245
    %6653 = vmatmul.mubr.bf16.gmra.mxu0 %v3244
    %v6654 = vpop.f32.mrf.mxu0
    %v6655 = vadd.f32 %v6612, %v6654
    %v6656 = vpop.f32.mrf.mxu0
    %v6657 = vadd.f32 %v6614, %v6656
    %v6658 = vpop.f32.mrf.mxu0
    %v6659 = vadd.f32 %v6616, %v6658
    %v6660 = vpop.f32.mrf.mxu0
    %v6661 = vadd.f32 %v6618, %v6660
    %6662 = vdwg.mxu0
    %6663 = vmatprep.subr.bf16.mxu0 %v5781
    %6664 = vmatpush1.bf16.msra.mxu0 %v5780
    %6665 = vmatprep.subr.bf16.mxu0 %v5773
    %6666 = vmatpush1.bf16.msra.mxu0 %v5772
    %6667 = vmatprep.subr.bf16.mxu0 %v5765
    %6668 = vmatpush1.bf16.msra.mxu0 %v5764
    %6669 = vmatprep.subr.bf16.mxu0 %v5757
    %6670 = vmatpush1.bf16.msra.mxu0 %v5756
    %6671 = vmatprep.subr.bf16.mxu0 %v5749
    %6672 = vmatpush1.bf16.msra.mxu0 %v5748
    %6673 = vmatprep.subr.bf16.mxu0 %v5741
    %6674 = vmatpush1.bf16.msra.mxu0 %v5740
    %6675 = vmatprep.subr.bf16.mxu0 %v5733
    %6676 = vmatpush1.bf16.msra.mxu0 %v5732
    %6677 = vmatprep.subr.bf16.mxu0 %v5725
    %6678 = vmatpush1.bf16.msra.mxu0 %v5724
    %6679 = vmatprep.subr.bf16.mxu0 %v5845
    %6680 = vmatpush2.bf16.msra.mxu0 %v5844
    %6681 = vmatprep.subr.bf16.mxu0 %v5837
    %6682 = vmatpush2.bf16.msra.mxu0 %v5836
    %6683 = vmatprep.subr.bf16.mxu0 %v5829
    %6684 = vmatpush2.bf16.msra.mxu0 %v5828
    %6685 = vmatprep.subr.bf16.mxu0 %v5821
    %6686 = vmatpush2.bf16.msra.mxu0 %v5820
    %6687 = vmatprep.subr.bf16.mxu0 %v5813
    %6688 = vmatpush2.bf16.msra.mxu0 %v5812
    %6689 = vmatprep.subr.bf16.mxu0 %v5805
    %6690 = vmatpush2.bf16.msra.mxu0 %v5804
    %6691 = vmatprep.subr.bf16.mxu0 %v5797
    %6692 = vmatpush2.bf16.msra.mxu0 %v5796
    %6693 = vmatprep.subr.bf16.mxu0 %v5789
    %6694 = vmatpush2.bf16.msra.mxu0 %v5788
    %6695 = vmatprep.mubr.bf16.mxu0 %v3247
    %6696 = vmatmul.mubr.bf16.gmra.mxu0 %v3246
    %v6697 = vpop.f32.mrf.mxu0
    %v6698 = vadd.f32 %v6655, %v6697
    %v6699 = vpop.f32.mrf.mxu0
    %v6700 = vadd.f32 %v6657, %v6699
    %v6701 = vpop.f32.mrf.mxu0
    %v6702 = vadd.f32 %v6659, %v6701
    %v6703 = vpop.f32.mrf.mxu0
    %v6704 = vadd.f32 %v6661, %v6703
    %6705 = vdwg.mxu0
    %6706 = vmatprep.subr.bf16.mxu0 %v5399
    %6707 = vmatpush1.bf16.msra.mxu0 %v5398
    %6708 = vmatprep.subr.bf16.mxu0 %v5391
    %6709 = vmatpush1.bf16.msra.mxu0 %v5390
    %6710 = vmatprep.subr.bf16.mxu0 %v5383
    %6711 = vmatpush1.bf16.msra.mxu0 %v5382
    %6712 = vmatprep.subr.bf16.mxu0 %v5375
    %6713 = vmatpush1.bf16.msra.mxu0 %v5374
    %6714 = vmatprep.subr.bf16.mxu0 %v5367
    %6715 = vmatpush1.bf16.msra.mxu0 %v5366
    %6716 = vmatprep.subr.bf16.mxu0 %v5359
    %6717 = vmatpush1.bf16.msra.mxu0 %v5358
    %6718 = vmatprep.subr.bf16.mxu0 %v5351
    %6719 = vmatpush1.bf16.msra.mxu0 %v5350
    %6720 = vmatprep.subr.bf16.mxu0 %v5343
    %6721 = vmatpush1.bf16.msra.mxu0 %v5342
    %6722 = vmatprep.subr.bf16.mxu0 %v5463
    %6723 = vmatpush2.bf16.msra.mxu0 %v5462
    %6724 = vmatprep.subr.bf16.mxu0 %v5455
    %6725 = vmatpush2.bf16.msra.mxu0 %v5454
    %6726 = vmatprep.subr.bf16.mxu0 %v5447
    %6727 = vmatpush2.bf16.msra.mxu0 %v5446
    %6728 = vmatprep.subr.bf16.mxu0 %v5439
    %6729 = vmatpush2.bf16.msra.mxu0 %v5438
    %6730 = vmatprep.subr.bf16.mxu0 %v5431
    %6731 = vmatpush2.bf16.msra.mxu0 %v5430
    %6732 = vmatprep.subr.bf16.mxu0 %v5423
    %6733 = vmatpush2.bf16.msra.mxu0 %v5422
    %6734 = vmatprep.subr.bf16.mxu0 %v5415
    %6735 = vmatpush2.bf16.msra.mxu0 %v5414
    %6736 = vmatprep.subr.bf16.mxu0 %v5407
    %6737 = vmatpush2.bf16.msra.mxu0 %v5406
    %6738 = vmatprep.mubr.bf16.mxu0 %v3241
    %6739 = vmatmul.mubr.bf16.gmra.mxu0 %v3240
    %v6740 = vpop.f32.mrf.mxu0
    %v6741 = vadd.f32 %v3781, %v6740
    %v6742 = vpop.f32.mrf.mxu0
    %v6743 = vadd.f32 %v3785, %v6742
    %v6744 = vpop.f32.mrf.mxu0
    %v6745 = vadd.f32 %v3781, %v6744
    %v6746 = vpop.f32.mrf.mxu0
    %v6747 = vadd.f32 %v3785, %v6746
    %6748 = vdwg.mxu0
    %6749 = vmatprep.subr.bf16.mxu0 %v5527
    %6750 = vmatpush1.bf16.msra.mxu0 %v5526
    %6751 = vmatprep.subr.bf16.mxu0 %v5519
    %6752 = vmatpush1.bf16.msra.mxu0 %v5518
    %6753 = vmatprep.subr.bf16.mxu0 %v5511
    %6754 = vmatpush1.bf16.msra.mxu0 %v5510
    %6755 = vmatprep.subr.bf16.mxu0 %v5503
    %6756 = vmatpush1.bf16.msra.mxu0 %v5502
    %6757 = vmatprep.subr.bf16.mxu0 %v5495
    %6758 = vmatpush1.bf16.msra.mxu0 %v5494
    %6759 = vmatprep.subr.bf16.mxu0 %v5487
    %6760 = vmatpush1.bf16.msra.mxu0 %v5486
    %6761 = vmatprep.subr.bf16.mxu0 %v5479
    %6762 = vmatpush1.bf16.msra.mxu0 %v5478
    %6763 = vmatprep.subr.bf16.mxu0 %v5471
    %6764 = vmatpush1.bf16.msra.mxu0 %v5470
    %6765 = vmatprep.subr.bf16.mxu0 %v5591
    %6766 = vmatpush2.bf16.msra.mxu0 %v5590
    %6767 = vmatprep.subr.bf16.mxu0 %v5583
    %6768 = vmatpush2.bf16.msra.mxu0 %v5582
    %6769 = vmatprep.subr.bf16.mxu0 %v5575
    %6770 = vmatpush2.bf16.msra.mxu0 %v5574
    %6771 = vmatprep.subr.bf16.mxu0 %v5567
    %6772 = vmatpush2.bf16.msra.mxu0 %v5566
    %6773 = vmatprep.subr.bf16.mxu0 %v5559
    %6774 = vmatpush2.bf16.msra.mxu0 %v5558
    %6775 = vmatprep.subr.bf16.mxu0 %v5551
    %6776 = vmatpush2.bf16.msra.mxu0 %v5550
    %6777 = vmatprep.subr.bf16.mxu0 %v5543
    %6778 = vmatpush2.bf16.msra.mxu0 %v5542
    %6779 = vmatprep.subr.bf16.mxu0 %v5535
    %6780 = vmatpush2.bf16.msra.mxu0 %v5534
    %6781 = vmatprep.mubr.bf16.mxu0 %v3243
    %6782 = vmatmul.mubr.bf16.gmra.mxu0 %v3242
    %v6783 = vpop.f32.mrf.mxu0
    %v6784 = vadd.f32 %v6741, %v6783
    %v6785 = vpop.f32.mrf.mxu0
    %v6786 = vadd.f32 %v6743, %v6785
    %v6787 = vpop.f32.mrf.mxu0
    %v6788 = vadd.f32 %v6745, %v6787
    %v6789 = vpop.f32.mrf.mxu0
    %v6790 = vadd.f32 %v6747, %v6789
    %6791 = vdwg.mxu0
    %6792 = vmatprep.subr.bf16.mxu0 %v5655
    %6793 = vmatpush1.bf16.msra.mxu0 %v5654
    %6794 = vmatprep.subr.bf16.mxu0 %v5647
    %6795 = vmatpush1.bf16.msra.mxu0 %v5646
    %6796 = vmatprep.subr.bf16.mxu0 %v5639
    %6797 = vmatpush1.bf16.msra.mxu0 %v5638
    %6798 = vmatprep.subr.bf16.mxu0 %v5631
    %6799 = vmatpush1.bf16.msra.mxu0 %v5630
    %6800 = vmatprep.subr.bf16.mxu0 %v5623
    %6801 = vmatpush1.bf16.msra.mxu0 %v5622
    %6802 = vmatprep.subr.bf16.mxu0 %v5615
    %6803 = vmatpush1.bf16.msra.mxu0 %v5614
    %6804 = vmatprep.subr.bf16.mxu0 %v5607
    %6805 = vmatpush1.bf16.msra.mxu0 %v5606
    %6806 = vmatprep.subr.bf16.mxu0 %v5599
    %6807 = vmatpush1.bf16.msra.mxu0 %v5598
    %6808 = vmatprep.subr.bf16.mxu0 %v5719
    %6809 = vmatpush2.bf16.msra.mxu0 %v5718
    %6810 = vmatprep.subr.bf16.mxu0 %v5711
    %6811 = vmatpush2.bf16.msra.mxu0 %v5710
    %6812 = vmatprep.subr.bf16.mxu0 %v5703
    %6813 = vmatpush2.bf16.msra.mxu0 %v5702
    %6814 = vmatprep.subr.bf16.mxu0 %v5695
    %6815 = vmatpush2.bf16.msra.mxu0 %v5694
    %6816 = vmatprep.subr.bf16.mxu0 %v5687
    %6817 = vmatpush2.bf16.msra.mxu0 %v5686
    %6818 = vmatprep.subr.bf16.mxu0 %v5679
    %6819 = vmatpush2.bf16.msra.mxu0 %v5678
    %6820 = vmatprep.subr.bf16.mxu0 %v5671
    %6821 = vmatpush2.bf16.msra.mxu0 %v5670
    %6822 = vmatprep.subr.bf16.mxu0 %v5663
    %6823 = vmatpush2.bf16.msra.mxu0 %v5662
    %6824 = vmatprep.mubr.bf16.mxu0 %v3245
    %6825 = vmatmul.mubr.bf16.gmra.mxu0 %v3244
    %v6826 = vpop.f32.mrf.mxu0
    %v6827 = vadd.f32 %v6784, %v6826
    %v6828 = vpop.f32.mrf.mxu0
    %v6829 = vadd.f32 %v6786, %v6828
    %v6830 = vpop.f32.mrf.mxu0
    %v6831 = vadd.f32 %v6788, %v6830
    %v6832 = vpop.f32.mrf.mxu0
    %v6833 = vadd.f32 %v6790, %v6832
    %6834 = vdwg.mxu0
    %6835 = vmatprep.subr.bf16.mxu0 %v5783
    %6836 = vmatpush1.bf16.msra.mxu0 %v5782
    %6837 = vmatprep.subr.bf16.mxu0 %v5775
    %6838 = vmatpush1.bf16.msra.mxu0 %v5774
    %6839 = vmatprep.subr.bf16.mxu0 %v5767
    %6840 = vmatpush1.bf16.msra.mxu0 %v5766
    %6841 = vmatprep.subr.bf16.mxu0 %v5759
    %6842 = vmatpush1.bf16.msra.mxu0 %v5758
    %6843 = vmatprep.subr.bf16.mxu0 %v5751
    %6844 = vmatpush1.bf16.msra.mxu0 %v5750
    %6845 = vmatprep.subr.bf16.mxu0 %v5743
    %6846 = vmatpush1.bf16.msra.mxu0 %v5742
    %6847 = vmatprep.subr.bf16.mxu0 %v5735
    %6848 = vmatpush1.bf16.msra.mxu0 %v5734
    %6849 = vmatprep.subr.bf16.mxu0 %v5727
    %6850 = vmatpush1.bf16.msra.mxu0 %v5726
    %6851 = vmatprep.subr.bf16.mxu0 %v5847
    %6852 = vmatpush2.bf16.msra.mxu0 %v5846
    %6853 = vmatprep.subr.bf16.mxu0 %v5839
    %6854 = vmatpush2.bf16.msra.mxu0 %v5838
    %6855 = vmatprep.subr.bf16.mxu0 %v5831
    %6856 = vmatpush2.bf16.msra.mxu0 %v5830
    %6857 = vmatprep.subr.bf16.mxu0 %v5823
    %6858 = vmatpush2.bf16.msra.mxu0 %v5822
    %6859 = vmatprep.subr.bf16.mxu0 %v5815
    %6860 = vmatpush2.bf16.msra.mxu0 %v5814
    %6861 = vmatprep.subr.bf16.mxu0 %v5807
    %6862 = vmatpush2.bf16.msra.mxu0 %v5806
    %6863 = vmatprep.subr.bf16.mxu0 %v5799
    %6864 = vmatpush2.bf16.msra.mxu0 %v5798
    %6865 = vmatprep.subr.bf16.mxu0 %v5791
    %6866 = vmatpush2.bf16.msra.mxu0 %v5790
    %6867 = vmatprep.mubr.bf16.mxu0 %v3247
    %6868 = vmatmul.mubr.bf16.gmra.mxu0 %v3246
    %v6869 = vpop.f32.mrf.mxu0
    %v6870 = vadd.f32 %v6827, %v6869
    %v6871 = vpop.f32.mrf.mxu0
    %v6872 = vadd.f32 %v6829, %v6871
    %v6873 = vpop.f32.mrf.mxu0
    %v6874 = vadd.f32 %v6831, %v6873
    %v6875 = vpop.f32.mrf.mxu0
    %v6876 = vadd.f32 %v6833, %v6875
    %6877 = vdwg.mxu0
    %6878 = vmatprep.subr.bf16.mxu0 %v5401
    %6879 = vmatpush1.bf16.msra.mxu0 %v5400
    %6880 = vmatprep.subr.bf16.mxu0 %v5393
    %6881 = vmatpush1.bf16.msra.mxu0 %v5392
    %6882 = vmatprep.subr.bf16.mxu0 %v5385
    %6883 = vmatpush1.bf16.msra.mxu0 %v5384
    %6884 = vmatprep.subr.bf16.mxu0 %v5377
    %6885 = vmatpush1.bf16.msra.mxu0 %v5376
    %6886 = vmatprep.subr.bf16.mxu0 %v5369
    %6887 = vmatpush1.bf16.msra.mxu0 %v5368
    %6888 = vmatprep.subr.bf16.mxu0 %v5361
    %6889 = vmatpush1.bf16.msra.mxu0 %v5360
    %6890 = vmatprep.subr.bf16.mxu0 %v5353
    %6891 = vmatpush1.bf16.msra.mxu0 %v5352
    %6892 = vmatprep.subr.bf16.mxu0 %v5345
    %6893 = vmatpush1.bf16.msra.mxu0 %v5344
    %6894 = vmatprep.subr.bf16.mxu0 %v5465
    %6895 = vmatpush2.bf16.msra.mxu0 %v5464
    %6896 = vmatprep.subr.bf16.mxu0 %v5457
    %6897 = vmatpush2.bf16.msra.mxu0 %v5456
    %6898 = vmatprep.subr.bf16.mxu0 %v5449
    %6899 = vmatpush2.bf16.msra.mxu0 %v5448
    %6900 = vmatprep.subr.bf16.mxu0 %v5441
    %6901 = vmatpush2.bf16.msra.mxu0 %v5440
    %6902 = vmatprep.subr.bf16.mxu0 %v5433
    %6903 = vmatpush2.bf16.msra.mxu0 %v5432
    %6904 = vmatprep.subr.bf16.mxu0 %v5425
    %6905 = vmatpush2.bf16.msra.mxu0 %v5424
    %6906 = vmatprep.subr.bf16.mxu0 %v5417
    %6907 = vmatpush2.bf16.msra.mxu0 %v5416
    %6908 = vmatprep.subr.bf16.mxu0 %v5409
    %6909 = vmatpush2.bf16.msra.mxu0 %v5408
    %6910 = vmatprep.mubr.bf16.mxu0 %v3241
    %6911 = vmatmul.mubr.bf16.gmra.mxu0 %v3240
    %v6912 = vpop.f32.mrf.mxu0
    %v6913 = vadd.f32 %v3789, %v6912
    %v6914 = vpop.f32.mrf.mxu0
    %v6915 = vadd.f32 %v3793, %v6914
    %v6916 = vpop.f32.mrf.mxu0
    %v6917 = vadd.f32 %v3789, %v6916
    %v6918 = vpop.f32.mrf.mxu0
    %v6919 = vadd.f32 %v3793, %v6918
    %6920 = vdwg.mxu0
    %6921 = vmatprep.subr.bf16.mxu0 %v5529
    %6922 = vmatpush1.bf16.msra.mxu0 %v5528
    %6923 = vmatprep.subr.bf16.mxu0 %v5521
    %6924 = vmatpush1.bf16.msra.mxu0 %v5520
    %6925 = vmatprep.subr.bf16.mxu0 %v5513
    %6926 = vmatpush1.bf16.msra.mxu0 %v5512
    %6927 = vmatprep.subr.bf16.mxu0 %v5505
    %6928 = vmatpush1.bf16.msra.mxu0 %v5504
    %6929 = vmatprep.subr.bf16.mxu0 %v5497
    %6930 = vmatpush1.bf16.msra.mxu0 %v5496
    %6931 = vmatprep.subr.bf16.mxu0 %v5489
    %6932 = vmatpush1.bf16.msra.mxu0 %v5488
    %6933 = vmatprep.subr.bf16.mxu0 %v5481
    %6934 = vmatpush1.bf16.msra.mxu0 %v5480
    %6935 = vmatprep.subr.bf16.mxu0 %v5473
    %6936 = vmatpush1.bf16.msra.mxu0 %v5472
    %6937 = vmatprep.subr.bf16.mxu0 %v5593
    %6938 = vmatpush2.bf16.msra.mxu0 %v5592
    %6939 = vmatprep.subr.bf16.mxu0 %v5585
    %6940 = vmatpush2.bf16.msra.mxu0 %v5584
    %6941 = vmatprep.subr.bf16.mxu0 %v5577
    %6942 = vmatpush2.bf16.msra.mxu0 %v5576
    %6943 = vmatprep.subr.bf16.mxu0 %v5569
    %6944 = vmatpush2.bf16.msra.mxu0 %v5568
    %6945 = vmatprep.subr.bf16.mxu0 %v5561
    %6946 = vmatpush2.bf16.msra.mxu0 %v5560
    %6947 = vmatprep.subr.bf16.mxu0 %v5553
    %6948 = vmatpush2.bf16.msra.mxu0 %v5552
    %6949 = vmatprep.subr.bf16.mxu0 %v5545
    %6950 = vmatpush2.bf16.msra.mxu0 %v5544
    %6951 = vmatprep.subr.bf16.mxu0 %v5537
    %6952 = vmatpush2.bf16.msra.mxu0 %v5536
    %6953 = vmatprep.mubr.bf16.mxu0 %v3243
    %6954 = vmatmul.mubr.bf16.gmra.mxu0 %v3242
    %v6955 = vpop.f32.mrf.mxu0
    %v6956 = vadd.f32 %v6913, %v6955
    %v6957 = vpop.f32.mrf.mxu0
    %v6958 = vadd.f32 %v6915, %v6957
    %v6959 = vpop.f32.mrf.mxu0
    %v6960 = vadd.f32 %v6917, %v6959
    %v6961 = vpop.f32.mrf.mxu0
    %v6962 = vadd.f32 %v6919, %v6961
    %6963 = vdwg.mxu0
    %6964 = vmatprep.subr.bf16.mxu0 %v5657
    %6965 = vmatpush1.bf16.msra.mxu0 %v5656
    %6966 = vmatprep.subr.bf16.mxu0 %v5649
    %6967 = vmatpush1.bf16.msra.mxu0 %v5648
    %6968 = vmatprep.subr.bf16.mxu0 %v5641
    %6969 = vmatpush1.bf16.msra.mxu0 %v5640
    %6970 = vmatprep.subr.bf16.mxu0 %v5633
    %6971 = vmatpush1.bf16.msra.mxu0 %v5632
    %6972 = vmatprep.subr.bf16.mxu0 %v5625
    %6973 = vmatpush1.bf16.msra.mxu0 %v5624
    %6974 = vmatprep.subr.bf16.mxu0 %v5617
    %6975 = vmatpush1.bf16.msra.mxu0 %v5616
    %6976 = vmatprep.subr.bf16.mxu0 %v5609
    %6977 = vmatpush1.bf16.msra.mxu0 %v5608
    %6978 = vmatprep.subr.bf16.mxu0 %v5601
    %6979 = vmatpush1.bf16.msra.mxu0 %v5600
    %6980 = vmatprep.subr.bf16.mxu0 %v5721
    %6981 = vmatpush2.bf16.msra.mxu0 %v5720
    %6982 = vmatprep.subr.bf16.mxu0 %v5713
    %6983 = vmatpush2.bf16.msra.mxu0 %v5712
    %6984 = vmatprep.subr.bf16.mxu0 %v5705
    %6985 = vmatpush2.bf16.msra.mxu0 %v5704
    %6986 = vmatprep.subr.bf16.mxu0 %v5697
    %6987 = vmatpush2.bf16.msra.mxu0 %v5696
    %6988 = vmatprep.subr.bf16.mxu0 %v5689
    %6989 = vmatpush2.bf16.msra.mxu0 %v5688
    %6990 = vmatprep.subr.bf16.mxu0 %v5681
    %6991 = vmatpush2.bf16.msra.mxu0 %v5680
    %6992 = vmatprep.subr.bf16.mxu0 %v5673
    %6993 = vmatpush2.bf16.msra.mxu0 %v5672
    %6994 = vmatprep.subr.bf16.mxu0 %v5665
    %6995 = vmatpush2.bf16.msra.mxu0 %v5664
    %6996 = vmatprep.mubr.bf16.mxu0 %v3245
    %6997 = vmatmul.mubr.bf16.gmra.mxu0 %v3244
    %v6998 = vpop.f32.mrf.mxu0
    %v6999 = vadd.f32 %v6956, %v6998
    %v7000 = vpop.f32.mrf.mxu0
    %v7001 = vadd.f32 %v6958, %v7000
    %v7002 = vpop.f32.mrf.mxu0
    %v7003 = vadd.f32 %v6960, %v7002
    %v7004 = vpop.f32.mrf.mxu0
    %v7005 = vadd.f32 %v6962, %v7004
    %7006 = vdwg.mxu0
    %7007 = vmatprep.subr.bf16.mxu0 %v5785
    %7008 = vmatpush1.bf16.msra.mxu0 %v5784
    %7009 = vmatprep.subr.bf16.mxu0 %v5777
    %7010 = vmatpush1.bf16.msra.mxu0 %v5776
    %7011 = vmatprep.subr.bf16.mxu0 %v5769
    %7012 = vmatpush1.bf16.msra.mxu0 %v5768
    %7013 = vmatprep.subr.bf16.mxu0 %v5761
    %7014 = vmatpush1.bf16.msra.mxu0 %v5760
    %7015 = vmatprep.subr.bf16.mxu0 %v5753
    %7016 = vmatpush1.bf16.msra.mxu0 %v5752
    %7017 = vmatprep.subr.bf16.mxu0 %v5745
    %7018 = vmatpush1.bf16.msra.mxu0 %v5744
    %7019 = vmatprep.subr.bf16.mxu0 %v5737
    %7020 = vmatpush1.bf16.msra.mxu0 %v5736
    %7021 = vmatprep.subr.bf16.mxu0 %v5729
    %7022 = vmatpush1.bf16.msra.mxu0 %v5728
    %7023 = vmatprep.subr.bf16.mxu0 %v5849
    %7024 = vmatpush2.bf16.msra.mxu0 %v5848
    %7025 = vmatprep.subr.bf16.mxu0 %v5841
    %7026 = vmatpush2.bf16.msra.mxu0 %v5840
    %7027 = vmatprep.subr.bf16.mxu0 %v5833
    %7028 = vmatpush2.bf16.msra.mxu0 %v5832
    %7029 = vmatprep.subr.bf16.mxu0 %v5825
    %7030 = vmatpush2.bf16.msra.mxu0 %v5824
    %7031 = vmatprep.subr.bf16.mxu0 %v5817
    %7032 = vmatpush2.bf16.msra.mxu0 %v5816
    %7033 = vmatprep.subr.bf16.mxu0 %v5809
    %7034 = vmatpush2.bf16.msra.mxu0 %v5808
    %7035 = vmatprep.subr.bf16.mxu0 %v5801
    %7036 = vmatpush2.bf16.msra.mxu0 %v5800
    %7037 = vmatprep.subr.bf16.mxu0 %v5793
    %7038 = vmatpush2.bf16.msra.mxu0 %v5792
    %7039 = vmatprep.mubr.bf16.mxu0 %v3247
    %7040 = vmatmul.mubr.bf16.gmra.mxu0 %v3246
    %v7041 = vpop.f32.mrf.mxu0
    %v7042 = vadd.f32 %v6999, %v7041
    %v7043 = vpop.f32.mrf.mxu0
    %v7044 = vadd.f32 %v7001, %v7043
    %v7045 = vpop.f32.mrf.mxu0
    %v7046 = vadd.f32 %v7003, %v7045
    %v7047 = vpop.f32.mrf.mxu0
    %v7048 = vadd.f32 %v7005, %v7047
    %7049 = vdwg.mxu0
    %v7050 = vmax.f32 %v6526, 0.0
    %v7051 = vmax.f32 %v6528, 0.0
    %v7052 = vmax.f32 %v6698, 0.0
    %v7053 = vmax.f32 %v6700, 0.0
    %v7054 = vmax.f32 %v6870, 0.0
    %v7055 = vmax.f32 %v6872, 0.0
    %v7056 = vmax.f32 %v7042, 0.0
    %v7057 = vmax.f32 %v7044, 0.0
    %v7058 = vmax.f32 %v6530, 0.0
    %v7059 = vmax.f32 %v6532, 0.0
    %v7060 = vmax.f32 %v6702, 0.0
    %v7061 = vmax.f32 %v6704, 0.0
    %v7062 = vmax.f32 %v6874, 0.0
    %v7063 = vmax.f32 %v6876, 0.0
    %v7064 = vmax.f32 %v7046, 0.0
    %v7065 = vmax.f32 %v7048, 0.0
    %v7066 = vpack.c.bf16 %v7058, %v7050
    %v7067 = vpack.c.bf16 %v7059, %v7051
    %v7068 = vpack.c.bf16 %v7060, %v7052
    %v7069 = vpack.c.bf16 %v7061, %v7053
    %v7070 = vpack.c.bf16 %v7062, %v7054
    %v7071 = vpack.c.bf16 %v7063, %v7055
    %v7072 = vpack.c.bf16 %v7064, %v7056
    %v7073 = vpack.c.bf16 %v7065, %v7057
    %v7074 = vld [vmem:[#allocation11] sm:$0xf]
    %v7075 = vld [vmem:[#allocation11 + $0x4] sm:$0xf]
    %v7076 = vld [vmem:[#allocation11 + $0x8] sm:$0xf]
    %v7077 = vld [vmem:[#allocation11 + $0xc] sm:$0xf]
    %v7078 = vld [vmem:[#allocation11 + $0x10] sm:$0xf]
    %v7079 = vld [vmem:[#allocation11 + $0x14] sm:$0xf]
    %v7080 = vld [vmem:[#allocation11 + $0x18] sm:$0xf]
    %v7081 = vld [vmem:[#allocation11 + $0x1c] sm:$0xf]
    %v7082 = vld [vmem:[#allocation11 + $0x20] sm:$0xf]
    %v7083 = vld [vmem:[#allocation11 + $0x24] sm:$0xf]
    %v7084 = vld [vmem:[#allocation11 + $0x28] sm:$0xf]
    %v7085 = vld [vmem:[#allocation11 + $0x2c] sm:$0xf]
    %v7086 = vld [vmem:[#allocation11 + $0x30] sm:$0xf]
    %v7087 = vld [vmem:[#allocation11 + $0x34] sm:$0xf]
    %v7088 = vld [vmem:[#allocation11 + $0x38] sm:$0xf]
    %v7089 = vld [vmem:[#allocation11 + $0x3c] sm:$0xf]
    %v7090 = vld [vmem:[#allocation11 + $0x40] sm:$0xf]
    %v7091 = vld [vmem:[#allocation11 + $0x44] sm:$0xf]
    %v7092 = vld [vmem:[#allocation11 + $0x48] sm:$0xf]
    %v7093 = vld [vmem:[#allocation11 + $0x4c] sm:$0xf]
    %v7094 = vld [vmem:[#allocation11 + $0x50] sm:$0xf]
    %v7095 = vld [vmem:[#allocation11 + $0x54] sm:$0xf]
    %v7096 = vld [vmem:[#allocation11 + $0x58] sm:$0xf]
    %v7097 = vld [vmem:[#allocation11 + $0x5c] sm:$0xf]
    %v7098 = vld [vmem:[#allocation11 + $0x60] sm:$0xf]
    %v7099 = vld [vmem:[#allocation11 + $0x64] sm:$0xf]
    %v7100 = vld [vmem:[#allocation11 + $0x68] sm:$0xf]
    %v7101 = vld [vmem:[#allocation11 + $0x6c] sm:$0xf]
    %v7102 = vld [vmem:[#allocation11 + $0x70] sm:$0xf]
    %v7103 = vld [vmem:[#allocation11 + $0x74] sm:$0xf]
    %v7104 = vld [vmem:[#allocation11 + $0x78] sm:$0xf]
    %v7105 = vld [vmem:[#allocation11 + $0x7c] sm:$0xf]
    %v7106 = vld [vmem:[#allocation11 + $0x80] sm:$0xf]
    %v7107 = vld [vmem:[#allocation11 + $0x84] sm:$0xf]
    %v7108 = vld [vmem:[#allocation11 + $0x88] sm:$0xf]
    %v7109 = vld [vmem:[#allocation11 + $0x8c] sm:$0xf]
    %v7110 = vld [vmem:[#allocation11 + $0x90] sm:$0xf]
    %v7111 = vld [vmem:[#allocation11 + $0x94] sm:$0xf]
    %v7112 = vld [vmem:[#allocation11 + $0x98] sm:$0xf]
    %v7113 = vld [vmem:[#allocation11 + $0x9c] sm:$0xf]
    %v7114 = vld [vmem:[#allocation11 + $0xa0] sm:$0xf]
    %v7115 = vld [vmem:[#allocation11 + $0xa4] sm:$0xf]
    %v7116 = vld [vmem:[#allocation11 + $0xa8] sm:$0xf]
    %v7117 = vld [vmem:[#allocation11 + $0xac] sm:$0xf]
    %v7118 = vld [vmem:[#allocation11 + $0xb0] sm:$0xf]
    %v7119 = vld [vmem:[#allocation11 + $0xb4] sm:$0xf]
    %v7120 = vld [vmem:[#allocation11 + $0xb8] sm:$0xf]
    %v7121 = vld [vmem:[#allocation11 + $0xbc] sm:$0xf]
    %v7122 = vld [vmem:[#allocation11 + $0xc0] sm:$0xf]
    %v7123 = vld [vmem:[#allocation11 + $0xc4] sm:$0xf]
    %v7124 = vld [vmem:[#allocation11 + $0xc8] sm:$0xf]
    %v7125 = vld [vmem:[#allocation11 + $0xcc] sm:$0xf]
    %v7126 = vld [vmem:[#allocation11 + $0xd0] sm:$0xf]
    %v7127 = vld [vmem:[#allocation11 + $0xd4] sm:$0xf]
    %v7128 = vld [vmem:[#allocation11 + $0xd8] sm:$0xf]
    %v7129 = vld [vmem:[#allocation11 + $0xdc] sm:$0xf]
    %v7130 = vld [vmem:[#allocation11 + $0xe0] sm:$0xf]
    %v7131 = vld [vmem:[#allocation11 + $0xe4] sm:$0xf]
    %v7132 = vld [vmem:[#allocation11 + $0xe8] sm:$0xf]
    %v7133 = vld [vmem:[#allocation11 + $0xec] sm:$0xf]
    %v7134 = vld [vmem:[#allocation11 + $0xf0] sm:$0xf]
    %v7135 = vld [vmem:[#allocation11 + $0xf4] sm:$0xf]
    %v7136 = vld [vmem:[#allocation11 + $0xf8] sm:$0xf]
    %v7137 = vld [vmem:[#allocation11 + $0xfc] sm:$0xf]
    %v7138 = vld [vmem:[#allocation11 + $0x100] sm:$0xf]
    %v7139 = vld [vmem:[#allocation11 + $0x104] sm:$0xf]
    %v7140 = vld [vmem:[#allocation11 + $0x108] sm:$0xf]
    %v7141 = vld [vmem:[#allocation11 + $0x10c] sm:$0xf]
    %v7142 = vld [vmem:[#allocation11 + $0x110] sm:$0xf]
    %v7143 = vld [vmem:[#allocation11 + $0x114] sm:$0xf]
    %v7144 = vld [vmem:[#allocation11 + $0x118] sm:$0xf]
    %v7145 = vld [vmem:[#allocation11 + $0x11c] sm:$0xf]
    %v7146 = vld [vmem:[#allocation11 + $0x120] sm:$0xf]
    %v7147 = vld [vmem:[#allocation11 + $0x124] sm:$0xf]
    %v7148 = vld [vmem:[#allocation11 + $0x128] sm:$0xf]
    %v7149 = vld [vmem:[#allocation11 + $0x12c] sm:$0xf]
    %v7150 = vld [vmem:[#allocation11 + $0x130] sm:$0xf]
    %v7151 = vld [vmem:[#allocation11 + $0x134] sm:$0xf]
    %v7152 = vld [vmem:[#allocation11 + $0x138] sm:$0xf]
    %v7153 = vld [vmem:[#allocation11 + $0x13c] sm:$0xf]
    %v7154 = vld [vmem:[#allocation11 + $0x140] sm:$0xf]
    %v7155 = vld [vmem:[#allocation11 + $0x144] sm:$0xf]
    %v7156 = vld [vmem:[#allocation11 + $0x148] sm:$0xf]
    %v7157 = vld [vmem:[#allocation11 + $0x14c] sm:$0xf]
    %v7158 = vld [vmem:[#allocation11 + $0x150] sm:$0xf]
    %v7159 = vld [vmem:[#allocation11 + $0x154] sm:$0xf]
    %v7160 = vld [vmem:[#allocation11 + $0x158] sm:$0xf]
    %v7161 = vld [vmem:[#allocation11 + $0x15c] sm:$0xf]
    %v7162 = vld [vmem:[#allocation11 + $0x160] sm:$0xf]
    %v7163 = vld [vmem:[#allocation11 + $0x164] sm:$0xf]
    %v7164 = vld [vmem:[#allocation11 + $0x168] sm:$0xf]
    %v7165 = vld [vmem:[#allocation11 + $0x16c] sm:$0xf]
    %v7166 = vld [vmem:[#allocation11 + $0x170] sm:$0xf]
    %v7167 = vld [vmem:[#allocation11 + $0x174] sm:$0xf]
    %v7168 = vld [vmem:[#allocation11 + $0x178] sm:$0xf]
    %v7169 = vld [vmem:[#allocation11 + $0x17c] sm:$0xf]
    %v7170 = vld [vmem:[#allocation11 + $0x180] sm:$0xf]
    %v7171 = vld [vmem:[#allocation11 + $0x184] sm:$0xf]
    %v7172 = vld [vmem:[#allocation11 + $0x188] sm:$0xf]
    %v7173 = vld [vmem:[#allocation11 + $0x18c] sm:$0xf]
    %v7174 = vld [vmem:[#allocation11 + $0x190] sm:$0xf]
    %v7175 = vld [vmem:[#allocation11 + $0x194] sm:$0xf]
    %v7176 = vld [vmem:[#allocation11 + $0x198] sm:$0xf]
    %v7177 = vld [vmem:[#allocation11 + $0x19c] sm:$0xf]
    %v7178 = vld [vmem:[#allocation11 + $0x1a0] sm:$0xf]
    %v7179 = vld [vmem:[#allocation11 + $0x1a4] sm:$0xf]
    %v7180 = vld [vmem:[#allocation11 + $0x1a8] sm:$0xf]
    %v7181 = vld [vmem:[#allocation11 + $0x1ac] sm:$0xf]
    %v7182 = vld [vmem:[#allocation11 + $0x1b0] sm:$0xf]
    %v7183 = vld [vmem:[#allocation11 + $0x1b4] sm:$0xf]
    %v7184 = vld [vmem:[#allocation11 + $0x1b8] sm:$0xf]
    %v7185 = vld [vmem:[#allocation11 + $0x1bc] sm:$0xf]
    %v7186 = vld [vmem:[#allocation11 + $0x1c0] sm:$0xf]
    %v7187 = vld [vmem:[#allocation11 + $0x1c4] sm:$0xf]
    %v7188 = vld [vmem:[#allocation11 + $0x1c8] sm:$0xf]
    %v7189 = vld [vmem:[#allocation11 + $0x1cc] sm:$0xf]
    %v7190 = vld [vmem:[#allocation11 + $0x1d0] sm:$0xf]
    %v7191 = vld [vmem:[#allocation11 + $0x1d4] sm:$0xf]
    %v7192 = vld [vmem:[#allocation11 + $0x1d8] sm:$0xf]
    %v7193 = vld [vmem:[#allocation11 + $0x1dc] sm:$0xf]
    %v7194 = vld [vmem:[#allocation11 + $0x1e0] sm:$0xf]
    %v7195 = vld [vmem:[#allocation11 + $0x1e4] sm:$0xf]
    %v7196 = vld [vmem:[#allocation11 + $0x1e8] sm:$0xf]
    %v7197 = vld [vmem:[#allocation11 + $0x1ec] sm:$0xf]
    %v7198 = vld [vmem:[#allocation11 + $0x1f0] sm:$0xf]
    %v7199 = vld [vmem:[#allocation11 + $0x1f4] sm:$0xf]
    %v7200 = vld [vmem:[#allocation11 + $0x1f8] sm:$0xf]
    %v7201 = vld [vmem:[#allocation11 + $0x1fc] sm:$0xf]
    %v7202 = vld [vmem:[#allocation13] sm:$0x1]
    %v7204 = vlaneseq
    %v7205 = vshrl.u32 %v7204, 7
    %v7206 = vsub.s32 0, %v7205
    %v7207 = vrot.slane %v7202, %v7206
    %v7337 = vunpack.c.l.b16 %v7074
    %v7338 = vunpack.c.l.b16 %v7075
    %v7339 = vunpack.c.l.b16 %v7076
    %v7340 = vunpack.c.l.b16 %v7077
    %v7341 = vunpack.c.l.b16 %v7078
    %v7342 = vunpack.c.l.b16 %v7079
    %v7343 = vunpack.c.l.b16 %v7080
    %v7344 = vunpack.c.l.b16 %v7081
    %v7345 = vunpack.c.l.b16 %v7082
    %v7346 = vunpack.c.l.b16 %v7083
    %v7347 = vunpack.c.l.b16 %v7084
    %v7348 = vunpack.c.l.b16 %v7085
    %v7349 = vunpack.c.l.b16 %v7086
    %v7350 = vunpack.c.l.b16 %v7087
    %v7351 = vunpack.c.l.b16 %v7088
    %v7352 = vunpack.c.l.b16 %v7089
    %v7353 = vunpack.c.l.b16 %v7090
    %v7354 = vunpack.c.l.b16 %v7091
    %v7355 = vunpack.c.l.b16 %v7092
    %v7356 = vunpack.c.l.b16 %v7093
    %v7357 = vunpack.c.l.b16 %v7094
    %v7358 = vunpack.c.l.b16 %v7095
    %v7359 = vunpack.c.l.b16 %v7096
    %v7360 = vunpack.c.l.b16 %v7097
    %v7361 = vunpack.c.l.b16 %v7098
    %v7362 = vunpack.c.l.b16 %v7099
    %v7363 = vunpack.c.l.b16 %v7100
    %v7364 = vunpack.c.l.b16 %v7101
    %v7365 = vunpack.c.l.b16 %v7102
    %v7366 = vunpack.c.l.b16 %v7103
    %v7367 = vunpack.c.l.b16 %v7104
    %v7368 = vunpack.c.l.b16 %v7105
    %v7369 = vunpack.c.l.b16 %v7106
    %v7370 = vunpack.c.l.b16 %v7107
    %v7371 = vunpack.c.l.b16 %v7108
    %v7372 = vunpack.c.l.b16 %v7109
    %v7373 = vunpack.c.l.b16 %v7110
    %v7374 = vunpack.c.l.b16 %v7111
    %v7375 = vunpack.c.l.b16 %v7112
    %v7376 = vunpack.c.l.b16 %v7113
    %v7377 = vunpack.c.l.b16 %v7114
    %v7378 = vunpack.c.l.b16 %v7115
    %v7379 = vunpack.c.l.b16 %v7116
    %v7380 = vunpack.c.l.b16 %v7117
    %v7381 = vunpack.c.l.b16 %v7118
    %v7382 = vunpack.c.l.b16 %v7119
    %v7383 = vunpack.c.l.b16 %v7120
    %v7384 = vunpack.c.l.b16 %v7121
    %v7385 = vunpack.c.l.b16 %v7122
    %v7386 = vunpack.c.l.b16 %v7123
    %v7387 = vunpack.c.l.b16 %v7124
    %v7388 = vunpack.c.l.b16 %v7125
    %v7389 = vunpack.c.l.b16 %v7126
    %v7390 = vunpack.c.l.b16 %v7127
    %v7391 = vunpack.c.l.b16 %v7128
    %v7392 = vunpack.c.l.b16 %v7129
    %v7393 = vunpack.c.l.b16 %v7130
    %v7394 = vunpack.c.l.b16 %v7131
    %v7395 = vunpack.c.l.b16 %v7132
    %v7396 = vunpack.c.l.b16 %v7133
    %v7397 = vunpack.c.l.b16 %v7134
    %v7398 = vunpack.c.l.b16 %v7135
    %v7399 = vunpack.c.l.b16 %v7136
    %v7400 = vunpack.c.l.b16 %v7137
    %v7401 = vunpack.c.l.b16 %v7138
    %v7402 = vunpack.c.l.b16 %v7139
    %v7403 = vunpack.c.l.b16 %v7140
    %v7404 = vunpack.c.l.b16 %v7141
    %v7405 = vunpack.c.l.b16 %v7142
    %v7406 = vunpack.c.l.b16 %v7143
    %v7407 = vunpack.c.l.b16 %v7144
    %v7408 = vunpack.c.l.b16 %v7145
    %v7409 = vunpack.c.l.b16 %v7146
    %v7410 = vunpack.c.l.b16 %v7147
    %v7411 = vunpack.c.l.b16 %v7148
    %v7412 = vunpack.c.l.b16 %v7149
    %v7413 = vunpack.c.l.b16 %v7150
    %v7414 = vunpack.c.l.b16 %v7151
    %v7415 = vunpack.c.l.b16 %v7152
    %v7416 = vunpack.c.l.b16 %v7153
    %v7417 = vunpack.c.l.b16 %v7154
    %v7418 = vunpack.c.l.b16 %v7155
    %v7419 = vunpack.c.l.b16 %v7156
    %v7420 = vunpack.c.l.b16 %v7157
    %v7421 = vunpack.c.l.b16 %v7158
    %v7422 = vunpack.c.l.b16 %v7159
    %v7423 = vunpack.c.l.b16 %v7160
    %v7424 = vunpack.c.l.b16 %v7161
    %v7425 = vunpack.c.l.b16 %v7162
    %v7426 = vunpack.c.l.b16 %v7163
    %v7427 = vunpack.c.l.b16 %v7164
    %v7428 = vunpack.c.l.b16 %v7165
    %v7429 = vunpack.c.l.b16 %v7166
    %v7430 = vunpack.c.l.b16 %v7167
    %v7431 = vunpack.c.l.b16 %v7168
    %v7432 = vunpack.c.l.b16 %v7169
    %v7433 = vunpack.c.l.b16 %v7170
    %v7434 = vunpack.c.l.b16 %v7171
    %v7435 = vunpack.c.l.b16 %v7172
    %v7436 = vunpack.c.l.b16 %v7173
    %v7437 = vunpack.c.l.b16 %v7174
    %v7438 = vunpack.c.l.b16 %v7175
    %v7439 = vunpack.c.l.b16 %v7176
    %v7440 = vunpack.c.l.b16 %v7177
    %v7441 = vunpack.c.l.b16 %v7178
    %v7442 = vunpack.c.l.b16 %v7179
    %v7443 = vunpack.c.l.b16 %v7180
    %v7444 = vunpack.c.l.b16 %v7181
    %v7445 = vunpack.c.l.b16 %v7182
    %v7446 = vunpack.c.l.b16 %v7183
    %v7447 = vunpack.c.l.b16 %v7184
    %v7448 = vunpack.c.l.b16 %v7185
    %v7449 = vunpack.c.l.b16 %v7186
    %v7450 = vunpack.c.l.b16 %v7187
    %v7451 = vunpack.c.l.b16 %v7188
    %v7452 = vunpack.c.l.b16 %v7189
    %v7453 = vunpack.c.l.b16 %v7190
    %v7454 = vunpack.c.l.b16 %v7191
    %v7455 = vunpack.c.l.b16 %v7192
    %v7456 = vunpack.c.l.b16 %v7193
    %v7457 = vunpack.c.l.b16 %v7194
    %v7458 = vunpack.c.l.b16 %v7195
    %v7459 = vunpack.c.l.b16 %v7196
    %v7460 = vunpack.c.l.b16 %v7197
    %v7461 = vunpack.c.l.b16 %v7198
    %v7462 = vunpack.c.l.b16 %v7199
    %v7463 = vunpack.c.l.b16 %v7200
    %v7464 = vunpack.c.l.b16 %v7201
    %v7465 = vpack.c.b16 %v7338, %v7337
    %v7466 = vpack.c.b16 %v7340, %v7339
    %v7467 = vpack.c.b16 %v7342, %v7341
    %v7468 = vpack.c.b16 %v7344, %v7343
    %v7469 = vpack.c.b16 %v7346, %v7345
    %v7470 = vpack.c.b16 %v7348, %v7347
    %v7471 = vpack.c.b16 %v7350, %v7349
    %v7472 = vpack.c.b16 %v7352, %v7351
    %v7473 = vpack.c.b16 %v7354, %v7353
    %v7474 = vpack.c.b16 %v7356, %v7355
    %v7475 = vpack.c.b16 %v7358, %v7357
    %v7476 = vpack.c.b16 %v7360, %v7359
    %v7477 = vpack.c.b16 %v7362, %v7361
    %v7478 = vpack.c.b16 %v7364, %v7363
    %v7479 = vpack.c.b16 %v7366, %v7365
    %v7480 = vpack.c.b16 %v7368, %v7367
    %v7481 = vpack.c.b16 %v7370, %v7369
    %v7482 = vpack.c.b16 %v7372, %v7371
    %v7483 = vpack.c.b16 %v7374, %v7373
    %v7484 = vpack.c.b16 %v7376, %v7375
    %v7485 = vpack.c.b16 %v7378, %v7377
    %v7486 = vpack.c.b16 %v7380, %v7379
    %v7487 = vpack.c.b16 %v7382, %v7381
    %v7488 = vpack.c.b16 %v7384, %v7383
    %v7489 = vpack.c.b16 %v7386, %v7385
    %v7490 = vpack.c.b16 %v7388, %v7387
    %v7491 = vpack.c.b16 %v7390, %v7389
    %v7492 = vpack.c.b16 %v7392, %v7391
    %v7493 = vpack.c.b16 %v7394, %v7393
    %v7494 = vpack.c.b16 %v7396, %v7395
    %v7495 = vpack.c.b16 %v7398, %v7397
    %v7496 = vpack.c.b16 %v7400, %v7399
    %v7497 = vpack.c.b16 %v7402, %v7401
    %v7498 = vpack.c.b16 %v7404, %v7403
    %v7499 = vpack.c.b16 %v7406, %v7405
    %v7500 = vpack.c.b16 %v7408, %v7407
    %v7501 = vpack.c.b16 %v7410, %v7409
    %v7502 = vpack.c.b16 %v7412, %v7411
    %v7503 = vpack.c.b16 %v7414, %v7413
    %v7504 = vpack.c.b16 %v7416, %v7415
    %v7505 = vpack.c.b16 %v7418, %v7417
    %v7506 = vpack.c.b16 %v7420, %v7419
    %v7507 = vpack.c.b16 %v7422, %v7421
    %v7508 = vpack.c.b16 %v7424, %v7423
    %v7509 = vpack.c.b16 %v7426, %v7425
    %v7510 = vpack.c.b16 %v7428, %v7427
    %v7511 = vpack.c.b16 %v7430, %v7429
    %v7512 = vpack.c.b16 %v7432, %v7431
    %v7513 = vpack.c.b16 %v7434, %v7433
    %v7514 = vpack.c.b16 %v7436, %v7435
    %v7515 = vpack.c.b16 %v7438, %v7437
    %v7516 = vpack.c.b16 %v7440, %v7439
    %v7517 = vpack.c.b16 %v7442, %v7441
    %v7518 = vpack.c.b16 %v7444, %v7443
    %v7519 = vpack.c.b16 %v7446, %v7445
    %v7520 = vpack.c.b16 %v7448, %v7447
    %v7521 = vpack.c.b16 %v7450, %v7449
    %v7522 = vpack.c.b16 %v7452, %v7451
    %v7523 = vpack.c.b16 %v7454, %v7453
    %v7524 = vpack.c.b16 %v7456, %v7455
    %v7525 = vpack.c.b16 %v7458, %v7457
    %v7526 = vpack.c.b16 %v7460, %v7459
    %v7527 = vpack.c.b16 %v7462, %v7461
    %v7528 = vpack.c.b16 %v7464, %v7463
    %7593 = vmatprep.subr.bf16.mxu0 0
    %7594 = vmatpush1.bf16.msra.mxu0 %v7472
    %7595 = vmatprep.subr.bf16.mxu0 0
    %7596 = vmatpush1.bf16.msra.mxu0 %v7471
    %7597 = vmatprep.subr.bf16.mxu0 0
    %7598 = vmatpush1.bf16.msra.mxu0 %v7470
    %7599 = vmatprep.subr.bf16.mxu0 0
    %7600 = vmatpush1.bf16.msra.mxu0 %v7469
    %7601 = vmatprep.subr.bf16.mxu0 0
    %7602 = vmatpush1.bf16.msra.mxu0 %v7468
    %7603 = vmatprep.subr.bf16.mxu0 0
    %7604 = vmatpush1.bf16.msra.mxu0 %v7467
    %7605 = vmatprep.subr.bf16.mxu0 0
    %7606 = vmatpush1.bf16.msra.mxu0 %v7466
    %7607 = vmatprep.subr.bf16.mxu0 0
    %7608 = vmatpush1.bf16.msra.mxu0 %v7465
    %7609 = vmatprep.subr.bf16.mxu0 0
    %7610 = vmatpush2.bf16.msra.mxu0 %v7480
    %7611 = vmatprep.subr.bf16.mxu0 0
    %7612 = vmatpush2.bf16.msra.mxu0 %v7479
    %7613 = vmatprep.subr.bf16.mxu0 0
    %7614 = vmatpush2.bf16.msra.mxu0 %v7478
    %7615 = vmatprep.subr.bf16.mxu0 0
    %7616 = vmatpush2.bf16.msra.mxu0 %v7477
    %7617 = vmatprep.subr.bf16.mxu0 0
    %7618 = vmatpush2.bf16.msra.mxu0 %v7476
    %7619 = vmatprep.subr.bf16.mxu0 0
    %7620 = vmatpush2.bf16.msra.mxu0 %v7475
    %7621 = vmatprep.subr.bf16.mxu0 0
    %7622 = vmatpush2.bf16.msra.mxu0 %v7474
    %7623 = vmatprep.subr.bf16.mxu0 0
    %7624 = vmatpush2.bf16.msra.mxu0 %v7473
    %7625 = vmatprep.mubr.bf16.mxu0 %v7067
    %7626 = vmatmul.mubr.bf16.gmra.mxu0 %v7066
    %v7627 = vpop.f32.mrf.mxu0
    %v7628 = vadd.f32 %v7207, %v7627
    %v7629 = vpop.f32.mrf.mxu0
    %v7630 = vpop.f32.mrf.mxu0
    %v7631 = vadd.f32 %v7207, %v7630
    %v7632 = vpop.f32.mrf.mxu0
    %7633 = vdwg.mxu0
    %7634 = vmatprep.subr.bf16.mxu0 0
    %7635 = vmatpush1.bf16.msra.mxu0 %v7488
    %7636 = vmatprep.subr.bf16.mxu0 0
    %7637 = vmatpush1.bf16.msra.mxu0 %v7487
    %7638 = vmatprep.subr.bf16.mxu0 0
    %7639 = vmatpush1.bf16.msra.mxu0 %v7486
    %7640 = vmatprep.subr.bf16.mxu0 0
    %7641 = vmatpush1.bf16.msra.mxu0 %v7485
    %7642 = vmatprep.subr.bf16.mxu0 0
    %7643 = vmatpush1.bf16.msra.mxu0 %v7484
    %7644 = vmatprep.subr.bf16.mxu0 0
    %7645 = vmatpush1.bf16.msra.mxu0 %v7483
    %7646 = vmatprep.subr.bf16.mxu0 0
    %7647 = vmatpush1.bf16.msra.mxu0 %v7482
    %7648 = vmatprep.subr.bf16.mxu0 0
    %7649 = vmatpush1.bf16.msra.mxu0 %v7481
    %7650 = vmatprep.subr.bf16.mxu0 0
    %7651 = vmatpush2.bf16.msra.mxu0 %v7496
    %7652 = vmatprep.subr.bf16.mxu0 0
    %7653 = vmatpush2.bf16.msra.mxu0 %v7495
    %7654 = vmatprep.subr.bf16.mxu0 0
    %7655 = vmatpush2.bf16.msra.mxu0 %v7494
    %7656 = vmatprep.subr.bf16.mxu0 0
    %7657 = vmatpush2.bf16.msra.mxu0 %v7493
    %7658 = vmatprep.subr.bf16.mxu0 0
    %7659 = vmatpush2.bf16.msra.mxu0 %v7492
    %7660 = vmatprep.subr.bf16.mxu0 0
    %7661 = vmatpush2.bf16.msra.mxu0 %v7491
    %7662 = vmatprep.subr.bf16.mxu0 0
    %7663 = vmatpush2.bf16.msra.mxu0 %v7490
    %7664 = vmatprep.subr.bf16.mxu0 0
    %7665 = vmatpush2.bf16.msra.mxu0 %v7489
    %7666 = vmatprep.mubr.bf16.mxu0 %v7069
    %7667 = vmatmul.mubr.bf16.gmra.mxu0 %v7068
    %v7668 = vpop.f32.mrf.mxu0
    %v7669 = vadd.f32 %v7628, %v7668
    %v7670 = vpop.f32.mrf.mxu0
    %v7671 = vpop.f32.mrf.mxu0
    %v7672 = vadd.f32 %v7631, %v7671
    %v7673 = vpop.f32.mrf.mxu0
    %7674 = vdwg.mxu0
    %7675 = vmatprep.subr.bf16.mxu0 0
    %7676 = vmatpush1.bf16.msra.mxu0 %v7504
    %7677 = vmatprep.subr.bf16.mxu0 0
    %7678 = vmatpush1.bf16.msra.mxu0 %v7503
    %7679 = vmatprep.subr.bf16.mxu0 0
    %7680 = vmatpush1.bf16.msra.mxu0 %v7502
    %7681 = vmatprep.subr.bf16.mxu0 0
    %7682 = vmatpush1.bf16.msra.mxu0 %v7501
    %7683 = vmatprep.subr.bf16.mxu0 0
    %7684 = vmatpush1.bf16.msra.mxu0 %v7500
    %7685 = vmatprep.subr.bf16.mxu0 0
    %7686 = vmatpush1.bf16.msra.mxu0 %v7499
    %7687 = vmatprep.subr.bf16.mxu0 0
    %7688 = vmatpush1.bf16.msra.mxu0 %v7498
    %7689 = vmatprep.subr.bf16.mxu0 0
    %7690 = vmatpush1.bf16.msra.mxu0 %v7497
    %7691 = vmatprep.subr.bf16.mxu0 0
    %7692 = vmatpush2.bf16.msra.mxu0 %v7512
    %7693 = vmatprep.subr.bf16.mxu0 0
    %7694 = vmatpush2.bf16.msra.mxu0 %v7511
    %7695 = vmatprep.subr.bf16.mxu0 0
    %7696 = vmatpush2.bf16.msra.mxu0 %v7510
    %7697 = vmatprep.subr.bf16.mxu0 0
    %7698 = vmatpush2.bf16.msra.mxu0 %v7509
    %7699 = vmatprep.subr.bf16.mxu0 0
    %7700 = vmatpush2.bf16.msra.mxu0 %v7508
    %7701 = vmatprep.subr.bf16.mxu0 0
    %7702 = vmatpush2.bf16.msra.mxu0 %v7507
    %7703 = vmatprep.subr.bf16.mxu0 0
    %7704 = vmatpush2.bf16.msra.mxu0 %v7506
    %7705 = vmatprep.subr.bf16.mxu0 0
    %7706 = vmatpush2.bf16.msra.mxu0 %v7505
    %7707 = vmatprep.mubr.bf16.mxu0 %v7071
    %7708 = vmatmul.mubr.bf16.gmra.mxu0 %v7070
    %v7709 = vpop.f32.mrf.mxu0
    %v7710 = vadd.f32 %v7669, %v7709
    %v7711 = vpop.f32.mrf.mxu0
    %v7712 = vpop.f32.mrf.mxu0
    %v7713 = vadd.f32 %v7672, %v7712
    %v7714 = vpop.f32.mrf.mxu0
    %7715 = vdwg.mxu0
    %7716 = vmatprep.subr.bf16.mxu0 0
    %7717 = vmatpush1.bf16.msra.mxu0 %v7520
    %7718 = vmatprep.subr.bf16.mxu0 0
    %7719 = vmatpush1.bf16.msra.mxu0 %v7519
    %7720 = vmatprep.subr.bf16.mxu0 0
    %7721 = vmatpush1.bf16.msra.mxu0 %v7518
    %7722 = vmatprep.subr.bf16.mxu0 0
    %7723 = vmatpush1.bf16.msra.mxu0 %v7517
    %7724 = vmatprep.subr.bf16.mxu0 0
    %7725 = vmatpush1.bf16.msra.mxu0 %v7516
    %7726 = vmatprep.subr.bf16.mxu0 0
    %7727 = vmatpush1.bf16.msra.mxu0 %v7515
    %7728 = vmatprep.subr.bf16.mxu0 0
    %7729 = vmatpush1.bf16.msra.mxu0 %v7514
    %7730 = vmatprep.subr.bf16.mxu0 0
    %7731 = vmatpush1.bf16.msra.mxu0 %v7513
    %7732 = vmatprep.subr.bf16.mxu0 0
    %7733 = vmatpush2.bf16.msra.mxu0 %v7528
    %7734 = vmatprep.subr.bf16.mxu0 0
    %7735 = vmatpush2.bf16.msra.mxu0 %v7527
    %7736 = vmatprep.subr.bf16.mxu0 0
    %7737 = vmatpush2.bf16.msra.mxu0 %v7526
    %7738 = vmatprep.subr.bf16.mxu0 0
    %7739 = vmatpush2.bf16.msra.mxu0 %v7525
    %7740 = vmatprep.subr.bf16.mxu0 0
    %7741 = vmatpush2.bf16.msra.mxu0 %v7524
    %7742 = vmatprep.subr.bf16.mxu0 0
    %7743 = vmatpush2.bf16.msra.mxu0 %v7523
    %7744 = vmatprep.subr.bf16.mxu0 0
    %7745 = vmatpush2.bf16.msra.mxu0 %v7522
    %7746 = vmatprep.subr.bf16.mxu0 0
    %7747 = vmatpush2.bf16.msra.mxu0 %v7521
    %7748 = vmatprep.mubr.bf16.mxu0 %v7073
    %7749 = vmatmul.mubr.bf16.gmra.mxu0 %v7072
    %v7750 = vpop.f32.mrf.mxu0
    %v7751 = vadd.f32 %v7710, %v7750
    %v7752 = vpop.f32.mrf.mxu0
    %v7753 = vpop.f32.mrf.mxu0
    %v7754 = vadd.f32 %v7713, %v7753
    %v7755 = vpop.f32.mrf.mxu0
    %7756 = vdwg.mxu0
    %7757 = vst [vmem:[#allocation14] sm:$0xff] %v7751
    %7758 = vst [vmem:[#allocation14 + $0x8] sm:$0xff] %v7754
    // Predicated region
    $region58: #{tpu_custom_call.1} parent=1 // pred_check
      _
    $region59: #{tpu_custom_call.1} parent=1 // pred_check_branch
      %7760 = sbr.rel (0) target = $region61
    $region60: #{tpu_custom_call.1} parent=1 // pred_region
      %s7762 = ssub.s32 256, 256
      %7763 = vsyncadd [#allocation4], %s7762
      %s7764 = sshll.u32 [#allocation14], 4
      %s7765 = int_to_ptr.vmem [resolvable:$true] %s7764
      %7770 = dma.vmem_to_hbm [thread:$0]  %s7765, 256, %s7, [#allocation4], 128, 128, 8
    $region61: #{tpu_custom_call.1} parent=1 // pred_fallthru
      _
    // Predicated region
    $region62: #{tpu_custom_call.1} parent=1 // pred_check
      _
    $region63: #{tpu_custom_call.1} parent=1 // pred_check_branch
      %7772 = sbr.rel (0) target = $region65
    $region64: #{tpu_custom_call.1} parent=1 // pred_region
      %7773 = dma.done [#allocation4], 256
    $region65: #{tpu_custom_call.1} parent=1 // pred_fallthru
      _
    %7774 = vsyncpa [#allocation3], 1
    %7775 = vsyncpa [#allocation6], 1
    %7776 = vsyncpa [#allocation9], 1
    %7777 = vsyncpa [#allocation12], 1
    %7778 = vsyncpa [#allocation4], 1

</llo_original>
